<compile_context>
chip_gen: v7x
topology: tpu7x:2x2x1
jax: 0.10.0
libtpu: 0.0.40
codegen_flags: <defaults>
</compile_context>

<pallas_src>
import jax
import jax.numpy as jnp
import numpy as np
from jax.experimental import pallas as pl
from jax.experimental.pallas import tpu as pltpu


def mgc_kernel(x0_ref,    # (tile_n, F)  f32 stream
               x1_ref,    # (tile_n, F)  f32 stream
               w0_ref,    # (F, H)       resident, mxu dtype
               b0_ref,    # (1, H)       resident, f32
               w1_ref,    # (F, H)       resident, mxu dtype
               b1_ref,    # (1, H)       resident, f32
               w2a_ref,   # (H, C)       c0 * W2, resident, mxu dtype
               w2b_ref,   # (H, C)       c1 * W2, resident, mxu dtype
               o_ref):    # (tile_n, C)  f32
    mxu_dt = w0_ref.dtype     # bf16 by default; f32 on the exact-parity path
    h0 = jnp.maximum(
        jnp.dot(x0_ref[...].astype(mxu_dt), w0_ref[...],
                preferred_element_type=jnp.float32) + b0_ref[...], 0.0)
    h1 = jnp.maximum(
        jnp.dot(x1_ref[...].astype(mxu_dt), w1_ref[...],
                preferred_element_type=jnp.float32) + b1_ref[...], 0.0)
    # coefficients already folded into w2a / w2b:
    #   out = (c0*h0 + c1*h1) @ W2 = h0 @ (c0*W2) + h1 @ (c1*W2)
    out = (jnp.dot(h0.astype(w2a_ref.dtype), w2a_ref[...],
                   preferred_element_type=jnp.float32)
           + jnp.dot(h1.astype(w2b_ref.dtype), w2b_ref[...],
                     preferred_element_type=jnp.float32))
    o_ref[...] = out.astype(o_ref.dtype)


def _num_tensorcores():
    # v7x exposes 2 TensorCores per device; v5e / v6e have 1.  Fall back to 1
    # if the runtime does not expose a core count.
    try:
        return max(1, int(getattr(jax.devices()[0], "num_cores", 1)))
    except Exception:
        return 1


def _pick_tile_n(N, F, C):
    n_cores = _num_tensorcores()
    min_steps = 2 * n_cores if n_cores > 1 else 1
    tile_n = 2048                                    # amortize ~0.35us/step
    # don't make the tile much larger than the problem (limits zero-pad waste)
    tile_n = min(tile_n, max(256, -(-N // 256) * 256))
    # multi-TC chips (v7x): keep enough steps to shard the parallel grid axis;
    # single-TC chips take the biggest tile (1 step is fine).
    while tile_n > 256 and -(-N // tile_n) < min_steps:
        tile_n //= 2
    # VMEM guard: double-buffered x0 + x1 + out f32 slabs stay well under the
    # default scoped-VMEM limit on every generation (v5e 16MiB .. v7x 32MiB).
    while tile_n > 256 and tile_n * (2 * F + C) * 4 * 2 > (8 << 20):
        tile_n //= 2
    return tile_n


def mgc_prepare(params, coffs, mxu_dtype=jnp.bfloat16):
    """One-time (hoisted) weight prep: fold mixing coefficients into the
    bias-free last weight and cast weights to the MXU operand dtype.
    params: (w0, b0, w1, b1, w2) stored [in, out]; coffs: [1, 2] f32."""
    w0, b0, w1, b1, w2 = params
    w2a = coffs[0, 0] * w2
    w2b = coffs[0, 1] * w2
    return (w0.astype(mxu_dtype), b0.astype(jnp.float32),
            w1.astype(mxu_dtype), b1.astype(jnp.float32),
            w2a.astype(mxu_dtype), w2b.astype(mxu_dtype))


def mgc_forward(xs, prepared, *, tile_n=None):
    """xs: two [N, F] f32 arrays (streamed straight from HBM, no concat/cast).
    prepared: output of mgc_prepare."""
    x0, x1 = xs
    w0, b0, w1, b1, w2a, w2b = prepared
    N, F = x0.shape
    H = w0.shape[1]
    C = w2a.shape[1]
    assert x1.shape == (N, F)

    if tile_n is None:
        tile_n = _pick_tile_n(N, F, C)

    steps = -(-N // tile_n)
    N_pad = steps * tile_n
    if N_pad != N:
        # zero-row padding; padded rows produce relu(b)@W2-flavoured garbage
        # that is sliced away below (never aliased or consumed directly).
        pad = ((0, N_pad - N), (0, 0))
        x0 = jnp.pad(x0, pad)
        x1 = jnp.pad(x1, pad)

    out = pl.pallas_call(
        mgc_kernel,
        out_shape=jax.ShapeDtypeStruct((N_pad, C), jnp.float32),
        grid_spec=pltpu.PrefetchScalarGridSpec(
            num_scalar_prefetch=0,
            grid=(steps,),
            in_specs=[
                pl.BlockSpec((tile_n, F), lambda i: (i, 0)),   # x0 (streamed)
                pl.BlockSpec((tile_n, F), lambda i: (i, 0)),   # x1 (streamed)
                pl.BlockSpec((F, H), lambda i: (0, 0)),        # W0  (resident)
                pl.BlockSpec((1, H), lambda i: (0, 0)),        # b0
                pl.BlockSpec((F, H), lambda i: (0, 0)),        # W1
                pl.BlockSpec((1, H), lambda i: (0, 0)),        # b1
                pl.BlockSpec((H, C), lambda i: (0, 0)),        # c0*W2
                pl.BlockSpec((H, C), lambda i: (0, 0)),        # c1*W2
            ],
            out_specs=pl.BlockSpec((tile_n, C), lambda i: (i, 0)),
        ),
        compiler_params=pltpu.CompilerParams(
            dimension_semantics=("parallel",)),
    )(x0, x1, w0, b0, w1, b1, w2a, w2b)

    return out[:N]


def reference_forward(xs, params, coffs):
    x0, x1 = xs
    w0, b0, w1, b1, w2 = params
    h0 = jnp.maximum(x0 @ w0 + b0, 0.0)
    h1 = jnp.maximum(x1 @ w1 + b1, 0.0)
    sumx = coffs[0, 0] * h0 + coffs[0, 1] * h1
    return sumx @ w2


def reference_forward_rounded(xs, params, coffs, mxu_dtype):
    """Simulates the kernel's MXU-operand rounding (bf16 ops, f32 accum)."""
    r = lambda a: a.astype(mxu_dtype).astype(jnp.float32)
    x0, x1 = xs
    w0, b0, w1, b1, w2 = params
    h0 = jnp.maximum(r(x0) @ r(w0) + b0, 0.0)
    h1 = jnp.maximum(r(x1) @ r(w1) + b1, 0.0)
    w2a = r(coffs[0, 0] * w2)
    w2b = r(coffs[0, 1] * w2)
    return r(h0) @ w2a + r(h1) @ w2b


if __name__ == "__main__":
    # Small shapes consistent with the module: N nodes, n_feat, n_hid,
    # n_classes.  Ragged N exercises the zero-row padding path.
    N, F, H, C = 1000, 32, 32, 8
    alpha = 0.2

    key = jax.random.PRNGKey(0)
    k_x0, k_x1, k_w0, k_b0, k_w1, k_b1, k_w2 = jax.random.split(key, 7)

    # Inputs: list of `steps`=2 feature matrices.
    x0 = jax.random.normal(k_x0, (N, F), dtype=jnp.float32)
    x1 = jax.random.normal(k_x1, (N, F), dtype=jnp.float32)

    # Deterministic synthetic parameter init (shapes from __init__), stored
    # pre-transposed as [in, out] for the kernel.
    w0 = jax.random.normal(k_w0, (F, H), dtype=jnp.float32) * (1.0 / np.sqrt(F))
    b0 = jax.random.normal(k_b0, (1, H), dtype=jnp.float32) * 0.1
    w1 = jax.random.normal(k_w1, (F, H), dtype=jnp.float32) * (1.0 / np.sqrt(F))
    b1 = jax.random.normal(k_b1, (1, H), dtype=jnp.float32) * 0.1
    # xavier_normal_ with relu gain: std = sqrt(2) * sqrt(2 / (fan_in + fan_out))
    xav_std = np.sqrt(2.0) * np.sqrt(2.0 / (H + C))
    w2 = jax.random.normal(k_w2, (H, C), dtype=jnp.float32) * xav_std

    params = (w0, b0, w1, b1, w2)
    coffs = jnp.array([[1.0 - alpha, alpha]], dtype=jnp.float32)  # frozen param

    ref = reference_forward((x0, x1), params, coffs)

    # --- f32 MXU-operand path: parity with the reference ---------------------
    prep_f32 = mgc_prepare(params, coffs, mxu_dtype=jnp.float32)
    out_f32 = jax.block_until_ready(mgc_forward((x0, x1), prep_f32))
    np.testing.assert_allclose(np.asarray(out_f32), np.asarray(ref),
                               rtol=1e-4, atol=1e-4)

    # --- default bf16 MXU-operand path (f32 streams, f32 accumulation) -------
    prep_bf16 = mgc_prepare(params, coffs)          # mxu_dtype=jnp.bfloat16
    out_bf16 = jax.block_until_ready(mgc_forward((x0, x1), prep_bf16))
    ref_bf16 = reference_forward_rounded((x0, x1), params, coffs, jnp.bfloat16)
    np.testing.assert_allclose(np.asarray(out_bf16), np.asarray(ref_bf16),
                               rtol=2e-2, atol=2e-2)

    print("KERNEL_OK")
</pallas_src>

<mosaic_0001>
module attributes {stable_mosaic.version = 11 : i64} {
  func.func @mgc_kernel(%arg0: i32, %arg1: memref<1024x32xf32, #tpu.memory_space<vmem>>, %arg2: memref<1024x32xf32, #tpu.memory_space<vmem>>, %arg3: memref<32x32xf32, #tpu.memory_space<vmem>>, %arg4: memref<1x32xf32, #tpu.memory_space<vmem>>, %arg5: memref<32x32xf32, #tpu.memory_space<vmem>>, %arg6: memref<1x32xf32, #tpu.memory_space<vmem>>, %arg7: memref<32x8xf32, #tpu.memory_space<vmem>>, %arg8: memref<32x8xf32, #tpu.memory_space<vmem>>, %arg9: memref<1024x8xf32, #tpu.memory_space<vmem>>) attributes {dimension_semantics = [#tpu.dimension_semantics<parallel>], iteration_bounds = array<i64: 1>, scalar_prefetch = 0 : i64, scratch_operands = 0 : i64, tpu.core_type = #tpu.core_type<tc>, window_params = [{transform_indices = @transform_0, window_bounds = array<i64: 1024, 32>}, {transform_indices = @transform_1, window_bounds = array<i64: 1024, 32>}, {pipeline_mode = #tpu.pipeline_mode<synchronous>, transform_indices = @transform_2, window_bounds = array<i64: 32, 32>}, {pipeline_mode = #tpu.pipeline_mode<synchronous>, transform_indices = @transform_3, window_bounds = array<i64: 1, 32>}, {pipeline_mode = #tpu.pipeline_mode<synchronous>, transform_indices = @transform_4, window_bounds = array<i64: 32, 32>}, {pipeline_mode = #tpu.pipeline_mode<synchronous>, transform_indices = @transform_5, window_bounds = array<i64: 1, 32>}, {pipeline_mode = #tpu.pipeline_mode<synchronous>, transform_indices = @transform_6, window_bounds = array<i64: 32, 8>}, {pipeline_mode = #tpu.pipeline_mode<synchronous>, transform_indices = @transform_7, window_bounds = array<i64: 32, 8>}, {transform_indices = @transform_8, window_bounds = array<i64: 1024, 8>}]} {
    %c0 = arith.constant 0 : index
    %c0_0 = arith.constant 0 : index
    %0 = vector.load %arg1[%c0, %c0_0] : memref<1024x32xf32, #tpu.memory_space<vmem>>, vector<1024x32xf32>
    %c0_1 = arith.constant 0 : index
    %c0_2 = arith.constant 0 : index
    %1 = vector.load %arg3[%c0_1, %c0_2] : memref<32x32xf32, #tpu.memory_space<vmem>>, vector<32x32xf32>
    %cst = arith.constant dense<0.000000e+00> : vector<1024x32xf32>
    %2 = tpu.matmul %0, %1, %cst {dimension_numbers = #tpu.dot_dimension_numbers<[1], [0], [0], [1], [0, 0, 1, 1], [], []>} : vector<1024x32xf32>, vector<32x32xf32>, vector<1024x32xf32> -> vector<1024x32xf32>
    %c0_3 = arith.constant 0 : index
    %c0_4 = arith.constant 0 : index
    %3 = vector.load %arg4[%c0_3, %c0_4] : memref<1x32xf32, #tpu.memory_space<vmem>>, vector<1x32xf32>
    %4 = vector.broadcast %3 : vector<1x32xf32> to vector<1024x32xf32>
    %5 = arith.addf %2, %4 : vector<1024x32xf32>
    %cst_5 = arith.constant 0.000000e+00 : f32
    %6 = vector.broadcast %cst_5 : f32 to vector<1024x32xf32>
    %7 = arith.maximumf %5, %6 : vector<1024x32xf32>
    %c0_6 = arith.constant 0 : index
    %c0_7 = arith.constant 0 : index
    %8 = vector.load %arg2[%c0_6, %c0_7] : memref<1024x32xf32, #tpu.memory_space<vmem>>, vector<1024x32xf32>
    %c0_8 = arith.constant 0 : index
    %c0_9 = arith.constant 0 : index
    %9 = vector.load %arg5[%c0_8, %c0_9] : memref<32x32xf32, #tpu.memory_space<vmem>>, vector<32x32xf32>
    %cst_10 = arith.constant dense<0.000000e+00> : vector<1024x32xf32>
    %10 = tpu.matmul %8, %9, %cst_10 {dimension_numbers = #tpu.dot_dimension_numbers<[1], [0], [0], [1], [0, 0, 1, 1], [], []>} : vector<1024x32xf32>, vector<32x32xf32>, vector<1024x32xf32> -> vector<1024x32xf32>
    %c0_11 = arith.constant 0 : index
    %c0_12 = arith.constant 0 : index
    %11 = vector.load %arg6[%c0_11, %c0_12] : memref<1x32xf32, #tpu.memory_space<vmem>>, vector<1x32xf32>
    %12 = vector.broadcast %11 : vector<1x32xf32> to vector<1024x32xf32>
    %13 = arith.addf %10, %12 : vector<1024x32xf32>
    %cst_13 = arith.constant 0.000000e+00 : f32
    %14 = vector.broadcast %cst_13 : f32 to vector<1024x32xf32>
    %15 = arith.maximumf %13, %14 : vector<1024x32xf32>
    %c0_14 = arith.constant 0 : index
    %c0_15 = arith.constant 0 : index
    %16 = vector.load %arg7[%c0_14, %c0_15] : memref<32x8xf32, #tpu.memory_space<vmem>>, vector<32x8xf32>
    %cst_16 = arith.constant dense<0.000000e+00> : vector<1024x8xf32>
    %17 = tpu.matmul %7, %16, %cst_16 {dimension_numbers = #tpu.dot_dimension_numbers<[1], [0], [0], [1], [0, 0, 1, 1], [], []>} : vector<1024x32xf32>, vector<32x8xf32>, vector<1024x8xf32> -> vector<1024x8xf32>
    %c0_17 = arith.constant 0 : index
    %c0_18 = arith.constant 0 : index
    %18 = vector.load %arg8[%c0_17, %c0_18] : memref<32x8xf32, #tpu.memory_space<vmem>>, vector<32x8xf32>
    %cst_19 = arith.constant dense<0.000000e+00> : vector<1024x8xf32>
    %19 = tpu.matmul %15, %18, %cst_19 {dimension_numbers = #tpu.dot_dimension_numbers<[1], [0], [0], [1], [0, 0, 1, 1], [], []>} : vector<1024x32xf32>, vector<32x8xf32>, vector<1024x8xf32> -> vector<1024x8xf32>
    %20 = arith.addf %17, %19 : vector<1024x8xf32>
    %c0_20 = arith.constant 0 : index
    %c0_21 = arith.constant 0 : index
    %21 = vector.load %arg9[%c0_20, %c0_21] : memref<1024x8xf32, #tpu.memory_space<vmem>>, vector<1024x8xf32>
    tpu.vector_store %arg9[%c0_20, %c0_21], %20 {strides = array<i32>} : memref<1024x8xf32, #tpu.memory_space<vmem>>, vector<1024x8xf32>,
    return
  }
  func.func @transform_0(%arg0: i32) -> (i32, i32) {
    %c0_i32 = arith.constant 0 : i32
    %c0_i32_0 = arith.constant 0 : i32
    return %arg0, %c0_i32 : i32, i32
  }
  func.func @transform_1(%arg0: i32) -> (i32, i32) {
    %c0_i32 = arith.constant 0 : i32
    %c0_i32_0 = arith.constant 0 : i32
    return %arg0, %c0_i32 : i32, i32
  }
  func.func @transform_2(%arg0: i32) -> (i32, i32) {
    %c0_i32 = arith.constant 0 : i32
    %c0_i32_0 = arith.constant 0 : i32
    %c0_i32_1 = arith.constant 0 : i32
    return %c0_i32, %c0_i32_0 : i32, i32
  }
  func.func @transform_3(%arg0: i32) -> (i32, i32) {
    %c0_i32 = arith.constant 0 : i32
    %c0_i32_0 = arith.constant 0 : i32
    %c0_i32_1 = arith.constant 0 : i32
    return %c0_i32, %c0_i32_0 : i32, i32
  }
  func.func @transform_4(%arg0: i32) -> (i32, i32) {
    %c0_i32 = arith.constant 0 : i32
    %c0_i32_0 = arith.constant 0 : i32
    %c0_i32_1 = arith.constant 0 : i32
    return %c0_i32, %c0_i32_0 : i32, i32
  }
  func.func @transform_5(%arg0: i32) -> (i32, i32) {
    %c0_i32 = arith.constant 0 : i32
    %c0_i32_0 = arith.constant 0 : i32
    %c0_i32_1 = arith.constant 0 : i32
    return %c0_i32, %c0_i32_0 : i32, i32
  }
  func.func @transform_6(%arg0: i32) -> (i32, i32) {
    %c0_i32 = arith.constant 0 : i32
    %c0_i32_0 = arith.constant 0 : i32
    %c0_i32_1 = arith.constant 0 : i32
    return %c0_i32, %c0_i32_0 : i32, i32
  }
  func.func @transform_7(%arg0: i32) -> (i32, i32) {
    %c0_i32 = arith.constant 0 : i32
    %c0_i32_0 = arith.constant 0 : i32
    %c0_i32_1 = arith.constant 0 : i32
    return %c0_i32, %c0_i32_0 : i32, i32
  }
  func.func @transform_8(%arg0: i32) -> (i32, i32) {
    %c0_i32 = arith.constant 0 : i32
    %c0_i32_0 = arith.constant 0 : i32
    return %arg0, %c0_i32 : i32, i32
  }
}

</mosaic_0001>

<llo_original>
// kernel: tpu_custom_call.1
$region0: #{tpu_custom_call.1}
  #allocation0 [shape = 'u32[]', space=smem, size = 0x4, offset = 0x4, fixed_abs, tag = 'smem constant byte address 0x4 - core index']
  #allocation1 [shape = 'u32[144,128]{1,0:T(1,128)}', space=vmem, size = 0x12000, scoped, tag = 'internal scratch']
  %s0 = inlined_call_operand.vmem [shape: f32[1024,32], index: 0, kind: input, shape index: {}]
  %s1 = inlined_call_operand.vmem [shape: f32[1024,32], index: 1, kind: input, shape index: {}]
  %s2 = inlined_call_operand.vmem [shape: f32[32,32], index: 2, kind: input, shape index: {}]
  %s3 = inlined_call_operand.vmem [shape: f32[1,32], index: 3, kind: input, shape index: {}]
  %s4 = inlined_call_operand.vmem [shape: f32[32,32], index: 4, kind: input, shape index: {}]
  %s5 = inlined_call_operand.vmem [shape: f32[1,32], index: 5, kind: input, shape index: {}]
  %s6 = inlined_call_operand.vmem [shape: f32[32,8], index: 6, kind: input, shape index: {}]
  %s7 = inlined_call_operand.vmem [shape: f32[32,8], index: 7, kind: input, shape index: {}]
  %s8 = inlined_call_operand.vmem [shape: f32[1024,8], index: 8, kind: output, shape index: {}]
  %s9 = sld [smem:[#allocation0]]
  $region42: #{tpu_custom_call.1} parent=0
    _
  %s11 = ssub.s32 1, %s9
  %s12 = scalar_select 0, %s11, %s9
  // Predicated region
  $region2: #{tpu_custom_call.1} parent=0 // pred_check
    _
  $region3: #{tpu_custom_call.1} parent=0 // pred_check_branch
    %14 = sbr.rel (0) target = $region5
  $region4: #{tpu_custom_call.1} parent=0 // pred_region
    _
  $region5: #{tpu_custom_call.1} parent=0 // pred_fallthru
    _
  // Predicated region
  $region6: #{tpu_custom_call.1} parent=0 // pred_check
    _
  $region7: #{tpu_custom_call.1} parent=0 // pred_check_branch
    %16 = sbr.rel (0) target = $region9
  $region8: #{tpu_custom_call.1} parent=0 // pred_region
    _
  $region9: #{tpu_custom_call.1} parent=0 // pred_fallthru
    _
  // Predicated region
  $region10: #{tpu_custom_call.1} parent=0 // pred_check
    _
  $region11: #{tpu_custom_call.1} parent=0 // pred_check_branch
    %18 = sbr.rel (0) target = $region13
  $region12: #{tpu_custom_call.1} parent=0 // pred_region
    _
  $region13: #{tpu_custom_call.1} parent=0 // pred_fallthru
    _
  // Predicated region
  $region14: #{tpu_custom_call.1} parent=0 // pred_check
    _
  $region15: #{tpu_custom_call.1} parent=0 // pred_check_branch
    %20 = sbr.rel (0) target = $region17
  $region16: #{tpu_custom_call.1} parent=0 // pred_region
    _
  $region17: #{tpu_custom_call.1} parent=0 // pred_fallthru
    _
  // Predicated region
  $region18: #{tpu_custom_call.1} parent=0 // pred_check
    _
  $region19: #{tpu_custom_call.1} parent=0 // pred_check_branch
    %22 = sbr.rel (0) target = $region21
  $region20: #{tpu_custom_call.1} parent=0 // pred_region
    _
  $region21: #{tpu_custom_call.1} parent=0 // pred_fallthru
    _
  // Predicated region
  $region22: #{tpu_custom_call.1} parent=0 // pred_check
    _
  $region23: #{tpu_custom_call.1} parent=0 // pred_check_branch
    %24 = sbr.rel (0) target = $region25
  $region24: #{tpu_custom_call.1} parent=0 // pred_region
    _
  $region25: #{tpu_custom_call.1} parent=0 // pred_fallthru
    _
  // Predicated region
  $region26: #{tpu_custom_call.1} parent=0 // pred_check
    _
  $region27: #{tpu_custom_call.1} parent=0 // pred_check_branch
    %26 = sbr.rel (0) target = $region29
  $region28: #{tpu_custom_call.1} parent=0 // pred_region
    _
  $region29: #{tpu_custom_call.1} parent=0 // pred_fallthru
    _
  // Predicated region
  $region30: #{tpu_custom_call.1} parent=0 // pred_check
    _
  $region31: #{tpu_custom_call.1} parent=0 // pred_check_branch
    %28 = sbr.rel (0) target = $region33
  $region32: #{tpu_custom_call.1} parent=0 // pred_region
    _
  $region33: #{tpu_custom_call.1} parent=0 // pred_fallthru
    _
  %v29 = vld [vmem:[%s0] sm:$0xff]
  %v30 = vld [vmem:[%s0 + $0x8] sm:$0xff]
  %v31 = vld [vmem:[%s0 + $0x10] sm:$0xff]
  %v32 = vld [vmem:[%s0 + $0x18] sm:$0xff]
  %v33 = vld [vmem:[%s0 + $0x20] sm:$0xff]
  %v34 = vld [vmem:[%s0 + $0x28] sm:$0xff]
  %v35 = vld [vmem:[%s0 + $0x30] sm:$0xff]
  %v36 = vld [vmem:[%s0 + $0x38] sm:$0xff]
  %v37 = vld [vmem:[%s0 + $0x40] sm:$0xff]
  %v38 = vld [vmem:[%s0 + $0x48] sm:$0xff]
  %v39 = vld [vmem:[%s0 + $0x50] sm:$0xff]
  %v40 = vld [vmem:[%s0 + $0x58] sm:$0xff]
  %v41 = vld [vmem:[%s0 + $0x60] sm:$0xff]
  %v42 = vld [vmem:[%s0 + $0x68] sm:$0xff]
  %v43 = vld [vmem:[%s0 + $0x70] sm:$0xff]
  %v44 = vld [vmem:[%s0 + $0x78] sm:$0xff]
  %v45 = vld [vmem:[%s0 + $0x80] sm:$0xff]
  %v46 = vld [vmem:[%s0 + $0x88] sm:$0xff]
  %v47 = vld [vmem:[%s0 + $0x90] sm:$0xff]
  %v48 = vld [vmem:[%s0 + $0x98] sm:$0xff]
  %v49 = vld [vmem:[%s0 + $0xa0] sm:$0xff]
  %v50 = vld [vmem:[%s0 + $0xa8] sm:$0xff]
  %v51 = vld [vmem:[%s0 + $0xb0] sm:$0xff]
  %v52 = vld [vmem:[%s0 + $0xb8] sm:$0xff]
  %v53 = vld [vmem:[%s0 + $0xc0] sm:$0xff]
  %v54 = vld [vmem:[%s0 + $0xc8] sm:$0xff]
  %v55 = vld [vmem:[%s0 + $0xd0] sm:$0xff]
  %v56 = vld [vmem:[%s0 + $0xd8] sm:$0xff]
  %v57 = vld [vmem:[%s0 + $0xe0] sm:$0xff]
  %v58 = vld [vmem:[%s0 + $0xe8] sm:$0xff]
  %v59 = vld [vmem:[%s0 + $0xf0] sm:$0xff]
  %v60 = vld [vmem:[%s0 + $0xf8] sm:$0xff]
  %v61 = vld [vmem:[%s0 + $0x100] sm:$0xff]
  %v62 = vld [vmem:[%s0 + $0x108] sm:$0xff]
  %v63 = vld [vmem:[%s0 + $0x110] sm:$0xff]
  %v64 = vld [vmem:[%s0 + $0x118] sm:$0xff]
  %v65 = vld [vmem:[%s0 + $0x120] sm:$0xff]
  %v66 = vld [vmem:[%s0 + $0x128] sm:$0xff]
  %v67 = vld [vmem:[%s0 + $0x130] sm:$0xff]
  %v68 = vld [vmem:[%s0 + $0x138] sm:$0xff]
  %v69 = vld [vmem:[%s0 + $0x140] sm:$0xff]
  %v70 = vld [vmem:[%s0 + $0x148] sm:$0xff]
  %v71 = vld [vmem:[%s0 + $0x150] sm:$0xff]
  %v72 = vld [vmem:[%s0 + $0x158] sm:$0xff]
  %v73 = vld [vmem:[%s0 + $0x160] sm:$0xff]
  %v74 = vld [vmem:[%s0 + $0x168] sm:$0xff]
  %v75 = vld [vmem:[%s0 + $0x170] sm:$0xff]
  %v76 = vld [vmem:[%s0 + $0x178] sm:$0xff]
  %v77 = vld [vmem:[%s0 + $0x180] sm:$0xff]
  %v78 = vld [vmem:[%s0 + $0x188] sm:$0xff]
  %v79 = vld [vmem:[%s0 + $0x190] sm:$0xff]
  %v80 = vld [vmem:[%s0 + $0x198] sm:$0xff]
  %v81 = vld [vmem:[%s0 + $0x1a0] sm:$0xff]
  %v82 = vld [vmem:[%s0 + $0x1a8] sm:$0xff]
  %v83 = vld [vmem:[%s0 + $0x1b0] sm:$0xff]
  %v84 = vld [vmem:[%s0 + $0x1b8] sm:$0xff]
  %v85 = vld [vmem:[%s0 + $0x1c0] sm:$0xff]
  %v86 = vld [vmem:[%s0 + $0x1c8] sm:$0xff]
  %v87 = vld [vmem:[%s0 + $0x1d0] sm:$0xff]
  %v88 = vld [vmem:[%s0 + $0x1d8] sm:$0xff]
  %v89 = vld [vmem:[%s0 + $0x1e0] sm:$0xff]
  %v90 = vld [vmem:[%s0 + $0x1e8] sm:$0xff]
  %v91 = vld [vmem:[%s0 + $0x1f0] sm:$0xff]
  %v92 = vld [vmem:[%s0 + $0x1f8] sm:$0xff]
  %v93 = vld [vmem:[%s0 + $0x200] sm:$0xff]
  %v94 = vld [vmem:[%s0 + $0x208] sm:$0xff]
  %v95 = vld [vmem:[%s0 + $0x210] sm:$0xff]
  %v96 = vld [vmem:[%s0 + $0x218] sm:$0xff]
  %v97 = vld [vmem:[%s0 + $0x220] sm:$0xff]
  %v98 = vld [vmem:[%s0 + $0x228] sm:$0xff]
  %v99 = vld [vmem:[%s0 + $0x230] sm:$0xff]
  %v100 = vld [vmem:[%s0 + $0x238] sm:$0xff]
  %v101 = vld [vmem:[%s0 + $0x240] sm:$0xff]
  %v102 = vld [vmem:[%s0 + $0x248] sm:$0xff]
  %v103 = vld [vmem:[%s0 + $0x250] sm:$0xff]
  %v104 = vld [vmem:[%s0 + $0x258] sm:$0xff]
  %v105 = vld [vmem:[%s0 + $0x260] sm:$0xff]
  %v106 = vld [vmem:[%s0 + $0x268] sm:$0xff]
  %v107 = vld [vmem:[%s0 + $0x270] sm:$0xff]
  %v108 = vld [vmem:[%s0 + $0x278] sm:$0xff]
  %v109 = vld [vmem:[%s0 + $0x280] sm:$0xff]
  %v110 = vld [vmem:[%s0 + $0x288] sm:$0xff]
  %v111 = vld [vmem:[%s0 + $0x290] sm:$0xff]
  %v112 = vld [vmem:[%s0 + $0x298] sm:$0xff]
  %v113 = vld [vmem:[%s0 + $0x2a0] sm:$0xff]
  %v114 = vld [vmem:[%s0 + $0x2a8] sm:$0xff]
  %v115 = vld [vmem:[%s0 + $0x2b0] sm:$0xff]
  %v116 = vld [vmem:[%s0 + $0x2b8] sm:$0xff]
  %v117 = vld [vmem:[%s0 + $0x2c0] sm:$0xff]
  %v118 = vld [vmem:[%s0 + $0x2c8] sm:$0xff]
  %v119 = vld [vmem:[%s0 + $0x2d0] sm:$0xff]
  %v120 = vld [vmem:[%s0 + $0x2d8] sm:$0xff]
  %v121 = vld [vmem:[%s0 + $0x2e0] sm:$0xff]
  %v122 = vld [vmem:[%s0 + $0x2e8] sm:$0xff]
  %v123 = vld [vmem:[%s0 + $0x2f0] sm:$0xff]
  %v124 = vld [vmem:[%s0 + $0x2f8] sm:$0xff]
  %v125 = vld [vmem:[%s0 + $0x300] sm:$0xff]
  %v126 = vld [vmem:[%s0 + $0x308] sm:$0xff]
  %v127 = vld [vmem:[%s0 + $0x310] sm:$0xff]
  %v128 = vld [vmem:[%s0 + $0x318] sm:$0xff]
  %v129 = vld [vmem:[%s0 + $0x320] sm:$0xff]
  %v130 = vld [vmem:[%s0 + $0x328] sm:$0xff]
  %v131 = vld [vmem:[%s0 + $0x330] sm:$0xff]
  %v132 = vld [vmem:[%s0 + $0x338] sm:$0xff]
  %v133 = vld [vmem:[%s0 + $0x340] sm:$0xff]
  %v134 = vld [vmem:[%s0 + $0x348] sm:$0xff]
  %v135 = vld [vmem:[%s0 + $0x350] sm:$0xff]
  %v136 = vld [vmem:[%s0 + $0x358] sm:$0xff]
  %v137 = vld [vmem:[%s0 + $0x360] sm:$0xff]
  %v138 = vld [vmem:[%s0 + $0x368] sm:$0xff]
  %v139 = vld [vmem:[%s0 + $0x370] sm:$0xff]
  %v140 = vld [vmem:[%s0 + $0x378] sm:$0xff]
  %v141 = vld [vmem:[%s0 + $0x380] sm:$0xff]
  %v142 = vld [vmem:[%s0 + $0x388] sm:$0xff]
  %v143 = vld [vmem:[%s0 + $0x390] sm:$0xff]
  %v144 = vld [vmem:[%s0 + $0x398] sm:$0xff]
  %v145 = vld [vmem:[%s0 + $0x3a0] sm:$0xff]
  %v146 = vld [vmem:[%s0 + $0x3a8] sm:$0xff]
  %v147 = vld [vmem:[%s0 + $0x3b0] sm:$0xff]
  %v148 = vld [vmem:[%s0 + $0x3b8] sm:$0xff]
  %v149 = vld [vmem:[%s0 + $0x3c0] sm:$0xff]
  %v150 = vld [vmem:[%s0 + $0x3c8] sm:$0xff]
  %v151 = vld [vmem:[%s0 + $0x3d0] sm:$0xff]
  %v152 = vld [vmem:[%s0 + $0x3d8] sm:$0xff]
  %v153 = vld [vmem:[%s0 + $0x3e0] sm:$0xff]
  %v154 = vld [vmem:[%s0 + $0x3e8] sm:$0xff]
  %v155 = vld [vmem:[%s0 + $0x3f0] sm:$0xff]
  %v156 = vld [vmem:[%s0 + $0x3f8] sm:$0xff]
  %v157 = vld [vmem:[%s2] sm:$0xff]
  %v158 = vld [vmem:[%s2 + $0x8] sm:$0xff]
  %v159 = vld [vmem:[%s2 + $0x10] sm:$0xff]
  %v160 = vld [vmem:[%s2 + $0x18] sm:$0xff]
  %v161 = vld [vmem:[%s3] sm:$0x1]
  %v163 = vlaneseq
  %v164 = vshrl.u32 %v163, 7
  %v165 = vsub.s32 0, %v164
  %v166 = vrot.slane %v161, %v165
  %vm168 = vcmask 261120
  %v170 = vsel %vm168, %v29, 0
  %v173 = vsel %vm168, %v30, 0
  %v176 = vsel %vm168, %v31, 0
  %v179 = vsel %vm168, %v32, 0
  %v182 = vsel %vm168, %v33, 0
  %v185 = vsel %vm168, %v34, 0
  %v188 = vsel %vm168, %v35, 0
  %v191 = vsel %vm168, %v36, 0
  %v194 = vsel %vm168, %v37, 0
  %v197 = vsel %vm168, %v38, 0
  %v200 = vsel %vm168, %v39, 0
  %v203 = vsel %vm168, %v40, 0
  %v206 = vsel %vm168, %v41, 0
  %v209 = vsel %vm168, %v42, 0
  %v212 = vsel %vm168, %v43, 0
  %v215 = vsel %vm168, %v44, 0
  %v218 = vsel %vm168, %v45, 0
  %v221 = vsel %vm168, %v46, 0
  %v224 = vsel %vm168, %v47, 0
  %v227 = vsel %vm168, %v48, 0
  %v230 = vsel %vm168, %v49, 0
  %v233 = vsel %vm168, %v50, 0
  %v236 = vsel %vm168, %v51, 0
  %v239 = vsel %vm168, %v52, 0
  %v242 = vsel %vm168, %v53, 0
  %v245 = vsel %vm168, %v54, 0
  %v248 = vsel %vm168, %v55, 0
  %v251 = vsel %vm168, %v56, 0
  %v254 = vsel %vm168, %v57, 0
  %v257 = vsel %vm168, %v58, 0
  %v260 = vsel %vm168, %v59, 0
  %v263 = vsel %vm168, %v60, 0
  %v266 = vsel %vm168, %v61, 0
  %v269 = vsel %vm168, %v62, 0
  %v272 = vsel %vm168, %v63, 0
  %v275 = vsel %vm168, %v64, 0
  %v278 = vsel %vm168, %v65, 0
  %v281 = vsel %vm168, %v66, 0
  %v284 = vsel %vm168, %v67, 0
  %v287 = vsel %vm168, %v68, 0
  %v290 = vsel %vm168, %v69, 0
  %v293 = vsel %vm168, %v70, 0
  %v296 = vsel %vm168, %v71, 0
  %v299 = vsel %vm168, %v72, 0
  %v302 = vsel %vm168, %v73, 0
  %v305 = vsel %vm168, %v74, 0
  %v308 = vsel %vm168, %v75, 0
  %v311 = vsel %vm168, %v76, 0
  %v314 = vsel %vm168, %v77, 0
  %v317 = vsel %vm168, %v78, 0
  %v320 = vsel %vm168, %v79, 0
  %v323 = vsel %vm168, %v80, 0
  %v326 = vsel %vm168, %v81, 0
  %v329 = vsel %vm168, %v82, 0
  %v332 = vsel %vm168, %v83, 0
  %v335 = vsel %vm168, %v84, 0
  %v338 = vsel %vm168, %v85, 0
  %v341 = vsel %vm168, %v86, 0
  %v344 = vsel %vm168, %v87, 0
  %v347 = vsel %vm168, %v88, 0
  %v350 = vsel %vm168, %v89, 0
  %v353 = vsel %vm168, %v90, 0
  %v356 = vsel %vm168, %v91, 0
  %v359 = vsel %vm168, %v92, 0
  %v362 = vsel %vm168, %v93, 0
  %v365 = vsel %vm168, %v94, 0
  %v368 = vsel %vm168, %v95, 0
  %v371 = vsel %vm168, %v96, 0
  %v374 = vsel %vm168, %v97, 0
  %v377 = vsel %vm168, %v98, 0
  %v380 = vsel %vm168, %v99, 0
  %v383 = vsel %vm168, %v100, 0
  %v386 = vsel %vm168, %v101, 0
  %v389 = vsel %vm168, %v102, 0
  %v392 = vsel %vm168, %v103, 0
  %v395 = vsel %vm168, %v104, 0
  %v398 = vsel %vm168, %v105, 0
  %v401 = vsel %vm168, %v106, 0
  %v404 = vsel %vm168, %v107, 0
  %v407 = vsel %vm168, %v108, 0
  %v410 = vsel %vm168, %v109, 0
  %v413 = vsel %vm168, %v110, 0
  %v416 = vsel %vm168, %v111, 0
  %v419 = vsel %vm168, %v112, 0
  %v422 = vsel %vm168, %v113, 0
  %v425 = vsel %vm168, %v114, 0
  %v428 = vsel %vm168, %v115, 0
  %v431 = vsel %vm168, %v116, 0
  %v434 = vsel %vm168, %v117, 0
  %v437 = vsel %vm168, %v118, 0
  %v440 = vsel %vm168, %v119, 0
  %v443 = vsel %vm168, %v120, 0
  %v446 = vsel %vm168, %v121, 0
  %v449 = vsel %vm168, %v122, 0
  %v452 = vsel %vm168, %v123, 0
  %v455 = vsel %vm168, %v124, 0
  %v458 = vsel %vm168, %v125, 0
  %v461 = vsel %vm168, %v126, 0
  %v464 = vsel %vm168, %v127, 0
  %v467 = vsel %vm168, %v128, 0
  %v470 = vsel %vm168, %v129, 0
  %v473 = vsel %vm168, %v130, 0
  %v476 = vsel %vm168, %v131, 0
  %v479 = vsel %vm168, %v132, 0
  %v482 = vsel %vm168, %v133, 0
  %v485 = vsel %vm168, %v134, 0
  %v488 = vsel %vm168, %v135, 0
  %v491 = vsel %vm168, %v136, 0
  %v494 = vsel %vm168, %v137, 0
  %v497 = vsel %vm168, %v138, 0
  %v500 = vsel %vm168, %v139, 0
  %v503 = vsel %vm168, %v140, 0
  %v506 = vsel %vm168, %v141, 0
  %v509 = vsel %vm168, %v142, 0
  %v512 = vsel %vm168, %v143, 0
  %v515 = vsel %vm168, %v144, 0
  %v518 = vsel %vm168, %v145, 0
  %v521 = vsel %vm168, %v146, 0
  %v524 = vsel %vm168, %v147, 0
  %v527 = vsel %vm168, %v148, 0
  %v530 = vsel %vm168, %v149, 0
  %v533 = vsel %vm168, %v150, 0
  %v536 = vsel %vm168, %v151, 0
  %v539 = vsel %vm168, %v152, 0
  %v542 = vsel %vm168, %v153, 0
  %v545 = vsel %vm168, %v154, 0
  %v548 = vsel %vm168, %v155, 0
  %v551 = vsel %vm168, %v156, 0
  %553 = vmatprep.subr.mxu0 0.0
  %554 = vmatpush1.msra.mxu0 %v157
  %555 = vmatprep.subr.mxu0 0.0
  %556 = vmatpush1.msra.mxu0 %v158
  %557 = vmatprep.subr.mxu0 0.0
  %558 = vmatpush1.msra.mxu0 %v159
  %559 = vmatprep.subr.mxu0 0.0
  %560 = vmatpush1.msra.mxu0 %v160
  %561 = vmatprep.subr.mxu0 0.0
  %562 = vmatpush1.msra.mxu0 0.0
  %563 = vmatprep.subr.mxu0 0.0
  %564 = vmatpush1.msra.mxu0 0.0
  %565 = vmatprep.subr.mxu0 0.0
  %566 = vmatpush1.msra.mxu0 0.0
  %567 = vmatprep.subr.mxu0 0.0
  %568 = vmatpush1.msra.mxu0 0.0
  %569 = vmatprep.subr.mxu0 0.0
  %570 = vmatpush1.msra.mxu0 0.0
  %571 = vmatprep.subr.mxu0 0.0
  %572 = vmatpush1.msra.mxu0 0.0
  %573 = vmatprep.subr.mxu0 0.0
  %574 = vmatpush1.msra.mxu0 0.0
  %575 = vmatprep.subr.mxu0 0.0
  %576 = vmatpush1.msra.mxu0 0.0
  %577 = vmatprep.subr.mxu0 0.0
  %578 = vmatpush1.msra.mxu0 0.0
  %579 = vmatprep.subr.mxu0 0.0
  %580 = vmatpush1.msra.mxu0 0.0
  %581 = vmatprep.subr.mxu0 0.0
  %582 = vmatpush1.msra.mxu0 0.0
  %583 = vmatprep.subr.mxu0 0.0
  %584 = vmatpush1.msra.mxu0 0.0
  %585 = vmatprep.subr.mxu0 0.0
  %586 = vmatpush1.msra.mxu0 0.0
  %587 = vmatprep.subr.mxu0 0.0
  %588 = vmatpush1.msra.mxu0 0.0
  %589 = vmatprep.subr.mxu0 0.0
  %590 = vmatpush1.msra.mxu0 0.0
  %591 = vmatprep.subr.mxu0 0.0
  %592 = vmatpush1.msra.mxu0 0.0
  %593 = vmatprep.subr.mxu0 0.0
  %594 = vmatpush1.msra.mxu0 0.0
  %595 = vmatprep.subr.mxu0 0.0
  %596 = vmatpush1.msra.mxu0 0.0
  %597 = vmatprep.subr.mxu0 0.0
  %598 = vmatpush1.msra.mxu0 0.0
  %599 = vmatprep.subr.mxu0 0.0
  %600 = vmatpush1.msra.mxu0 0.0
  %601 = vmatprep.subr.mxu0 0.0
  %602 = vmatpush1.msra.mxu0 0.0
  %603 = vmatprep.subr.mxu0 0.0
  %604 = vmatpush1.msra.mxu0 0.0
  %605 = vmatprep.subr.mxu0 0.0
  %606 = vmatpush1.msra.mxu0 0.0
  %607 = vmatprep.subr.mxu0 0.0
  %608 = vmatpush1.msra.mxu0 0.0
  %609 = vmatprep.subr.mxu0 0.0
  %610 = vmatpush1.msra.mxu0 0.0
  %611 = vmatprep.subr.mxu0 0.0
  %612 = vmatpush1.msra.mxu0 0.0
  %613 = vmatprep.subr.mxu0 0.0
  %614 = vmatpush1.msra.mxu0 0.0
  %615 = vmatprep.subr.mxu0 0.0
  %616 = vmatpush1.msra.mxu0 0.0
  %617 = vmatprep.mubr.f32.mxu0 0.0
  %618 = vmatmul.mubr.f32.gmra.mrb[0].mxu0 %v170
  %v619 = vpop.f32.mrb[0].mxu0
  %v620 = vadd.f32 %v166, %v619
  %v621 = vpop.f32.mrb[0].mxu0
  %622 = vmatprep.mubr.f32.mxu0 0.0
  %623 = vmatmul.mubr.f32.gmra.mrb[0].mxu0 %v173
  %v624 = vpop.f32.mrb[0].mxu0
  %v625 = vadd.f32 %v166, %v624
  %v626 = vpop.f32.mrb[0].mxu0
  %627 = vmatprep.mubr.f32.mxu0 0.0
  %628 = vmatmul.mubr.f32.gmra.mrb[0].mxu0 %v176
  %v629 = vpop.f32.mrb[0].mxu0
  %v630 = vadd.f32 %v166, %v629
  %v631 = vpop.f32.mrb[0].mxu0
  %632 = vmatprep.mubr.f32.mxu0 0.0
  %633 = vmatmul.mubr.f32.gmra.mrb[0].mxu0 %v179
  %v634 = vpop.f32.mrb[0].mxu0
  %v635 = vadd.f32 %v166, %v634
  %v636 = vpop.f32.mrb[0].mxu0
  %637 = vmatprep.mubr.f32.mxu0 0.0
  %638 = vmatmul.mubr.f32.gmra.mrb[0].mxu0 %v182
  %v639 = vpop.f32.mrb[0].mxu0
  %v640 = vadd.f32 %v166, %v639
  %v641 = vpop.f32.mrb[0].mxu0
  %642 = vmatprep.mubr.f32.mxu0 0.0
  %643 = vmatmul.mubr.f32.gmra.mrb[0].mxu0 %v185
  %v644 = vpop.f32.mrb[0].mxu0
  %v645 = vadd.f32 %v166, %v644
  %v646 = vpop.f32.mrb[0].mxu0
  %647 = vmatprep.mubr.f32.mxu0 0.0
  %648 = vmatmul.mubr.f32.gmra.mrb[0].mxu0 %v188
  %v649 = vpop.f32.mrb[0].mxu0
  %v650 = vadd.f32 %v166, %v649
  %v651 = vpop.f32.mrb[0].mxu0
  %652 = vmatprep.mubr.f32.mxu0 0.0
  %653 = vmatmul.mubr.f32.gmra.mrb[0].mxu0 %v191
  %v654 = vpop.f32.mrb[0].mxu0
  %v655 = vadd.f32 %v166, %v654
  %v656 = vpop.f32.mrb[0].mxu0
  %657 = vmatprep.mubr.f32.mxu0 0.0
  %658 = vmatmul.mubr.f32.gmra.mrb[0].mxu0 %v194
  %v659 = vpop.f32.mrb[0].mxu0
  %v660 = vadd.f32 %v166, %v659
  %v661 = vpop.f32.mrb[0].mxu0
  %662 = vmatprep.mubr.f32.mxu0 0.0
  %663 = vmatmul.mubr.f32.gmra.mrb[0].mxu0 %v197
  %v664 = vpop.f32.mrb[0].mxu0
  %v665 = vadd.f32 %v166, %v664
  %v666 = vpop.f32.mrb[0].mxu0
  %667 = vmatprep.mubr.f32.mxu0 0.0
  %668 = vmatmul.mubr.f32.gmra.mrb[0].mxu0 %v200
  %v669 = vpop.f32.mrb[0].mxu0
  %v670 = vadd.f32 %v166, %v669
  %v671 = vpop.f32.mrb[0].mxu0
  %672 = vmatprep.mubr.f32.mxu0 0.0
  %673 = vmatmul.mubr.f32.gmra.mrb[0].mxu0 %v203
  %v674 = vpop.f32.mrb[0].mxu0
  %v675 = vadd.f32 %v166, %v674
  %v676 = vpop.f32.mrb[0].mxu0
  %677 = vmatprep.mubr.f32.mxu0 0.0
  %678 = vmatmul.mubr.f32.gmra.mrb[0].mxu0 %v206
  %v679 = vpop.f32.mrb[0].mxu0
  %v680 = vadd.f32 %v166, %v679
  %v681 = vpop.f32.mrb[0].mxu0
  %682 = vmatprep.mubr.f32.mxu0 0.0
  %683 = vmatmul.mubr.f32.gmra.mrb[0].mxu0 %v209
  %v684 = vpop.f32.mrb[0].mxu0
  %v685 = vadd.f32 %v166, %v684
  %v686 = vpop.f32.mrb[0].mxu0
  %687 = vmatprep.mubr.f32.mxu0 0.0
  %688 = vmatmul.mubr.f32.gmra.mrb[0].mxu0 %v212
  %v689 = vpop.f32.mrb[0].mxu0
  %v690 = vadd.f32 %v166, %v689
  %v691 = vpop.f32.mrb[0].mxu0
  %692 = vmatprep.mubr.f32.mxu0 0.0
  %693 = vmatmul.mubr.f32.gmra.mrb[0].mxu0 %v215
  %v694 = vpop.f32.mrb[0].mxu0
  %v695 = vadd.f32 %v166, %v694
  %v696 = vpop.f32.mrb[0].mxu0
  %697 = vmatprep.mubr.f32.mxu0 0.0
  %698 = vmatmul.mubr.f32.gmra.mrb[0].mxu0 %v218
  %v699 = vpop.f32.mrb[0].mxu0
  %v700 = vadd.f32 %v166, %v699
  %v701 = vpop.f32.mrb[0].mxu0
  %702 = vmatprep.mubr.f32.mxu0 0.0
  %703 = vmatmul.mubr.f32.gmra.mrb[0].mxu0 %v221
  %v704 = vpop.f32.mrb[0].mxu0
  %v705 = vadd.f32 %v166, %v704
  %v706 = vpop.f32.mrb[0].mxu0
  %707 = vmatprep.mubr.f32.mxu0 0.0
  %708 = vmatmul.mubr.f32.gmra.mrb[0].mxu0 %v224
  %v709 = vpop.f32.mrb[0].mxu0
  %v710 = vadd.f32 %v166, %v709
  %v711 = vpop.f32.mrb[0].mxu0
  %712 = vmatprep.mubr.f32.mxu0 0.0
  %713 = vmatmul.mubr.f32.gmra.mrb[0].mxu0 %v227
  %v714 = vpop.f32.mrb[0].mxu0
  %v715 = vadd.f32 %v166, %v714
  %v716 = vpop.f32.mrb[0].mxu0
  %717 = vmatprep.mubr.f32.mxu0 0.0
  %718 = vmatmul.mubr.f32.gmra.mrb[0].mxu0 %v230
  %v719 = vpop.f32.mrb[0].mxu0
  %v720 = vadd.f32 %v166, %v719
  %v721 = vpop.f32.mrb[0].mxu0
  %722 = vmatprep.mubr.f32.mxu0 0.0
  %723 = vmatmul.mubr.f32.gmra.mrb[0].mxu0 %v233
  %v724 = vpop.f32.mrb[0].mxu0
  %v725 = vadd.f32 %v166, %v724
  %v726 = vpop.f32.mrb[0].mxu0
  %727 = vmatprep.mubr.f32.mxu0 0.0
  %728 = vmatmul.mubr.f32.gmra.mrb[0].mxu0 %v236
  %v729 = vpop.f32.mrb[0].mxu0
  %v730 = vadd.f32 %v166, %v729
  %v731 = vpop.f32.mrb[0].mxu0
  %732 = vmatprep.mubr.f32.mxu0 0.0
  %733 = vmatmul.mubr.f32.gmra.mrb[0].mxu0 %v239
  %v734 = vpop.f32.mrb[0].mxu0
  %v735 = vadd.f32 %v166, %v734
  %v736 = vpop.f32.mrb[0].mxu0
  %737 = vmatprep.mubr.f32.mxu0 0.0
  %738 = vmatmul.mubr.f32.gmra.mrb[0].mxu0 %v242
  %v739 = vpop.f32.mrb[0].mxu0
  %v740 = vadd.f32 %v166, %v739
  %v741 = vpop.f32.mrb[0].mxu0
  %742 = vmatprep.mubr.f32.mxu0 0.0
  %743 = vmatmul.mubr.f32.gmra.mrb[0].mxu0 %v245
  %v744 = vpop.f32.mrb[0].mxu0
  %v745 = vadd.f32 %v166, %v744
  %v746 = vpop.f32.mrb[0].mxu0
  %747 = vmatprep.mubr.f32.mxu0 0.0
  %748 = vmatmul.mubr.f32.gmra.mrb[0].mxu0 %v248
  %v749 = vpop.f32.mrb[0].mxu0
  %v750 = vadd.f32 %v166, %v749
  %v751 = vpop.f32.mrb[0].mxu0
  %752 = vmatprep.mubr.f32.mxu0 0.0
  %753 = vmatmul.mubr.f32.gmra.mrb[0].mxu0 %v251
  %v754 = vpop.f32.mrb[0].mxu0
  %v755 = vadd.f32 %v166, %v754
  %v756 = vpop.f32.mrb[0].mxu0
  %757 = vmatprep.mubr.f32.mxu0 0.0
  %758 = vmatmul.mubr.f32.gmra.mrb[0].mxu0 %v254
  %v759 = vpop.f32.mrb[0].mxu0
  %v760 = vadd.f32 %v166, %v759
  %v761 = vpop.f32.mrb[0].mxu0
  %762 = vmatprep.mubr.f32.mxu0 0.0
  %763 = vmatmul.mubr.f32.gmra.mrb[0].mxu0 %v257
  %v764 = vpop.f32.mrb[0].mxu0
  %v765 = vadd.f32 %v166, %v764
  %v766 = vpop.f32.mrb[0].mxu0
  %767 = vmatprep.mubr.f32.mxu0 0.0
  %768 = vmatmul.mubr.f32.gmra.mrb[0].mxu0 %v260
  %v769 = vpop.f32.mrb[0].mxu0
  %v770 = vadd.f32 %v166, %v769
  %v771 = vpop.f32.mrb[0].mxu0
  %772 = vmatprep.mubr.f32.mxu0 0.0
  %773 = vmatmul.mubr.f32.gmra.mrb[0].mxu0 %v263
  %v774 = vpop.f32.mrb[0].mxu0
  %v775 = vadd.f32 %v166, %v774
  %v776 = vpop.f32.mrb[0].mxu0
  %777 = vmatprep.mubr.f32.mxu0 0.0
  %778 = vmatmul.mubr.f32.gmra.mrb[0].mxu0 %v266
  %v779 = vpop.f32.mrb[0].mxu0
  %v780 = vadd.f32 %v166, %v779
  %v781 = vpop.f32.mrb[0].mxu0
  %782 = vmatprep.mubr.f32.mxu0 0.0
  %783 = vmatmul.mubr.f32.gmra.mrb[0].mxu0 %v269
  %v784 = vpop.f32.mrb[0].mxu0
  %v785 = vadd.f32 %v166, %v784
  %v786 = vpop.f32.mrb[0].mxu0
  %787 = vmatprep.mubr.f32.mxu0 0.0
  %788 = vmatmul.mubr.f32.gmra.mrb[0].mxu0 %v272
  %v789 = vpop.f32.mrb[0].mxu0
  %v790 = vadd.f32 %v166, %v789
  %v791 = vpop.f32.mrb[0].mxu0
  %792 = vmatprep.mubr.f32.mxu0 0.0
  %793 = vmatmul.mubr.f32.gmra.mrb[0].mxu0 %v275
  %v794 = vpop.f32.mrb[0].mxu0
  %v795 = vadd.f32 %v166, %v794
  %v796 = vpop.f32.mrb[0].mxu0
  %797 = vmatprep.mubr.f32.mxu0 0.0
  %798 = vmatmul.mubr.f32.gmra.mrb[0].mxu0 %v278
  %v799 = vpop.f32.mrb[0].mxu0
  %v800 = vadd.f32 %v166, %v799
  %v801 = vpop.f32.mrb[0].mxu0
  %802 = vmatprep.mubr.f32.mxu0 0.0
  %803 = vmatmul.mubr.f32.gmra.mrb[0].mxu0 %v281
  %v804 = vpop.f32.mrb[0].mxu0
  %v805 = vadd.f32 %v166, %v804
  %v806 = vpop.f32.mrb[0].mxu0
  %807 = vmatprep.mubr.f32.mxu0 0.0
  %808 = vmatmul.mubr.f32.gmra.mrb[0].mxu0 %v284
  %v809 = vpop.f32.mrb[0].mxu0
  %v810 = vadd.f32 %v166, %v809
  %v811 = vpop.f32.mrb[0].mxu0
  %812 = vmatprep.mubr.f32.mxu0 0.0
  %813 = vmatmul.mubr.f32.gmra.mrb[0].mxu0 %v287
  %v814 = vpop.f32.mrb[0].mxu0
  %v815 = vadd.f32 %v166, %v814
  %v816 = vpop.f32.mrb[0].mxu0
  %817 = vmatprep.mubr.f32.mxu0 0.0
  %818 = vmatmul.mubr.f32.gmra.mrb[0].mxu0 %v290
  %v819 = vpop.f32.mrb[0].mxu0
  %v820 = vadd.f32 %v166, %v819
  %v821 = vpop.f32.mrb[0].mxu0
  %822 = vmatprep.mubr.f32.mxu0 0.0
  %823 = vmatmul.mubr.f32.gmra.mrb[0].mxu0 %v293
  %v824 = vpop.f32.mrb[0].mxu0
  %v825 = vadd.f32 %v166, %v824
  %v826 = vpop.f32.mrb[0].mxu0
  %827 = vmatprep.mubr.f32.mxu0 0.0
  %828 = vmatmul.mubr.f32.gmra.mrb[0].mxu0 %v296
  %v829 = vpop.f32.mrb[0].mxu0
  %v830 = vadd.f32 %v166, %v829
  %v831 = vpop.f32.mrb[0].mxu0
  %832 = vmatprep.mubr.f32.mxu0 0.0
  %833 = vmatmul.mubr.f32.gmra.mrb[0].mxu0 %v299
  %v834 = vpop.f32.mrb[0].mxu0
  %v835 = vadd.f32 %v166, %v834
  %v836 = vpop.f32.mrb[0].mxu0
  %837 = vmatprep.mubr.f32.mxu0 0.0
  %838 = vmatmul.mubr.f32.gmra.mrb[0].mxu0 %v302
  %v839 = vpop.f32.mrb[0].mxu0
  %v840 = vadd.f32 %v166, %v839
  %v841 = vpop.f32.mrb[0].mxu0
  %842 = vmatprep.mubr.f32.mxu0 0.0
  %843 = vmatmul.mubr.f32.gmra.mrb[0].mxu0 %v305
  %v844 = vpop.f32.mrb[0].mxu0
  %v845 = vadd.f32 %v166, %v844
  %v846 = vpop.f32.mrb[0].mxu0
  %847 = vmatprep.mubr.f32.mxu0 0.0
  %848 = vmatmul.mubr.f32.gmra.mrb[0].mxu0 %v308
  %v849 = vpop.f32.mrb[0].mxu0
  %v850 = vadd.f32 %v166, %v849
  %v851 = vpop.f32.mrb[0].mxu0
  %852 = vmatprep.mubr.f32.mxu0 0.0
  %853 = vmatmul.mubr.f32.gmra.mrb[0].mxu0 %v311
  %v854 = vpop.f32.mrb[0].mxu0
  %v855 = vadd.f32 %v166, %v854
  %v856 = vpop.f32.mrb[0].mxu0
  %857 = vmatprep.mubr.f32.mxu0 0.0
  %858 = vmatmul.mubr.f32.gmra.mrb[0].mxu0 %v314
  %v859 = vpop.f32.mrb[0].mxu0
  %v860 = vadd.f32 %v166, %v859
  %v861 = vpop.f32.mrb[0].mxu0
  %862 = vmatprep.mubr.f32.mxu0 0.0
  %863 = vmatmul.mubr.f32.gmra.mrb[0].mxu0 %v317
  %v864 = vpop.f32.mrb[0].mxu0
  %v865 = vadd.f32 %v166, %v864
  %v866 = vpop.f32.mrb[0].mxu0
  %867 = vmatprep.mubr.f32.mxu0 0.0
  %868 = vmatmul.mubr.f32.gmra.mrb[0].mxu0 %v320
  %v869 = vpop.f32.mrb[0].mxu0
  %v870 = vadd.f32 %v166, %v869
  %v871 = vpop.f32.mrb[0].mxu0
  %872 = vmatprep.mubr.f32.mxu0 0.0
  %873 = vmatmul.mubr.f32.gmra.mrb[0].mxu0 %v323
  %v874 = vpop.f32.mrb[0].mxu0
  %v875 = vadd.f32 %v166, %v874
  %v876 = vpop.f32.mrb[0].mxu0
  %877 = vmatprep.mubr.f32.mxu0 0.0
  %878 = vmatmul.mubr.f32.gmra.mrb[0].mxu0 %v326
  %v879 = vpop.f32.mrb[0].mxu0
  %v880 = vadd.f32 %v166, %v879
  %v881 = vpop.f32.mrb[0].mxu0
  %882 = vmatprep.mubr.f32.mxu0 0.0
  %883 = vmatmul.mubr.f32.gmra.mrb[0].mxu0 %v329
  %v884 = vpop.f32.mrb[0].mxu0
  %v885 = vadd.f32 %v166, %v884
  %v886 = vpop.f32.mrb[0].mxu0
  %887 = vmatprep.mubr.f32.mxu0 0.0
  %888 = vmatmul.mubr.f32.gmra.mrb[0].mxu0 %v332
  %v889 = vpop.f32.mrb[0].mxu0
  %v890 = vadd.f32 %v166, %v889
  %v891 = vpop.f32.mrb[0].mxu0
  %892 = vmatprep.mubr.f32.mxu0 0.0
  %893 = vmatmul.mubr.f32.gmra.mrb[0].mxu0 %v335
  %v894 = vpop.f32.mrb[0].mxu0
  %v895 = vadd.f32 %v166, %v894
  %v896 = vpop.f32.mrb[0].mxu0
  %897 = vmatprep.mubr.f32.mxu0 0.0
  %898 = vmatmul.mubr.f32.gmra.mrb[0].mxu0 %v338
  %v899 = vpop.f32.mrb[0].mxu0
  %v900 = vadd.f32 %v166, %v899
  %v901 = vpop.f32.mrb[0].mxu0
  %902 = vmatprep.mubr.f32.mxu0 0.0
  %903 = vmatmul.mubr.f32.gmra.mrb[0].mxu0 %v341
  %v904 = vpop.f32.mrb[0].mxu0
  %v905 = vadd.f32 %v166, %v904
  %v906 = vpop.f32.mrb[0].mxu0
  %907 = vmatprep.mubr.f32.mxu0 0.0
  %908 = vmatmul.mubr.f32.gmra.mrb[0].mxu0 %v344
  %v909 = vpop.f32.mrb[0].mxu0
  %v910 = vadd.f32 %v166, %v909
  %v911 = vpop.f32.mrb[0].mxu0
  %912 = vmatprep.mubr.f32.mxu0 0.0
  %913 = vmatmul.mubr.f32.gmra.mrb[0].mxu0 %v347
  %v914 = vpop.f32.mrb[0].mxu0
  %v915 = vadd.f32 %v166, %v914
  %v916 = vpop.f32.mrb[0].mxu0
  %917 = vmatprep.mubr.f32.mxu0 0.0
  %918 = vmatmul.mubr.f32.gmra.mrb[0].mxu0 %v350
  %v919 = vpop.f32.mrb[0].mxu0
  %v920 = vadd.f32 %v166, %v919
  %v921 = vpop.f32.mrb[0].mxu0
  %922 = vmatprep.mubr.f32.mxu0 0.0
  %923 = vmatmul.mubr.f32.gmra.mrb[0].mxu0 %v353
  %v924 = vpop.f32.mrb[0].mxu0
  %v925 = vadd.f32 %v166, %v924
  %v926 = vpop.f32.mrb[0].mxu0
  %927 = vmatprep.mubr.f32.mxu0 0.0
  %928 = vmatmul.mubr.f32.gmra.mrb[0].mxu0 %v356
  %v929 = vpop.f32.mrb[0].mxu0
  %v930 = vadd.f32 %v166, %v929
  %v931 = vpop.f32.mrb[0].mxu0
  %932 = vmatprep.mubr.f32.mxu0 0.0
  %933 = vmatmul.mubr.f32.gmra.mrb[0].mxu0 %v359
  %v934 = vpop.f32.mrb[0].mxu0
  %v935 = vadd.f32 %v166, %v934
  %v936 = vpop.f32.mrb[0].mxu0
  %937 = vmatprep.mubr.f32.mxu0 0.0
  %938 = vmatmul.mubr.f32.gmra.mrb[0].mxu0 %v362
  %v939 = vpop.f32.mrb[0].mxu0
  %v940 = vadd.f32 %v166, %v939
  %v941 = vpop.f32.mrb[0].mxu0
  %942 = vmatprep.mubr.f32.mxu0 0.0
  %943 = vmatmul.mubr.f32.gmra.mrb[0].mxu0 %v365
  %v944 = vpop.f32.mrb[0].mxu0
  %v945 = vadd.f32 %v166, %v944
  %v946 = vpop.f32.mrb[0].mxu0
  %947 = vmatprep.mubr.f32.mxu0 0.0
  %948 = vmatmul.mubr.f32.gmra.mrb[0].mxu0 %v368
  %v949 = vpop.f32.mrb[0].mxu0
  %v950 = vadd.f32 %v166, %v949
  %v951 = vpop.f32.mrb[0].mxu0
  %952 = vmatprep.mubr.f32.mxu0 0.0
  %953 = vmatmul.mubr.f32.gmra.mrb[0].mxu0 %v371
  %v954 = vpop.f32.mrb[0].mxu0
  %v955 = vadd.f32 %v166, %v954
  %v956 = vpop.f32.mrb[0].mxu0
  %957 = vmatprep.mubr.f32.mxu0 0.0
  %958 = vmatmul.mubr.f32.gmra.mrb[0].mxu0 %v374
  %v959 = vpop.f32.mrb[0].mxu0
  %v960 = vadd.f32 %v166, %v959
  %v961 = vpop.f32.mrb[0].mxu0
  %962 = vmatprep.mubr.f32.mxu0 0.0
  %963 = vmatmul.mubr.f32.gmra.mrb[0].mxu0 %v377
  %v964 = vpop.f32.mrb[0].mxu0
  %v965 = vadd.f32 %v166, %v964
  %v966 = vpop.f32.mrb[0].mxu0
  %967 = vmatprep.mubr.f32.mxu0 0.0
  %968 = vmatmul.mubr.f32.gmra.mrb[0].mxu0 %v380
  %v969 = vpop.f32.mrb[0].mxu0
  %v970 = vadd.f32 %v166, %v969
  %v971 = vpop.f32.mrb[0].mxu0
  %972 = vmatprep.mubr.f32.mxu0 0.0
  %973 = vmatmul.mubr.f32.gmra.mrb[0].mxu0 %v383
  %v974 = vpop.f32.mrb[0].mxu0
  %v975 = vadd.f32 %v166, %v974
  %v976 = vpop.f32.mrb[0].mxu0
  %977 = vmatprep.mubr.f32.mxu0 0.0
  %978 = vmatmul.mubr.f32.gmra.mrb[0].mxu0 %v386
  %v979 = vpop.f32.mrb[0].mxu0
  %v980 = vadd.f32 %v166, %v979
  %v981 = vpop.f32.mrb[0].mxu0
  %982 = vmatprep.mubr.f32.mxu0 0.0
  %983 = vmatmul.mubr.f32.gmra.mrb[0].mxu0 %v389
  %v984 = vpop.f32.mrb[0].mxu0
  %v985 = vadd.f32 %v166, %v984
  %v986 = vpop.f32.mrb[0].mxu0
  %987 = vmatprep.mubr.f32.mxu0 0.0
  %988 = vmatmul.mubr.f32.gmra.mrb[0].mxu0 %v392
  %v989 = vpop.f32.mrb[0].mxu0
  %v990 = vadd.f32 %v166, %v989
  %v991 = vpop.f32.mrb[0].mxu0
  %992 = vmatprep.mubr.f32.mxu0 0.0
  %993 = vmatmul.mubr.f32.gmra.mrb[0].mxu0 %v395
  %v994 = vpop.f32.mrb[0].mxu0
  %v995 = vadd.f32 %v166, %v994
  %v996 = vpop.f32.mrb[0].mxu0
  %997 = vmatprep.mubr.f32.mxu0 0.0
  %998 = vmatmul.mubr.f32.gmra.mrb[0].mxu0 %v398
  %v999 = vpop.f32.mrb[0].mxu0
  %v1000 = vadd.f32 %v166, %v999
  %v1001 = vpop.f32.mrb[0].mxu0
  %1002 = vmatprep.mubr.f32.mxu0 0.0
  %1003 = vmatmul.mubr.f32.gmra.mrb[0].mxu0 %v401
  %v1004 = vpop.f32.mrb[0].mxu0
  %v1005 = vadd.f32 %v166, %v1004
  %v1006 = vpop.f32.mrb[0].mxu0
  %1007 = vmatprep.mubr.f32.mxu0 0.0
  %1008 = vmatmul.mubr.f32.gmra.mrb[0].mxu0 %v404
  %v1009 = vpop.f32.mrb[0].mxu0
  %v1010 = vadd.f32 %v166, %v1009
  %v1011 = vpop.f32.mrb[0].mxu0
  %1012 = vmatprep.mubr.f32.mxu0 0.0
  %1013 = vmatmul.mubr.f32.gmra.mrb[0].mxu0 %v407
  %v1014 = vpop.f32.mrb[0].mxu0
  %v1015 = vadd.f32 %v166, %v1014
  %v1016 = vpop.f32.mrb[0].mxu0
  %1017 = vmatprep.mubr.f32.mxu0 0.0
  %1018 = vmatmul.mubr.f32.gmra.mrb[0].mxu0 %v410
  %v1019 = vpop.f32.mrb[0].mxu0
  %v1020 = vadd.f32 %v166, %v1019
  %v1021 = vpop.f32.mrb[0].mxu0
  %1022 = vmatprep.mubr.f32.mxu0 0.0
  %1023 = vmatmul.mubr.f32.gmra.mrb[0].mxu0 %v413
  %v1024 = vpop.f32.mrb[0].mxu0
  %v1025 = vadd.f32 %v166, %v1024
  %v1026 = vpop.f32.mrb[0].mxu0
  %1027 = vmatprep.mubr.f32.mxu0 0.0
  %1028 = vmatmul.mubr.f32.gmra.mrb[0].mxu0 %v416
  %v1029 = vpop.f32.mrb[0].mxu0
  %v1030 = vadd.f32 %v166, %v1029
  %v1031 = vpop.f32.mrb[0].mxu0
  %1032 = vmatprep.mubr.f32.mxu0 0.0
  %1033 = vmatmul.mubr.f32.gmra.mrb[0].mxu0 %v419
  %v1034 = vpop.f32.mrb[0].mxu0
  %v1035 = vadd.f32 %v166, %v1034
  %v1036 = vpop.f32.mrb[0].mxu0
  %1037 = vmatprep.mubr.f32.mxu0 0.0
  %1038 = vmatmul.mubr.f32.gmra.mrb[0].mxu0 %v422
  %v1039 = vpop.f32.mrb[0].mxu0
  %v1040 = vadd.f32 %v166, %v1039
  %v1041 = vpop.f32.mrb[0].mxu0
  %1042 = vmatprep.mubr.f32.mxu0 0.0
  %1043 = vmatmul.mubr.f32.gmra.mrb[0].mxu0 %v425
  %v1044 = vpop.f32.mrb[0].mxu0
  %v1045 = vadd.f32 %v166, %v1044
  %v1046 = vpop.f32.mrb[0].mxu0
  %1047 = vmatprep.mubr.f32.mxu0 0.0
  %1048 = vmatmul.mubr.f32.gmra.mrb[0].mxu0 %v428
  %v1049 = vpop.f32.mrb[0].mxu0
  %v1050 = vadd.f32 %v166, %v1049
  %v1051 = vpop.f32.mrb[0].mxu0
  %1052 = vmatprep.mubr.f32.mxu0 0.0
  %1053 = vmatmul.mubr.f32.gmra.mrb[0].mxu0 %v431
  %v1054 = vpop.f32.mrb[0].mxu0
  %v1055 = vadd.f32 %v166, %v1054
  %v1056 = vpop.f32.mrb[0].mxu0
  %1057 = vmatprep.mubr.f32.mxu0 0.0
  %1058 = vmatmul.mubr.f32.gmra.mrb[0].mxu0 %v434
  %v1059 = vpop.f32.mrb[0].mxu0
  %v1060 = vadd.f32 %v166, %v1059
  %v1061 = vpop.f32.mrb[0].mxu0
  %1062 = vmatprep.mubr.f32.mxu0 0.0
  %1063 = vmatmul.mubr.f32.gmra.mrb[0].mxu0 %v437
  %v1064 = vpop.f32.mrb[0].mxu0
  %v1065 = vadd.f32 %v166, %v1064
  %v1066 = vpop.f32.mrb[0].mxu0
  %1067 = vmatprep.mubr.f32.mxu0 0.0
  %1068 = vmatmul.mubr.f32.gmra.mrb[0].mxu0 %v440
  %v1069 = vpop.f32.mrb[0].mxu0
  %v1070 = vadd.f32 %v166, %v1069
  %v1071 = vpop.f32.mrb[0].mxu0
  %1072 = vmatprep.mubr.f32.mxu0 0.0
  %1073 = vmatmul.mubr.f32.gmra.mrb[0].mxu0 %v443
  %v1074 = vpop.f32.mrb[0].mxu0
  %v1075 = vadd.f32 %v166, %v1074
  %v1076 = vpop.f32.mrb[0].mxu0
  %1077 = vmatprep.mubr.f32.mxu0 0.0
  %1078 = vmatmul.mubr.f32.gmra.mrb[0].mxu0 %v446
  %v1079 = vpop.f32.mrb[0].mxu0
  %v1080 = vadd.f32 %v166, %v1079
  %v1081 = vpop.f32.mrb[0].mxu0
  %1082 = vmatprep.mubr.f32.mxu0 0.0
  %1083 = vmatmul.mubr.f32.gmra.mrb[0].mxu0 %v449
  %v1084 = vpop.f32.mrb[0].mxu0
  %v1085 = vadd.f32 %v166, %v1084
  %v1086 = vpop.f32.mrb[0].mxu0
  %1087 = vmatprep.mubr.f32.mxu0 0.0
  %1088 = vmatmul.mubr.f32.gmra.mrb[0].mxu0 %v452
  %v1089 = vpop.f32.mrb[0].mxu0
  %v1090 = vadd.f32 %v166, %v1089
  %v1091 = vpop.f32.mrb[0].mxu0
  %1092 = vmatprep.mubr.f32.mxu0 0.0
  %1093 = vmatmul.mubr.f32.gmra.mrb[0].mxu0 %v455
  %v1094 = vpop.f32.mrb[0].mxu0
  %v1095 = vadd.f32 %v166, %v1094
  %v1096 = vpop.f32.mrb[0].mxu0
  %1097 = vmatprep.mubr.f32.mxu0 0.0
  %1098 = vmatmul.mubr.f32.gmra.mrb[0].mxu0 %v458
  %v1099 = vpop.f32.mrb[0].mxu0
  %v1100 = vadd.f32 %v166, %v1099
  %v1101 = vpop.f32.mrb[0].mxu0
  %1102 = vmatprep.mubr.f32.mxu0 0.0
  %1103 = vmatmul.mubr.f32.gmra.mrb[0].mxu0 %v461
  %v1104 = vpop.f32.mrb[0].mxu0
  %v1105 = vadd.f32 %v166, %v1104
  %v1106 = vpop.f32.mrb[0].mxu0
  %1107 = vmatprep.mubr.f32.mxu0 0.0
  %1108 = vmatmul.mubr.f32.gmra.mrb[0].mxu0 %v464
  %v1109 = vpop.f32.mrb[0].mxu0
  %v1110 = vadd.f32 %v166, %v1109
  %v1111 = vpop.f32.mrb[0].mxu0
  %1112 = vmatprep.mubr.f32.mxu0 0.0
  %1113 = vmatmul.mubr.f32.gmra.mrb[0].mxu0 %v467
  %v1114 = vpop.f32.mrb[0].mxu0
  %v1115 = vadd.f32 %v166, %v1114
  %v1116 = vpop.f32.mrb[0].mxu0
  %1117 = vmatprep.mubr.f32.mxu0 0.0
  %1118 = vmatmul.mubr.f32.gmra.mrb[0].mxu0 %v470
  %v1119 = vpop.f32.mrb[0].mxu0
  %v1120 = vadd.f32 %v166, %v1119
  %v1121 = vpop.f32.mrb[0].mxu0
  %1122 = vmatprep.mubr.f32.mxu0 0.0
  %1123 = vmatmul.mubr.f32.gmra.mrb[0].mxu0 %v473
  %v1124 = vpop.f32.mrb[0].mxu0
  %v1125 = vadd.f32 %v166, %v1124
  %v1126 = vpop.f32.mrb[0].mxu0
  %1127 = vmatprep.mubr.f32.mxu0 0.0
  %1128 = vmatmul.mubr.f32.gmra.mrb[0].mxu0 %v476
  %v1129 = vpop.f32.mrb[0].mxu0
  %v1130 = vadd.f32 %v166, %v1129
  %v1131 = vpop.f32.mrb[0].mxu0
  %1132 = vmatprep.mubr.f32.mxu0 0.0
  %1133 = vmatmul.mubr.f32.gmra.mrb[0].mxu0 %v479
  %v1134 = vpop.f32.mrb[0].mxu0
  %v1135 = vadd.f32 %v166, %v1134
  %v1136 = vpop.f32.mrb[0].mxu0
  %1137 = vmatprep.mubr.f32.mxu0 0.0
  %1138 = vmatmul.mubr.f32.gmra.mrb[0].mxu0 %v482
  %v1139 = vpop.f32.mrb[0].mxu0
  %v1140 = vadd.f32 %v166, %v1139
  %v1141 = vpop.f32.mrb[0].mxu0
  %1142 = vmatprep.mubr.f32.mxu0 0.0
  %1143 = vmatmul.mubr.f32.gmra.mrb[0].mxu0 %v485
  %v1144 = vpop.f32.mrb[0].mxu0
  %v1145 = vadd.f32 %v166, %v1144
  %v1146 = vpop.f32.mrb[0].mxu0
  %1147 = vmatprep.mubr.f32.mxu0 0.0
  %1148 = vmatmul.mubr.f32.gmra.mrb[0].mxu0 %v488
  %v1149 = vpop.f32.mrb[0].mxu0
  %v1150 = vadd.f32 %v166, %v1149
  %v1151 = vpop.f32.mrb[0].mxu0
  %1152 = vmatprep.mubr.f32.mxu0 0.0
  %1153 = vmatmul.mubr.f32.gmra.mrb[0].mxu0 %v491
  %v1154 = vpop.f32.mrb[0].mxu0
  %v1155 = vadd.f32 %v166, %v1154
  %v1156 = vpop.f32.mrb[0].mxu0
  %1157 = vmatprep.mubr.f32.mxu0 0.0
  %1158 = vmatmul.mubr.f32.gmra.mrb[0].mxu0 %v494
  %v1159 = vpop.f32.mrb[0].mxu0
  %v1160 = vadd.f32 %v166, %v1159
  %v1161 = vpop.f32.mrb[0].mxu0
  %1162 = vmatprep.mubr.f32.mxu0 0.0
  %1163 = vmatmul.mubr.f32.gmra.mrb[0].mxu0 %v497
  %v1164 = vpop.f32.mrb[0].mxu0
  %v1165 = vadd.f32 %v166, %v1164
  %v1166 = vpop.f32.mrb[0].mxu0
  %1167 = vmatprep.mubr.f32.mxu0 0.0
  %1168 = vmatmul.mubr.f32.gmra.mrb[0].mxu0 %v500
  %v1169 = vpop.f32.mrb[0].mxu0
  %v1170 = vadd.f32 %v166, %v1169
  %v1171 = vpop.f32.mrb[0].mxu0
  %1172 = vmatprep.mubr.f32.mxu0 0.0
  %1173 = vmatmul.mubr.f32.gmra.mrb[0].mxu0 %v503
  %v1174 = vpop.f32.mrb[0].mxu0
  %v1175 = vadd.f32 %v166, %v1174
  %v1176 = vpop.f32.mrb[0].mxu0
  %1177 = vmatprep.mubr.f32.mxu0 0.0
  %1178 = vmatmul.mubr.f32.gmra.mrb[0].mxu0 %v506
  %v1179 = vpop.f32.mrb[0].mxu0
  %v1180 = vadd.f32 %v166, %v1179
  %v1181 = vpop.f32.mrb[0].mxu0
  %1182 = vmatprep.mubr.f32.mxu0 0.0
  %1183 = vmatmul.mubr.f32.gmra.mrb[0].mxu0 %v509
  %v1184 = vpop.f32.mrb[0].mxu0
  %v1185 = vadd.f32 %v166, %v1184
  %v1186 = vpop.f32.mrb[0].mxu0
  %1187 = vmatprep.mubr.f32.mxu0 0.0
  %1188 = vmatmul.mubr.f32.gmra.mrb[0].mxu0 %v512
  %v1189 = vpop.f32.mrb[0].mxu0
  %v1190 = vadd.f32 %v166, %v1189
  %v1191 = vpop.f32.mrb[0].mxu0
  %1192 = vmatprep.mubr.f32.mxu0 0.0
  %1193 = vmatmul.mubr.f32.gmra.mrb[0].mxu0 %v515
  %v1194 = vpop.f32.mrb[0].mxu0
  %v1195 = vadd.f32 %v166, %v1194
  %v1196 = vpop.f32.mrb[0].mxu0
  %1197 = vmatprep.mubr.f32.mxu0 0.0
  %1198 = vmatmul.mubr.f32.gmra.mrb[0].mxu0 %v518
  %v1199 = vpop.f32.mrb[0].mxu0
  %v1200 = vadd.f32 %v166, %v1199
  %v1201 = vpop.f32.mrb[0].mxu0
  %1202 = vmatprep.mubr.f32.mxu0 0.0
  %1203 = vmatmul.mubr.f32.gmra.mrb[0].mxu0 %v521
  %v1204 = vpop.f32.mrb[0].mxu0
  %v1205 = vadd.f32 %v166, %v1204
  %v1206 = vpop.f32.mrb[0].mxu0
  %1207 = vmatprep.mubr.f32.mxu0 0.0
  %1208 = vmatmul.mubr.f32.gmra.mrb[0].mxu0 %v524
  %v1209 = vpop.f32.mrb[0].mxu0
  %v1210 = vadd.f32 %v166, %v1209
  %v1211 = vpop.f32.mrb[0].mxu0
  %1212 = vmatprep.mubr.f32.mxu0 0.0
  %1213 = vmatmul.mubr.f32.gmra.mrb[0].mxu0 %v527
  %v1214 = vpop.f32.mrb[0].mxu0
  %v1215 = vadd.f32 %v166, %v1214
  %v1216 = vpop.f32.mrb[0].mxu0
  %1217 = vmatprep.mubr.f32.mxu0 0.0
  %1218 = vmatmul.mubr.f32.gmra.mrb[0].mxu0 %v530
  %v1219 = vpop.f32.mrb[0].mxu0
  %v1220 = vadd.f32 %v166, %v1219
  %v1221 = vpop.f32.mrb[0].mxu0
  %1222 = vmatprep.mubr.f32.mxu0 0.0
  %1223 = vmatmul.mubr.f32.gmra.mrb[0].mxu0 %v533
  %v1224 = vpop.f32.mrb[0].mxu0
  %v1225 = vadd.f32 %v166, %v1224
  %v1226 = vpop.f32.mrb[0].mxu0
  %1227 = vmatprep.mubr.f32.mxu0 0.0
  %1228 = vmatmul.mubr.f32.gmra.mrb[0].mxu0 %v536
  %v1229 = vpop.f32.mrb[0].mxu0
  %v1230 = vadd.f32 %v166, %v1229
  %v1231 = vpop.f32.mrb[0].mxu0
  %1232 = vmatprep.mubr.f32.mxu0 0.0
  %1233 = vmatmul.mubr.f32.gmra.mrb[0].mxu0 %v539
  %v1234 = vpop.f32.mrb[0].mxu0
  %v1235 = vadd.f32 %v166, %v1234
  %v1236 = vpop.f32.mrb[0].mxu0
  %1237 = vmatprep.mubr.f32.mxu0 0.0
  %1238 = vmatmul.mubr.f32.gmra.mrb[0].mxu0 %v542
  %v1239 = vpop.f32.mrb[0].mxu0
  %v1240 = vadd.f32 %v166, %v1239
  %v1241 = vpop.f32.mrb[0].mxu0
  %1242 = vmatprep.mubr.f32.mxu0 0.0
  %1243 = vmatmul.mubr.f32.gmra.mrb[0].mxu0 %v545
  %v1244 = vpop.f32.mrb[0].mxu0
  %v1245 = vadd.f32 %v166, %v1244
  %v1246 = vpop.f32.mrb[0].mxu0
  %1247 = vmatprep.mubr.f32.mxu0 0.0
  %1248 = vmatmul.mubr.f32.gmra.mrb[0].mxu0 %v548
  %v1249 = vpop.f32.mrb[0].mxu0
  %v1250 = vadd.f32 %v166, %v1249
  %v1251 = vpop.f32.mrb[0].mxu0
  %1252 = vmatprep.mubr.f32.mxu0 0.0
  %1253 = vmatmul.mubr.f32.gmra.mrb[0].mxu0 %v551
  %v1254 = vpop.f32.mrb[0].mxu0
  %v1255 = vadd.f32 %v166, %v1254
  %v1256 = vpop.f32.mrb[0].mxu0
  %1257 = vdwg.mxu0
  %v1258 = vmax.f32 %v620, 0.0
  %v1259 = vmax.f32 %v625, 0.0
  %v1260 = vmax.f32 %v630, 0.0
  %v1261 = vmax.f32 %v635, 0.0
  %v1262 = vmax.f32 %v640, 0.0
  %v1263 = vmax.f32 %v645, 0.0
  %v1264 = vmax.f32 %v650, 0.0
  %v1265 = vmax.f32 %v655, 0.0
  %v1266 = vmax.f32 %v660, 0.0
  %v1267 = vmax.f32 %v665, 0.0
  %v1268 = vmax.f32 %v670, 0.0
  %v1269 = vmax.f32 %v675, 0.0
  %v1270 = vmax.f32 %v680, 0.0
  %v1271 = vmax.f32 %v685, 0.0
  %v1272 = vmax.f32 %v690, 0.0
  %v1273 = vmax.f32 %v695, 0.0
  %v1274 = vmax.f32 %v700, 0.0
  %v1275 = vmax.f32 %v705, 0.0
  %v1276 = vmax.f32 %v710, 0.0
  %v1277 = vmax.f32 %v715, 0.0
  %v1278 = vmax.f32 %v720, 0.0
  %v1279 = vmax.f32 %v725, 0.0
  %v1280 = vmax.f32 %v730, 0.0
  %v1281 = vmax.f32 %v735, 0.0
  %v1282 = vmax.f32 %v740, 0.0
  %v1283 = vmax.f32 %v745, 0.0
  %v1284 = vmax.f32 %v750, 0.0
  %v1285 = vmax.f32 %v755, 0.0
  %v1286 = vmax.f32 %v760, 0.0
  %v1287 = vmax.f32 %v765, 0.0
  %v1288 = vmax.f32 %v770, 0.0
  %v1289 = vmax.f32 %v775, 0.0
  %v1290 = vmax.f32 %v780, 0.0
  %v1291 = vmax.f32 %v785, 0.0
  %v1292 = vmax.f32 %v790, 0.0
  %v1293 = vmax.f32 %v795, 0.0
  %v1294 = vmax.f32 %v800, 0.0
  %v1295 = vmax.f32 %v805, 0.0
  %v1296 = vmax.f32 %v810, 0.0
  %v1297 = vmax.f32 %v815, 0.0
  %v1298 = vmax.f32 %v820, 0.0
  %v1299 = vmax.f32 %v825, 0.0
  %v1300 = vmax.f32 %v830, 0.0
  %v1301 = vmax.f32 %v835, 0.0
  %v1302 = vmax.f32 %v840, 0.0
  %v1303 = vmax.f32 %v845, 0.0
  %v1304 = vmax.f32 %v850, 0.0
  %v1305 = vmax.f32 %v855, 0.0
  %v1306 = vmax.f32 %v860, 0.0
  %v1307 = vmax.f32 %v865, 0.0
  %v1308 = vmax.f32 %v870, 0.0
  %v1309 = vmax.f32 %v875, 0.0
  %v1310 = vmax.f32 %v880, 0.0
  %v1311 = vmax.f32 %v885, 0.0
  %v1312 = vmax.f32 %v890, 0.0
  %v1313 = vmax.f32 %v895, 0.0
  %v1314 = vmax.f32 %v900, 0.0
  %v1315 = vmax.f32 %v905, 0.0
  %v1316 = vmax.f32 %v910, 0.0
  %v1317 = vmax.f32 %v915, 0.0
  %v1318 = vmax.f32 %v920, 0.0
  %v1319 = vmax.f32 %v925, 0.0
  %v1320 = vmax.f32 %v930, 0.0
  %v1321 = vmax.f32 %v935, 0.0
  %v1322 = vmax.f32 %v940, 0.0
  %v1323 = vmax.f32 %v945, 0.0
  %v1324 = vmax.f32 %v950, 0.0
  %v1325 = vmax.f32 %v955, 0.0
  %v1326 = vmax.f32 %v960, 0.0
  %v1327 = vmax.f32 %v965, 0.0
  %v1328 = vmax.f32 %v970, 0.0
  %v1329 = vmax.f32 %v975, 0.0
  %v1330 = vmax.f32 %v980, 0.0
  %v1331 = vmax.f32 %v985, 0.0
  %v1332 = vmax.f32 %v990, 0.0
  %v1333 = vmax.f32 %v995, 0.0
  %v1334 = vmax.f32 %v1000, 0.0
  %v1335 = vmax.f32 %v1005, 0.0
  %v1336 = vmax.f32 %v1010, 0.0
  %v1337 = vmax.f32 %v1015, 0.0
  %v1338 = vmax.f32 %v1020, 0.0
  %v1339 = vmax.f32 %v1025, 0.0
  %v1340 = vmax.f32 %v1030, 0.0
  %v1341 = vmax.f32 %v1035, 0.0
  %v1342 = vmax.f32 %v1040, 0.0
  %v1343 = vmax.f32 %v1045, 0.0
  %v1344 = vmax.f32 %v1050, 0.0
  %v1345 = vmax.f32 %v1055, 0.0
  %v1346 = vmax.f32 %v1060, 0.0
  %v1347 = vmax.f32 %v1065, 0.0
  %v1348 = vmax.f32 %v1070, 0.0
  %v1349 = vmax.f32 %v1075, 0.0
  %v1350 = vmax.f32 %v1080, 0.0
  %v1351 = vmax.f32 %v1085, 0.0
  %v1352 = vmax.f32 %v1090, 0.0
  %v1353 = vmax.f32 %v1095, 0.0
  %v1354 = vmax.f32 %v1100, 0.0
  %v1355 = vmax.f32 %v1105, 0.0
  %v1356 = vmax.f32 %v1110, 0.0
  %v1357 = vmax.f32 %v1115, 0.0
  %v1358 = vmax.f32 %v1120, 0.0
  %v1359 = vmax.f32 %v1125, 0.0
  %v1360 = vmax.f32 %v1130, 0.0
  %v1361 = vmax.f32 %v1135, 0.0
  %v1362 = vmax.f32 %v1140, 0.0
  %v1363 = vmax.f32 %v1145, 0.0
  %v1364 = vmax.f32 %v1150, 0.0
  %v1365 = vmax.f32 %v1155, 0.0
  %v1366 = vmax.f32 %v1160, 0.0
  %v1367 = vmax.f32 %v1165, 0.0
  %v1368 = vmax.f32 %v1170, 0.0
  %v1369 = vmax.f32 %v1175, 0.0
  %v1370 = vmax.f32 %v1180, 0.0
  %v1371 = vmax.f32 %v1185, 0.0
  %v1372 = vmax.f32 %v1190, 0.0
  %v1373 = vmax.f32 %v1195, 0.0
  %v1374 = vmax.f32 %v1200, 0.0
  %v1375 = vmax.f32 %v1205, 0.0
  %v1376 = vmax.f32 %v1210, 0.0
  %v1377 = vmax.f32 %v1215, 0.0
  %v1378 = vmax.f32 %v1220, 0.0
  %v1379 = vmax.f32 %v1225, 0.0
  %v1380 = vmax.f32 %v1230, 0.0
  %v1381 = vmax.f32 %v1235, 0.0
  %v1382 = vmax.f32 %v1240, 0.0
  %v1383 = vmax.f32 %v1245, 0.0
  %v1384 = vmax.f32 %v1250, 0.0
  %v1385 = vmax.f32 %v1255, 0.0
  %v1386 = vld [vmem:[%s1] sm:$0xff]
  %v1387 = vld [vmem:[%s1 + $0x8] sm:$0xff]
  %v1388 = vld [vmem:[%s1 + $0x10] sm:$0xff]
  %v1389 = vld [vmem:[%s1 + $0x18] sm:$0xff]
  %v1390 = vld [vmem:[%s1 + $0x20] sm:$0xff]
  %v1391 = vld [vmem:[%s1 + $0x28] sm:$0xff]
  %v1392 = vld [vmem:[%s1 + $0x30] sm:$0xff]
  %v1393 = vld [vmem:[%s1 + $0x38] sm:$0xff]
  %v1394 = vld [vmem:[%s1 + $0x40] sm:$0xff]
  %v1395 = vld [vmem:[%s1 + $0x48] sm:$0xff]
  %v1396 = vld [vmem:[%s1 + $0x50] sm:$0xff]
  %v1397 = vld [vmem:[%s1 + $0x58] sm:$0xff]
  %v1398 = vld [vmem:[%s1 + $0x60] sm:$0xff]
  %v1399 = vld [vmem:[%s1 + $0x68] sm:$0xff]
  %v1400 = vld [vmem:[%s1 + $0x70] sm:$0xff]
  %v1401 = vld [vmem:[%s1 + $0x78] sm:$0xff]
  %v1402 = vld [vmem:[%s1 + $0x80] sm:$0xff]
  %v1403 = vld [vmem:[%s1 + $0x88] sm:$0xff]
  %v1404 = vld [vmem:[%s1 + $0x90] sm:$0xff]
  %v1405 = vld [vmem:[%s1 + $0x98] sm:$0xff]
  %v1406 = vld [vmem:[%s1 + $0xa0] sm:$0xff]
  %v1407 = vld [vmem:[%s1 + $0xa8] sm:$0xff]
  %v1408 = vld [vmem:[%s1 + $0xb0] sm:$0xff]
  %v1409 = vld [vmem:[%s1 + $0xb8] sm:$0xff]
  %v1410 = vld [vmem:[%s1 + $0xc0] sm:$0xff]
  %v1411 = vld [vmem:[%s1 + $0xc8] sm:$0xff]
  %v1412 = vld [vmem:[%s1 + $0xd0] sm:$0xff]
  %v1413 = vld [vmem:[%s1 + $0xd8] sm:$0xff]
  %v1414 = vld [vmem:[%s1 + $0xe0] sm:$0xff]
  %v1415 = vld [vmem:[%s1 + $0xe8] sm:$0xff]
  %v1416 = vld [vmem:[%s1 + $0xf0] sm:$0xff]
  %v1417 = vld [vmem:[%s1 + $0xf8] sm:$0xff]
  %v1418 = vld [vmem:[%s1 + $0x100] sm:$0xff]
  %v1419 = vld [vmem:[%s1 + $0x108] sm:$0xff]
  %v1420 = vld [vmem:[%s1 + $0x110] sm:$0xff]
  %v1421 = vld [vmem:[%s1 + $0x118] sm:$0xff]
  %v1422 = vld [vmem:[%s1 + $0x120] sm:$0xff]
  %v1423 = vld [vmem:[%s1 + $0x128] sm:$0xff]
  %v1424 = vld [vmem:[%s1 + $0x130] sm:$0xff]
  %v1425 = vld [vmem:[%s1 + $0x138] sm:$0xff]
  %v1426 = vld [vmem:[%s1 + $0x140] sm:$0xff]
  %v1427 = vld [vmem:[%s1 + $0x148] sm:$0xff]
  %v1428 = vld [vmem:[%s1 + $0x150] sm:$0xff]
  %v1429 = vld [vmem:[%s1 + $0x158] sm:$0xff]
  %v1430 = vld [vmem:[%s1 + $0x160] sm:$0xff]
  %v1431 = vld [vmem:[%s1 + $0x168] sm:$0xff]
  %v1432 = vld [vmem:[%s1 + $0x170] sm:$0xff]
  %v1433 = vld [vmem:[%s1 + $0x178] sm:$0xff]
  %v1434 = vld [vmem:[%s1 + $0x180] sm:$0xff]
  %v1435 = vld [vmem:[%s1 + $0x188] sm:$0xff]
  %v1436 = vld [vmem:[%s1 + $0x190] sm:$0xff]
  %v1437 = vld [vmem:[%s1 + $0x198] sm:$0xff]
  %v1438 = vld [vmem:[%s1 + $0x1a0] sm:$0xff]
  %v1439 = vld [vmem:[%s1 + $0x1a8] sm:$0xff]
  %v1440 = vld [vmem:[%s1 + $0x1b0] sm:$0xff]
  %v1441 = vld [vmem:[%s1 + $0x1b8] sm:$0xff]
  %v1442 = vld [vmem:[%s1 + $0x1c0] sm:$0xff]
  %v1443 = vld [vmem:[%s1 + $0x1c8] sm:$0xff]
  %v1444 = vld [vmem:[%s1 + $0x1d0] sm:$0xff]
  %v1445 = vld [vmem:[%s1 + $0x1d8] sm:$0xff]
  %v1446 = vld [vmem:[%s1 + $0x1e0] sm:$0xff]
  %v1447 = vld [vmem:[%s1 + $0x1e8] sm:$0xff]
  %v1448 = vld [vmem:[%s1 + $0x1f0] sm:$0xff]
  %v1449 = vld [vmem:[%s1 + $0x1f8] sm:$0xff]
  %v1450 = vld [vmem:[%s1 + $0x200] sm:$0xff]
  %v1451 = vld [vmem:[%s1 + $0x208] sm:$0xff]
  %v1452 = vld [vmem:[%s1 + $0x210] sm:$0xff]
  %v1453 = vld [vmem:[%s1 + $0x218] sm:$0xff]
  %v1454 = vld [vmem:[%s1 + $0x220] sm:$0xff]
  %v1455 = vld [vmem:[%s1 + $0x228] sm:$0xff]
  %v1456 = vld [vmem:[%s1 + $0x230] sm:$0xff]
  %v1457 = vld [vmem:[%s1 + $0x238] sm:$0xff]
  %v1458 = vld [vmem:[%s1 + $0x240] sm:$0xff]
  %v1459 = vld [vmem:[%s1 + $0x248] sm:$0xff]
  %v1460 = vld [vmem:[%s1 + $0x250] sm:$0xff]
  %v1461 = vld [vmem:[%s1 + $0x258] sm:$0xff]
  %v1462 = vld [vmem:[%s1 + $0x260] sm:$0xff]
  %v1463 = vld [vmem:[%s1 + $0x268] sm:$0xff]
  %v1464 = vld [vmem:[%s1 + $0x270] sm:$0xff]
  %v1465 = vld [vmem:[%s1 + $0x278] sm:$0xff]
  %v1466 = vld [vmem:[%s1 + $0x280] sm:$0xff]
  %v1467 = vld [vmem:[%s1 + $0x288] sm:$0xff]
  %v1468 = vld [vmem:[%s1 + $0x290] sm:$0xff]
  %v1469 = vld [vmem:[%s1 + $0x298] sm:$0xff]
  %v1470 = vld [vmem:[%s1 + $0x2a0] sm:$0xff]
  %v1471 = vld [vmem:[%s1 + $0x2a8] sm:$0xff]
  %v1472 = vld [vmem:[%s1 + $0x2b0] sm:$0xff]
  %v1473 = vld [vmem:[%s1 + $0x2b8] sm:$0xff]
  %v1474 = vld [vmem:[%s1 + $0x2c0] sm:$0xff]
  %v1475 = vld [vmem:[%s1 + $0x2c8] sm:$0xff]
  %v1476 = vld [vmem:[%s1 + $0x2d0] sm:$0xff]
  %v1477 = vld [vmem:[%s1 + $0x2d8] sm:$0xff]
  %v1478 = vld [vmem:[%s1 + $0x2e0] sm:$0xff]
  %v1479 = vld [vmem:[%s1 + $0x2e8] sm:$0xff]
  %v1480 = vld [vmem:[%s1 + $0x2f0] sm:$0xff]
  %v1481 = vld [vmem:[%s1 + $0x2f8] sm:$0xff]
  %v1482 = vld [vmem:[%s1 + $0x300] sm:$0xff]
  %v1483 = vld [vmem:[%s1 + $0x308] sm:$0xff]
  %v1484 = vld [vmem:[%s1 + $0x310] sm:$0xff]
  %v1485 = vld [vmem:[%s1 + $0x318] sm:$0xff]
  %v1486 = vld [vmem:[%s1 + $0x320] sm:$0xff]
  %v1487 = vld [vmem:[%s1 + $0x328] sm:$0xff]
  %v1488 = vld [vmem:[%s1 + $0x330] sm:$0xff]
  %v1489 = vld [vmem:[%s1 + $0x338] sm:$0xff]
  %v1490 = vld [vmem:[%s1 + $0x340] sm:$0xff]
  %v1491 = vld [vmem:[%s1 + $0x348] sm:$0xff]
  %v1492 = vld [vmem:[%s1 + $0x350] sm:$0xff]
  %v1493 = vld [vmem:[%s1 + $0x358] sm:$0xff]
  %v1494 = vld [vmem:[%s1 + $0x360] sm:$0xff]
  %v1495 = vld [vmem:[%s1 + $0x368] sm:$0xff]
  %v1496 = vld [vmem:[%s1 + $0x370] sm:$0xff]
  %v1497 = vld [vmem:[%s1 + $0x378] sm:$0xff]
  %v1498 = vld [vmem:[%s1 + $0x380] sm:$0xff]
  %v1499 = vld [vmem:[%s1 + $0x388] sm:$0xff]
  %v1500 = vld [vmem:[%s1 + $0x390] sm:$0xff]
  %v1501 = vld [vmem:[%s1 + $0x398] sm:$0xff]
  %v1502 = vld [vmem:[%s1 + $0x3a0] sm:$0xff]
  %v1503 = vld [vmem:[%s1 + $0x3a8] sm:$0xff]
  %v1504 = vld [vmem:[%s1 + $0x3b0] sm:$0xff]
  %v1505 = vld [vmem:[%s1 + $0x3b8] sm:$0xff]
  %v1506 = vld [vmem:[%s1 + $0x3c0] sm:$0xff]
  %v1507 = vld [vmem:[%s1 + $0x3c8] sm:$0xff]
  %v1508 = vld [vmem:[%s1 + $0x3d0] sm:$0xff]
  %v1509 = vld [vmem:[%s1 + $0x3d8] sm:$0xff]
  %v1510 = vld [vmem:[%s1 + $0x3e0] sm:$0xff]
  %v1511 = vld [vmem:[%s1 + $0x3e8] sm:$0xff]
  %v1512 = vld [vmem:[%s1 + $0x3f0] sm:$0xff]
  %v1513 = vld [vmem:[%s1 + $0x3f8] sm:$0xff]
  %v1514 = vld [vmem:[%s4] sm:$0xff]
  %v1515 = vld [vmem:[%s4 + $0x8] sm:$0xff]
  %v1516 = vld [vmem:[%s4 + $0x10] sm:$0xff]
  %v1517 = vld [vmem:[%s4 + $0x18] sm:$0xff]
  %v1518 = vld [vmem:[%s5] sm:$0x1]
  %v1520 = vlaneseq
  %v1521 = vshrl.u32 %v1520, 7
  %v1522 = vsub.s32 0, %v1521
  %v1523 = vrot.slane %v1518, %v1522
  %v1526 = vsel %vm168, %v1386, 0
  %v1529 = vsel %vm168, %v1387, 0
  %v1532 = vsel %vm168, %v1388, 0
  %v1535 = vsel %vm168, %v1389, 0
  %v1538 = vsel %vm168, %v1390, 0
  %v1541 = vsel %vm168, %v1391, 0
  %v1544 = vsel %vm168, %v1392, 0
  %v1547 = vsel %vm168, %v1393, 0
  %v1550 = vsel %vm168, %v1394, 0
  %v1553 = vsel %vm168, %v1395, 0
  %v1556 = vsel %vm168, %v1396, 0
  %v1559 = vsel %vm168, %v1397, 0
  %v1562 = vsel %vm168, %v1398, 0
  %v1565 = vsel %vm168, %v1399, 0
  %v1568 = vsel %vm168, %v1400, 0
  %v1571 = vsel %vm168, %v1401, 0
  %v1574 = vsel %vm168, %v1402, 0
  %v1577 = vsel %vm168, %v1403, 0
  %v1580 = vsel %vm168, %v1404, 0
  %v1583 = vsel %vm168, %v1405, 0
  %v1586 = vsel %vm168, %v1406, 0
  %v1589 = vsel %vm168, %v1407, 0
  %v1592 = vsel %vm168, %v1408, 0
  %v1595 = vsel %vm168, %v1409, 0
  %v1598 = vsel %vm168, %v1410, 0
  %v1601 = vsel %vm168, %v1411, 0
  %v1604 = vsel %vm168, %v1412, 0
  %v1607 = vsel %vm168, %v1413, 0
  %v1610 = vsel %vm168, %v1414, 0
  %v1613 = vsel %vm168, %v1415, 0
  %v1616 = vsel %vm168, %v1416, 0
  %v1619 = vsel %vm168, %v1417, 0
  %v1622 = vsel %vm168, %v1418, 0
  %v1625 = vsel %vm168, %v1419, 0
  %v1628 = vsel %vm168, %v1420, 0
  %v1631 = vsel %vm168, %v1421, 0
  %v1634 = vsel %vm168, %v1422, 0
  %v1637 = vsel %vm168, %v1423, 0
  %v1640 = vsel %vm168, %v1424, 0
  %v1643 = vsel %vm168, %v1425, 0
  %v1646 = vsel %vm168, %v1426, 0
  %v1649 = vsel %vm168, %v1427, 0
  %v1652 = vsel %vm168, %v1428, 0
  %v1655 = vsel %vm168, %v1429, 0
  %v1658 = vsel %vm168, %v1430, 0
  %v1661 = vsel %vm168, %v1431, 0
  %v1664 = vsel %vm168, %v1432, 0
  %v1667 = vsel %vm168, %v1433, 0
  %v1670 = vsel %vm168, %v1434, 0
  %v1673 = vsel %vm168, %v1435, 0
  %v1676 = vsel %vm168, %v1436, 0
  %v1679 = vsel %vm168, %v1437, 0
  %v1682 = vsel %vm168, %v1438, 0
  %v1685 = vsel %vm168, %v1439, 0
  %v1688 = vsel %vm168, %v1440, 0
  %v1691 = vsel %vm168, %v1441, 0
  %v1694 = vsel %vm168, %v1442, 0
  %v1697 = vsel %vm168, %v1443, 0
  %v1700 = vsel %vm168, %v1444, 0
  %v1703 = vsel %vm168, %v1445, 0
  %v1706 = vsel %vm168, %v1446, 0
  %v1709 = vsel %vm168, %v1447, 0
  %v1712 = vsel %vm168, %v1448, 0
  %v1715 = vsel %vm168, %v1449, 0
  %v1718 = vsel %vm168, %v1450, 0
  %v1721 = vsel %vm168, %v1451, 0
  %v1724 = vsel %vm168, %v1452, 0
  %v1727 = vsel %vm168, %v1453, 0
  %v1730 = vsel %vm168, %v1454, 0
  %v1733 = vsel %vm168, %v1455, 0
  %v1736 = vsel %vm168, %v1456, 0
  %v1739 = vsel %vm168, %v1457, 0
  %v1742 = vsel %vm168, %v1458, 0
  %v1745 = vsel %vm168, %v1459, 0
  %v1748 = vsel %vm168, %v1460, 0
  %v1751 = vsel %vm168, %v1461, 0
  %v1754 = vsel %vm168, %v1462, 0
  %v1757 = vsel %vm168, %v1463, 0
  %v1760 = vsel %vm168, %v1464, 0
  %v1763 = vsel %vm168, %v1465, 0
  %v1766 = vsel %vm168, %v1466, 0
  %v1769 = vsel %vm168, %v1467, 0
  %v1772 = vsel %vm168, %v1468, 0
  %v1775 = vsel %vm168, %v1469, 0
  %v1778 = vsel %vm168, %v1470, 0
  %v1781 = vsel %vm168, %v1471, 0
  %v1784 = vsel %vm168, %v1472, 0
  %v1787 = vsel %vm168, %v1473, 0
  %v1790 = vsel %vm168, %v1474, 0
  %v1793 = vsel %vm168, %v1475, 0
  %v1796 = vsel %vm168, %v1476, 0
  %v1799 = vsel %vm168, %v1477, 0
  %v1802 = vsel %vm168, %v1478, 0
  %v1805 = vsel %vm168, %v1479, 0
  %v1808 = vsel %vm168, %v1480, 0
  %v1811 = vsel %vm168, %v1481, 0
  %v1814 = vsel %vm168, %v1482, 0
  %v1817 = vsel %vm168, %v1483, 0
  %v1820 = vsel %vm168, %v1484, 0
  %v1823 = vsel %vm168, %v1485, 0
  %v1826 = vsel %vm168, %v1486, 0
  %v1829 = vsel %vm168, %v1487, 0
  %v1832 = vsel %vm168, %v1488, 0
  %v1835 = vsel %vm168, %v1489, 0
  %v1838 = vsel %vm168, %v1490, 0
  %v1841 = vsel %vm168, %v1491, 0
  %v1844 = vsel %vm168, %v1492, 0
  %v1847 = vsel %vm168, %v1493, 0
  %v1850 = vsel %vm168, %v1494, 0
  %v1853 = vsel %vm168, %v1495, 0
  %v1856 = vsel %vm168, %v1496, 0
  %v1859 = vsel %vm168, %v1497, 0
  %v1862 = vsel %vm168, %v1498, 0
  %v1865 = vsel %vm168, %v1499, 0
  %v1868 = vsel %vm168, %v1500, 0
  %v1871 = vsel %vm168, %v1501, 0
  %v1874 = vsel %vm168, %v1502, 0
  %v1877 = vsel %vm168, %v1503, 0
  %v1880 = vsel %vm168, %v1504, 0
  %v1883 = vsel %vm168, %v1505, 0
  %v1886 = vsel %vm168, %v1506, 0
  %v1889 = vsel %vm168, %v1507, 0
  %v1892 = vsel %vm168, %v1508, 0
  %v1895 = vsel %vm168, %v1509, 0
  %v1898 = vsel %vm168, %v1510, 0
  %v1901 = vsel %vm168, %v1511, 0
  %v1904 = vsel %vm168, %v1512, 0
  %v1907 = vsel %vm168, %v1513, 0
  %1909 = vmatprep.subr.mxu0 0.0
  %1910 = vmatpush1.msra.mxu0 %v1514
  %1911 = vmatprep.subr.mxu0 0.0
  %1912 = vmatpush1.msra.mxu0 %v1515
  %1913 = vmatprep.subr.mxu0 0.0
  %1914 = vmatpush1.msra.mxu0 %v1516
  %1915 = vmatprep.subr.mxu0 0.0
  %1916 = vmatpush1.msra.mxu0 %v1517
  %1917 = vmatprep.subr.mxu0 0.0
  %1918 = vmatpush1.msra.mxu0 0.0
  %1919 = vmatprep.subr.mxu0 0.0
  %1920 = vmatpush1.msra.mxu0 0.0
  %1921 = vmatprep.subr.mxu0 0.0
  %1922 = vmatpush1.msra.mxu0 0.0
  %1923 = vmatprep.subr.mxu0 0.0
  %1924 = vmatpush1.msra.mxu0 0.0
  %1925 = vmatprep.subr.mxu0 0.0
  %1926 = vmatpush1.msra.mxu0 0.0
  %1927 = vmatprep.subr.mxu0 0.0
  %1928 = vmatpush1.msra.mxu0 0.0
  %1929 = vmatprep.subr.mxu0 0.0
  %1930 = vmatpush1.msra.mxu0 0.0
  %1931 = vmatprep.subr.mxu0 0.0
  %1932 = vmatpush1.msra.mxu0 0.0
  %1933 = vmatprep.subr.mxu0 0.0
  %1934 = vmatpush1.msra.mxu0 0.0
  %1935 = vmatprep.subr.mxu0 0.0
  %1936 = vmatpush1.msra.mxu0 0.0
  %1937 = vmatprep.subr.mxu0 0.0
  %1938 = vmatpush1.msra.mxu0 0.0
  %1939 = vmatprep.subr.mxu0 0.0
  %1940 = vmatpush1.msra.mxu0 0.0
  %1941 = vmatprep.subr.mxu0 0.0
  %1942 = vmatpush1.msra.mxu0 0.0
  %1943 = vmatprep.subr.mxu0 0.0
  %1944 = vmatpush1.msra.mxu0 0.0
  %1945 = vmatprep.subr.mxu0 0.0
  %1946 = vmatpush1.msra.mxu0 0.0
  %1947 = vmatprep.subr.mxu0 0.0
  %1948 = vmatpush1.msra.mxu0 0.0
  %1949 = vmatprep.subr.mxu0 0.0
  %1950 = vmatpush1.msra.mxu0 0.0
  %1951 = vmatprep.subr.mxu0 0.0
  %1952 = vmatpush1.msra.mxu0 0.0
  %1953 = vmatprep.subr.mxu0 0.0
  %1954 = vmatpush1.msra.mxu0 0.0
  %1955 = vmatprep.subr.mxu0 0.0
  %1956 = vmatpush1.msra.mxu0 0.0
  %1957 = vmatprep.subr.mxu0 0.0
  %1958 = vmatpush1.msra.mxu0 0.0
  %1959 = vmatprep.subr.mxu0 0.0
  %1960 = vmatpush1.msra.mxu0 0.0
  %1961 = vmatprep.subr.mxu0 0.0
  %1962 = vmatpush1.msra.mxu0 0.0
  %1963 = vmatprep.subr.mxu0 0.0
  %1964 = vmatpush1.msra.mxu0 0.0
  %1965 = vmatprep.subr.mxu0 0.0
  %1966 = vmatpush1.msra.mxu0 0.0
  %1967 = vmatprep.subr.mxu0 0.0
  %1968 = vmatpush1.msra.mxu0 0.0
  %1969 = vmatprep.subr.mxu0 0.0
  %1970 = vmatpush1.msra.mxu0 0.0
  %1971 = vmatprep.subr.mxu0 0.0
  %1972 = vmatpush1.msra.mxu0 0.0
  %1973 = vmatprep.mubr.f32.mxu0 0.0
  %1974 = vmatmul.mubr.f32.gmra.mrb[0].mxu0 %v1526
  %v1975 = vpop.f32.mrb[0].mxu0
  %v1976 = vadd.f32 %v1523, %v1975
  %v1977 = vpop.f32.mrb[0].mxu0
  %1978 = vmatprep.mubr.f32.mxu0 0.0
  %1979 = vmatmul.mubr.f32.gmra.mrb[0].mxu0 %v1529
  %v1980 = vpop.f32.mrb[0].mxu0
  %v1981 = vadd.f32 %v1523, %v1980
  %v1982 = vpop.f32.mrb[0].mxu0
  %1983 = vmatprep.mubr.f32.mxu0 0.0
  %1984 = vmatmul.mubr.f32.gmra.mrb[0].mxu0 %v1532
  %v1985 = vpop.f32.mrb[0].mxu0
  %v1986 = vadd.f32 %v1523, %v1985
  %v1987 = vpop.f32.mrb[0].mxu0
  %1988 = vmatprep.mubr.f32.mxu0 0.0
  %1989 = vmatmul.mubr.f32.gmra.mrb[0].mxu0 %v1535
  %v1990 = vpop.f32.mrb[0].mxu0
  %v1991 = vadd.f32 %v1523, %v1990
  %v1992 = vpop.f32.mrb[0].mxu0
  %1993 = vmatprep.mubr.f32.mxu0 0.0
  %1994 = vmatmul.mubr.f32.gmra.mrb[0].mxu0 %v1538
  %v1995 = vpop.f32.mrb[0].mxu0
  %v1996 = vadd.f32 %v1523, %v1995
  %v1997 = vpop.f32.mrb[0].mxu0
  %1998 = vmatprep.mubr.f32.mxu0 0.0
  %1999 = vmatmul.mubr.f32.gmra.mrb[0].mxu0 %v1541
  %v2000 = vpop.f32.mrb[0].mxu0
  %v2001 = vadd.f32 %v1523, %v2000
  %v2002 = vpop.f32.mrb[0].mxu0
  %2003 = vmatprep.mubr.f32.mxu0 0.0
  %2004 = vmatmul.mubr.f32.gmra.mrb[0].mxu0 %v1544
  %v2005 = vpop.f32.mrb[0].mxu0
  %v2006 = vadd.f32 %v1523, %v2005
  %v2007 = vpop.f32.mrb[0].mxu0
  %2008 = vmatprep.mubr.f32.mxu0 0.0
  %2009 = vmatmul.mubr.f32.gmra.mrb[0].mxu0 %v1547
  %v2010 = vpop.f32.mrb[0].mxu0
  %v2011 = vadd.f32 %v1523, %v2010
  %v2012 = vpop.f32.mrb[0].mxu0
  %2013 = vmatprep.mubr.f32.mxu0 0.0
  %2014 = vmatmul.mubr.f32.gmra.mrb[0].mxu0 %v1550
  %v2015 = vpop.f32.mrb[0].mxu0
  %v2016 = vadd.f32 %v1523, %v2015
  %v2017 = vpop.f32.mrb[0].mxu0
  %2018 = vmatprep.mubr.f32.mxu0 0.0
  %2019 = vmatmul.mubr.f32.gmra.mrb[0].mxu0 %v1553
  %v2020 = vpop.f32.mrb[0].mxu0
  %v2021 = vadd.f32 %v1523, %v2020
  %v2022 = vpop.f32.mrb[0].mxu0
  %2023 = vmatprep.mubr.f32.mxu0 0.0
  %2024 = vmatmul.mubr.f32.gmra.mrb[0].mxu0 %v1556
  %v2025 = vpop.f32.mrb[0].mxu0
  %v2026 = vadd.f32 %v1523, %v2025
  %v2027 = vpop.f32.mrb[0].mxu0
  %2028 = vmatprep.mubr.f32.mxu0 0.0
  %2029 = vmatmul.mubr.f32.gmra.mrb[0].mxu0 %v1559
  %v2030 = vpop.f32.mrb[0].mxu0
  %v2031 = vadd.f32 %v1523, %v2030
  %v2032 = vpop.f32.mrb[0].mxu0
  %2033 = vmatprep.mubr.f32.mxu0 0.0
  %2034 = vmatmul.mubr.f32.gmra.mrb[0].mxu0 %v1562
  %v2035 = vpop.f32.mrb[0].mxu0
  %v2036 = vadd.f32 %v1523, %v2035
  %v2037 = vpop.f32.mrb[0].mxu0
  %2038 = vmatprep.mubr.f32.mxu0 0.0
  %2039 = vmatmul.mubr.f32.gmra.mrb[0].mxu0 %v1565
  %v2040 = vpop.f32.mrb[0].mxu0
  %v2041 = vadd.f32 %v1523, %v2040
  %v2042 = vpop.f32.mrb[0].mxu0
  %2043 = vmatprep.mubr.f32.mxu0 0.0
  %2044 = vmatmul.mubr.f32.gmra.mrb[0].mxu0 %v1568
  %v2045 = vpop.f32.mrb[0].mxu0
  %v2046 = vadd.f32 %v1523, %v2045
  %v2047 = vpop.f32.mrb[0].mxu0
  %2048 = vmatprep.mubr.f32.mxu0 0.0
  %2049 = vmatmul.mubr.f32.gmra.mrb[0].mxu0 %v1571
  %v2050 = vpop.f32.mrb[0].mxu0
  %v2051 = vadd.f32 %v1523, %v2050
  %v2052 = vpop.f32.mrb[0].mxu0
  %2053 = vmatprep.mubr.f32.mxu0 0.0
  %2054 = vmatmul.mubr.f32.gmra.mrb[0].mxu0 %v1574
  %v2055 = vpop.f32.mrb[0].mxu0
  %v2056 = vadd.f32 %v1523, %v2055
  %v2057 = vpop.f32.mrb[0].mxu0
  %2058 = vmatprep.mubr.f32.mxu0 0.0
  %2059 = vmatmul.mubr.f32.gmra.mrb[0].mxu0 %v1577
  %v2060 = vpop.f32.mrb[0].mxu0
  %v2061 = vadd.f32 %v1523, %v2060
  %v2062 = vpop.f32.mrb[0].mxu0
  %2063 = vmatprep.mubr.f32.mxu0 0.0
  %2064 = vmatmul.mubr.f32.gmra.mrb[0].mxu0 %v1580
  %v2065 = vpop.f32.mrb[0].mxu0
  %v2066 = vadd.f32 %v1523, %v2065
  %v2067 = vpop.f32.mrb[0].mxu0
  %2068 = vmatprep.mubr.f32.mxu0 0.0
  %2069 = vmatmul.mubr.f32.gmra.mrb[0].mxu0 %v1583
  %v2070 = vpop.f32.mrb[0].mxu0
  %v2071 = vadd.f32 %v1523, %v2070
  %v2072 = vpop.f32.mrb[0].mxu0
  %2073 = vmatprep.mubr.f32.mxu0 0.0
  %2074 = vmatmul.mubr.f32.gmra.mrb[0].mxu0 %v1586
  %v2075 = vpop.f32.mrb[0].mxu0
  %v2076 = vadd.f32 %v1523, %v2075
  %v2077 = vpop.f32.mrb[0].mxu0
  %2078 = vmatprep.mubr.f32.mxu0 0.0
  %2079 = vmatmul.mubr.f32.gmra.mrb[0].mxu0 %v1589
  %v2080 = vpop.f32.mrb[0].mxu0
  %v2081 = vadd.f32 %v1523, %v2080
  %v2082 = vpop.f32.mrb[0].mxu0
  %2083 = vmatprep.mubr.f32.mxu0 0.0
  %2084 = vmatmul.mubr.f32.gmra.mrb[0].mxu0 %v1592
  %v2085 = vpop.f32.mrb[0].mxu0
  %v2086 = vadd.f32 %v1523, %v2085
  %v2087 = vpop.f32.mrb[0].mxu0
  %2088 = vmatprep.mubr.f32.mxu0 0.0
  %2089 = vmatmul.mubr.f32.gmra.mrb[0].mxu0 %v1595
  %v2090 = vpop.f32.mrb[0].mxu0
  %v2091 = vadd.f32 %v1523, %v2090
  %v2092 = vpop.f32.mrb[0].mxu0
  %2093 = vmatprep.mubr.f32.mxu0 0.0
  %2094 = vmatmul.mubr.f32.gmra.mrb[0].mxu0 %v1598
  %v2095 = vpop.f32.mrb[0].mxu0
  %v2096 = vadd.f32 %v1523, %v2095
  %v2097 = vpop.f32.mrb[0].mxu0
  %2098 = vmatprep.mubr.f32.mxu0 0.0
  %2099 = vmatmul.mubr.f32.gmra.mrb[0].mxu0 %v1601
  %v2100 = vpop.f32.mrb[0].mxu0
  %v2101 = vadd.f32 %v1523, %v2100
  %v2102 = vpop.f32.mrb[0].mxu0
  %2103 = vmatprep.mubr.f32.mxu0 0.0
  %2104 = vmatmul.mubr.f32.gmra.mrb[0].mxu0 %v1604
  %v2105 = vpop.f32.mrb[0].mxu0
  %v2106 = vadd.f32 %v1523, %v2105
  %v2107 = vpop.f32.mrb[0].mxu0
  %2108 = vmatprep.mubr.f32.mxu0 0.0
  %2109 = vmatmul.mubr.f32.gmra.mrb[0].mxu0 %v1607
  %v2110 = vpop.f32.mrb[0].mxu0
  %v2111 = vadd.f32 %v1523, %v2110
  %v2112 = vpop.f32.mrb[0].mxu0
  %2113 = vmatprep.mubr.f32.mxu0 0.0
  %2114 = vmatmul.mubr.f32.gmra.mrb[0].mxu0 %v1610
  %v2115 = vpop.f32.mrb[0].mxu0
  %v2116 = vadd.f32 %v1523, %v2115
  %v2117 = vpop.f32.mrb[0].mxu0
  %2118 = vmatprep.mubr.f32.mxu0 0.0
  %2119 = vmatmul.mubr.f32.gmra.mrb[0].mxu0 %v1613
  %v2120 = vpop.f32.mrb[0].mxu0
  %v2121 = vadd.f32 %v1523, %v2120
  %v2122 = vpop.f32.mrb[0].mxu0
  %2123 = vmatprep.mubr.f32.mxu0 0.0
  %2124 = vmatmul.mubr.f32.gmra.mrb[0].mxu0 %v1616
  %v2125 = vpop.f32.mrb[0].mxu0
  %v2126 = vadd.f32 %v1523, %v2125
  %v2127 = vpop.f32.mrb[0].mxu0
  %2128 = vmatprep.mubr.f32.mxu0 0.0
  %2129 = vmatmul.mubr.f32.gmra.mrb[0].mxu0 %v1619
  %v2130 = vpop.f32.mrb[0].mxu0
  %v2131 = vadd.f32 %v1523, %v2130
  %v2132 = vpop.f32.mrb[0].mxu0
  %2133 = vmatprep.mubr.f32.mxu0 0.0
  %2134 = vmatmul.mubr.f32.gmra.mrb[0].mxu0 %v1622
  %v2135 = vpop.f32.mrb[0].mxu0
  %v2136 = vadd.f32 %v1523, %v2135
  %v2137 = vpop.f32.mrb[0].mxu0
  %2138 = vmatprep.mubr.f32.mxu0 0.0
  %2139 = vmatmul.mubr.f32.gmra.mrb[0].mxu0 %v1625
  %v2140 = vpop.f32.mrb[0].mxu0
  %v2141 = vadd.f32 %v1523, %v2140
  %v2142 = vpop.f32.mrb[0].mxu0
  %2143 = vmatprep.mubr.f32.mxu0 0.0
  %2144 = vmatmul.mubr.f32.gmra.mrb[0].mxu0 %v1628
  %v2145 = vpop.f32.mrb[0].mxu0
  %v2146 = vadd.f32 %v1523, %v2145
  %v2147 = vpop.f32.mrb[0].mxu0
  %2148 = vmatprep.mubr.f32.mxu0 0.0
  %2149 = vmatmul.mubr.f32.gmra.mrb[0].mxu0 %v1631
  %v2150 = vpop.f32.mrb[0].mxu0
  %v2151 = vadd.f32 %v1523, %v2150
  %v2152 = vpop.f32.mrb[0].mxu0
  %2153 = vmatprep.mubr.f32.mxu0 0.0
  %2154 = vmatmul.mubr.f32.gmra.mrb[0].mxu0 %v1634
  %v2155 = vpop.f32.mrb[0].mxu0
  %v2156 = vadd.f32 %v1523, %v2155
  %v2157 = vpop.f32.mrb[0].mxu0
  %2158 = vmatprep.mubr.f32.mxu0 0.0
  %2159 = vmatmul.mubr.f32.gmra.mrb[0].mxu0 %v1637
  %v2160 = vpop.f32.mrb[0].mxu0
  %v2161 = vadd.f32 %v1523, %v2160
  %v2162 = vpop.f32.mrb[0].mxu0
  %2163 = vmatprep.mubr.f32.mxu0 0.0
  %2164 = vmatmul.mubr.f32.gmra.mrb[0].mxu0 %v1640
  %v2165 = vpop.f32.mrb[0].mxu0
  %v2166 = vadd.f32 %v1523, %v2165
  %v2167 = vpop.f32.mrb[0].mxu0
  %2168 = vmatprep.mubr.f32.mxu0 0.0
  %2169 = vmatmul.mubr.f32.gmra.mrb[0].mxu0 %v1643
  %v2170 = vpop.f32.mrb[0].mxu0
  %v2171 = vadd.f32 %v1523, %v2170
  %v2172 = vpop.f32.mrb[0].mxu0
  %2173 = vmatprep.mubr.f32.mxu0 0.0
  %2174 = vmatmul.mubr.f32.gmra.mrb[0].mxu0 %v1646
  %v2175 = vpop.f32.mrb[0].mxu0
  %v2176 = vadd.f32 %v1523, %v2175
  %v2177 = vpop.f32.mrb[0].mxu0
  %2178 = vmatprep.mubr.f32.mxu0 0.0
  %2179 = vmatmul.mubr.f32.gmra.mrb[0].mxu0 %v1649
  %v2180 = vpop.f32.mrb[0].mxu0
  %v2181 = vadd.f32 %v1523, %v2180
  %v2182 = vpop.f32.mrb[0].mxu0
  %2183 = vmatprep.mubr.f32.mxu0 0.0
  %2184 = vmatmul.mubr.f32.gmra.mrb[0].mxu0 %v1652
  %v2185 = vpop.f32.mrb[0].mxu0
  %v2186 = vadd.f32 %v1523, %v2185
  %v2187 = vpop.f32.mrb[0].mxu0
  %2188 = vmatprep.mubr.f32.mxu0 0.0
  %2189 = vmatmul.mubr.f32.gmra.mrb[0].mxu0 %v1655
  %v2190 = vpop.f32.mrb[0].mxu0
  %v2191 = vadd.f32 %v1523, %v2190
  %v2192 = vpop.f32.mrb[0].mxu0
  %2193 = vmatprep.mubr.f32.mxu0 0.0
  %2194 = vmatmul.mubr.f32.gmra.mrb[0].mxu0 %v1658
  %v2195 = vpop.f32.mrb[0].mxu0
  %v2196 = vadd.f32 %v1523, %v2195
  %v2197 = vpop.f32.mrb[0].mxu0
  %2198 = vmatprep.mubr.f32.mxu0 0.0
  %2199 = vmatmul.mubr.f32.gmra.mrb[0].mxu0 %v1661
  %v2200 = vpop.f32.mrb[0].mxu0
  %v2201 = vadd.f32 %v1523, %v2200
  %v2202 = vpop.f32.mrb[0].mxu0
  %2203 = vmatprep.mubr.f32.mxu0 0.0
  %2204 = vmatmul.mubr.f32.gmra.mrb[0].mxu0 %v1664
  %v2205 = vpop.f32.mrb[0].mxu0
  %v2206 = vadd.f32 %v1523, %v2205
  %v2207 = vpop.f32.mrb[0].mxu0
  %2208 = vmatprep.mubr.f32.mxu0 0.0
  %2209 = vmatmul.mubr.f32.gmra.mrb[0].mxu0 %v1667
  %v2210 = vpop.f32.mrb[0].mxu0
  %v2211 = vadd.f32 %v1523, %v2210
  %v2212 = vpop.f32.mrb[0].mxu0
  %2213 = vmatprep.mubr.f32.mxu0 0.0
  %2214 = vmatmul.mubr.f32.gmra.mrb[0].mxu0 %v1670
  %v2215 = vpop.f32.mrb[0].mxu0
  %v2216 = vadd.f32 %v1523, %v2215
  %v2217 = vpop.f32.mrb[0].mxu0
  %2218 = vmatprep.mubr.f32.mxu0 0.0
  %2219 = vmatmul.mubr.f32.gmra.mrb[0].mxu0 %v1673
  %v2220 = vpop.f32.mrb[0].mxu0
  %v2221 = vadd.f32 %v1523, %v2220
  %v2222 = vpop.f32.mrb[0].mxu0
  %2223 = vmatprep.mubr.f32.mxu0 0.0
  %2224 = vmatmul.mubr.f32.gmra.mrb[0].mxu0 %v1676
  %v2225 = vpop.f32.mrb[0].mxu0
  %v2226 = vadd.f32 %v1523, %v2225
  %v2227 = vpop.f32.mrb[0].mxu0
  %2228 = vmatprep.mubr.f32.mxu0 0.0
  %2229 = vmatmul.mubr.f32.gmra.mrb[0].mxu0 %v1679
  %v2230 = vpop.f32.mrb[0].mxu0
  %v2231 = vadd.f32 %v1523, %v2230
  %v2232 = vpop.f32.mrb[0].mxu0
  %2233 = vmatprep.mubr.f32.mxu0 0.0
  %2234 = vmatmul.mubr.f32.gmra.mrb[0].mxu0 %v1682
  %v2235 = vpop.f32.mrb[0].mxu0
  %v2236 = vadd.f32 %v1523, %v2235
  %v2237 = vpop.f32.mrb[0].mxu0
  %2238 = vmatprep.mubr.f32.mxu0 0.0
  %2239 = vmatmul.mubr.f32.gmra.mrb[0].mxu0 %v1685
  %v2240 = vpop.f32.mrb[0].mxu0
  %v2241 = vadd.f32 %v1523, %v2240
  %v2242 = vpop.f32.mrb[0].mxu0
  %2243 = vmatprep.mubr.f32.mxu0 0.0
  %2244 = vmatmul.mubr.f32.gmra.mrb[0].mxu0 %v1688
  %v2245 = vpop.f32.mrb[0].mxu0
  %v2246 = vadd.f32 %v1523, %v2245
  %v2247 = vpop.f32.mrb[0].mxu0
  %2248 = vmatprep.mubr.f32.mxu0 0.0
  %2249 = vmatmul.mubr.f32.gmra.mrb[0].mxu0 %v1691
  %v2250 = vpop.f32.mrb[0].mxu0
  %v2251 = vadd.f32 %v1523, %v2250
  %v2252 = vpop.f32.mrb[0].mxu0
  %2253 = vmatprep.mubr.f32.mxu0 0.0
  %2254 = vmatmul.mubr.f32.gmra.mrb[0].mxu0 %v1694
  %v2255 = vpop.f32.mrb[0].mxu0
  %v2256 = vadd.f32 %v1523, %v2255
  %v2257 = vpop.f32.mrb[0].mxu0
  %2258 = vmatprep.mubr.f32.mxu0 0.0
  %2259 = vmatmul.mubr.f32.gmra.mrb[0].mxu0 %v1697
  %v2260 = vpop.f32.mrb[0].mxu0
  %v2261 = vadd.f32 %v1523, %v2260
  %v2262 = vpop.f32.mrb[0].mxu0
  %2263 = vmatprep.mubr.f32.mxu0 0.0
  %2264 = vmatmul.mubr.f32.gmra.mrb[0].mxu0 %v1700
  %v2265 = vpop.f32.mrb[0].mxu0
  %v2266 = vadd.f32 %v1523, %v2265
  %v2267 = vpop.f32.mrb[0].mxu0
  %2268 = vmatprep.mubr.f32.mxu0 0.0
  %2269 = vmatmul.mubr.f32.gmra.mrb[0].mxu0 %v1703
  %v2270 = vpop.f32.mrb[0].mxu0
  %v2271 = vadd.f32 %v1523, %v2270
  %v2272 = vpop.f32.mrb[0].mxu0
  %2273 = vmatprep.mubr.f32.mxu0 0.0
  %2274 = vmatmul.mubr.f32.gmra.mrb[0].mxu0 %v1706
  %v2275 = vpop.f32.mrb[0].mxu0
  %v2276 = vadd.f32 %v1523, %v2275
  %v2277 = vpop.f32.mrb[0].mxu0
  %2278 = vmatprep.mubr.f32.mxu0 0.0
  %2279 = vmatmul.mubr.f32.gmra.mrb[0].mxu0 %v1709
  %v2280 = vpop.f32.mrb[0].mxu0
  %v2281 = vadd.f32 %v1523, %v2280
  %v2282 = vpop.f32.mrb[0].mxu0
  %2283 = vmatprep.mubr.f32.mxu0 0.0
  %2284 = vmatmul.mubr.f32.gmra.mrb[0].mxu0 %v1712
  %v2285 = vpop.f32.mrb[0].mxu0
  %v2286 = vadd.f32 %v1523, %v2285
  %v2287 = vpop.f32.mrb[0].mxu0
  %2288 = vmatprep.mubr.f32.mxu0 0.0
  %2289 = vmatmul.mubr.f32.gmra.mrb[0].mxu0 %v1715
  %v2290 = vpop.f32.mrb[0].mxu0
  %v2291 = vadd.f32 %v1523, %v2290
  %v2292 = vpop.f32.mrb[0].mxu0
  %2293 = vmatprep.mubr.f32.mxu0 0.0
  %2294 = vmatmul.mubr.f32.gmra.mrb[0].mxu0 %v1718
  %v2295 = vpop.f32.mrb[0].mxu0
  %v2296 = vadd.f32 %v1523, %v2295
  %v2297 = vpop.f32.mrb[0].mxu0
  %2298 = vmatprep.mubr.f32.mxu0 0.0
  %2299 = vmatmul.mubr.f32.gmra.mrb[0].mxu0 %v1721
  %v2300 = vpop.f32.mrb[0].mxu0
  %v2301 = vadd.f32 %v1523, %v2300
  %v2302 = vpop.f32.mrb[0].mxu0
  %2303 = vmatprep.mubr.f32.mxu0 0.0
  %2304 = vmatmul.mubr.f32.gmra.mrb[0].mxu0 %v1724
  %v2305 = vpop.f32.mrb[0].mxu0
  %v2306 = vadd.f32 %v1523, %v2305
  %v2307 = vpop.f32.mrb[0].mxu0
  %2308 = vmatprep.mubr.f32.mxu0 0.0
  %2309 = vmatmul.mubr.f32.gmra.mrb[0].mxu0 %v1727
  %v2310 = vpop.f32.mrb[0].mxu0
  %v2311 = vadd.f32 %v1523, %v2310
  %v2312 = vpop.f32.mrb[0].mxu0
  %2313 = vmatprep.mubr.f32.mxu0 0.0
  %2314 = vmatmul.mubr.f32.gmra.mrb[0].mxu0 %v1730
  %v2315 = vpop.f32.mrb[0].mxu0
  %v2316 = vadd.f32 %v1523, %v2315
  %v2317 = vpop.f32.mrb[0].mxu0
  %2318 = vmatprep.mubr.f32.mxu0 0.0
  %2319 = vmatmul.mubr.f32.gmra.mrb[0].mxu0 %v1733
  %v2320 = vpop.f32.mrb[0].mxu0
  %v2321 = vadd.f32 %v1523, %v2320
  %v2322 = vpop.f32.mrb[0].mxu0
  %2323 = vmatprep.mubr.f32.mxu0 0.0
  %2324 = vmatmul.mubr.f32.gmra.mrb[0].mxu0 %v1736
  %v2325 = vpop.f32.mrb[0].mxu0
  %v2326 = vadd.f32 %v1523, %v2325
  %v2327 = vpop.f32.mrb[0].mxu0
  %2328 = vmatprep.mubr.f32.mxu0 0.0
  %2329 = vmatmul.mubr.f32.gmra.mrb[0].mxu0 %v1739
  %v2330 = vpop.f32.mrb[0].mxu0
  %v2331 = vadd.f32 %v1523, %v2330
  %v2332 = vpop.f32.mrb[0].mxu0
  %2333 = vmatprep.mubr.f32.mxu0 0.0
  %2334 = vmatmul.mubr.f32.gmra.mrb[0].mxu0 %v1742
  %v2335 = vpop.f32.mrb[0].mxu0
  %v2336 = vadd.f32 %v1523, %v2335
  %v2337 = vpop.f32.mrb[0].mxu0
  %2338 = vmatprep.mubr.f32.mxu0 0.0
  %2339 = vmatmul.mubr.f32.gmra.mrb[0].mxu0 %v1745
  %v2340 = vpop.f32.mrb[0].mxu0
  %v2341 = vadd.f32 %v1523, %v2340
  %v2342 = vpop.f32.mrb[0].mxu0
  %2343 = vmatprep.mubr.f32.mxu0 0.0
  %2344 = vmatmul.mubr.f32.gmra.mrb[0].mxu0 %v1748
  %v2345 = vpop.f32.mrb[0].mxu0
  %v2346 = vadd.f32 %v1523, %v2345
  %v2347 = vpop.f32.mrb[0].mxu0
  %2348 = vmatprep.mubr.f32.mxu0 0.0
  %2349 = vmatmul.mubr.f32.gmra.mrb[0].mxu0 %v1751
  %v2350 = vpop.f32.mrb[0].mxu0
  %v2351 = vadd.f32 %v1523, %v2350
  %v2352 = vpop.f32.mrb[0].mxu0
  %2353 = vmatprep.mubr.f32.mxu0 0.0
  %2354 = vmatmul.mubr.f32.gmra.mrb[0].mxu0 %v1754
  %v2355 = vpop.f32.mrb[0].mxu0
  %v2356 = vadd.f32 %v1523, %v2355
  %v2357 = vpop.f32.mrb[0].mxu0
  %2358 = vmatprep.mubr.f32.mxu0 0.0
  %2359 = vmatmul.mubr.f32.gmra.mrb[0].mxu0 %v1757
  %v2360 = vpop.f32.mrb[0].mxu0
  %v2361 = vadd.f32 %v1523, %v2360
  %v2362 = vpop.f32.mrb[0].mxu0
  %2363 = vmatprep.mubr.f32.mxu0 0.0
  %2364 = vmatmul.mubr.f32.gmra.mrb[0].mxu0 %v1760
  %v2365 = vpop.f32.mrb[0].mxu0
  %v2366 = vadd.f32 %v1523, %v2365
  %v2367 = vpop.f32.mrb[0].mxu0
  %2368 = vmatprep.mubr.f32.mxu0 0.0
  %2369 = vmatmul.mubr.f32.gmra.mrb[0].mxu0 %v1763
  %v2370 = vpop.f32.mrb[0].mxu0
  %v2371 = vadd.f32 %v1523, %v2370
  %v2372 = vpop.f32.mrb[0].mxu0
  %2373 = vmatprep.mubr.f32.mxu0 0.0
  %2374 = vmatmul.mubr.f32.gmra.mrb[0].mxu0 %v1766
  %v2375 = vpop.f32.mrb[0].mxu0
  %v2376 = vadd.f32 %v1523, %v2375
  %v2377 = vpop.f32.mrb[0].mxu0
  %2378 = vmatprep.mubr.f32.mxu0 0.0
  %2379 = vmatmul.mubr.f32.gmra.mrb[0].mxu0 %v1769
  %v2380 = vpop.f32.mrb[0].mxu0
  %v2381 = vadd.f32 %v1523, %v2380
  %v2382 = vpop.f32.mrb[0].mxu0
  %2383 = vmatprep.mubr.f32.mxu0 0.0
  %2384 = vmatmul.mubr.f32.gmra.mrb[0].mxu0 %v1772
  %v2385 = vpop.f32.mrb[0].mxu0
  %v2386 = vadd.f32 %v1523, %v2385
  %v2387 = vpop.f32.mrb[0].mxu0
  %2388 = vmatprep.mubr.f32.mxu0 0.0
  %2389 = vmatmul.mubr.f32.gmra.mrb[0].mxu0 %v1775
  %v2390 = vpop.f32.mrb[0].mxu0
  %v2391 = vadd.f32 %v1523, %v2390
  %v2392 = vpop.f32.mrb[0].mxu0
  %2393 = vmatprep.mubr.f32.mxu0 0.0
  %2394 = vmatmul.mubr.f32.gmra.mrb[0].mxu0 %v1778
  %v2395 = vpop.f32.mrb[0].mxu0
  %v2396 = vadd.f32 %v1523, %v2395
  %v2397 = vpop.f32.mrb[0].mxu0
  %2398 = vmatprep.mubr.f32.mxu0 0.0
  %2399 = vmatmul.mubr.f32.gmra.mrb[0].mxu0 %v1781
  %v2400 = vpop.f32.mrb[0].mxu0
  %v2401 = vadd.f32 %v1523, %v2400
  %v2402 = vpop.f32.mrb[0].mxu0
  %2403 = vmatprep.mubr.f32.mxu0 0.0
  %2404 = vmatmul.mubr.f32.gmra.mrb[0].mxu0 %v1784
  %v2405 = vpop.f32.mrb[0].mxu0
  %v2406 = vadd.f32 %v1523, %v2405
  %v2407 = vpop.f32.mrb[0].mxu0
  %2408 = vmatprep.mubr.f32.mxu0 0.0
  %2409 = vmatmul.mubr.f32.gmra.mrb[0].mxu0 %v1787
  %v2410 = vpop.f32.mrb[0].mxu0
  %v2411 = vadd.f32 %v1523, %v2410
  %v2412 = vpop.f32.mrb[0].mxu0
  %2413 = vmatprep.mubr.f32.mxu0 0.0
  %2414 = vmatmul.mubr.f32.gmra.mrb[0].mxu0 %v1790
  %v2415 = vpop.f32.mrb[0].mxu0
  %v2416 = vadd.f32 %v1523, %v2415
  %v2417 = vpop.f32.mrb[0].mxu0
  %2418 = vmatprep.mubr.f32.mxu0 0.0
  %2419 = vmatmul.mubr.f32.gmra.mrb[0].mxu0 %v1793
  %v2420 = vpop.f32.mrb[0].mxu0
  %v2421 = vadd.f32 %v1523, %v2420
  %v2422 = vpop.f32.mrb[0].mxu0
  %2423 = vmatprep.mubr.f32.mxu0 0.0
  %2424 = vmatmul.mubr.f32.gmra.mrb[0].mxu0 %v1796
  %v2425 = vpop.f32.mrb[0].mxu0
  %v2426 = vadd.f32 %v1523, %v2425
  %v2427 = vpop.f32.mrb[0].mxu0
  %2428 = vmatprep.mubr.f32.mxu0 0.0
  %2429 = vmatmul.mubr.f32.gmra.mrb[0].mxu0 %v1799
  %v2430 = vpop.f32.mrb[0].mxu0
  %v2431 = vadd.f32 %v1523, %v2430
  %v2432 = vpop.f32.mrb[0].mxu0
  %2433 = vmatprep.mubr.f32.mxu0 0.0
  %2434 = vmatmul.mubr.f32.gmra.mrb[0].mxu0 %v1802
  %v2435 = vpop.f32.mrb[0].mxu0
  %v2436 = vadd.f32 %v1523, %v2435
  %v2437 = vpop.f32.mrb[0].mxu0
  %2438 = vmatprep.mubr.f32.mxu0 0.0
  %2439 = vmatmul.mubr.f32.gmra.mrb[0].mxu0 %v1805
  %v2440 = vpop.f32.mrb[0].mxu0
  %v2441 = vadd.f32 %v1523, %v2440
  %v2442 = vpop.f32.mrb[0].mxu0
  %2443 = vmatprep.mubr.f32.mxu0 0.0
  %2444 = vmatmul.mubr.f32.gmra.mrb[0].mxu0 %v1808
  %v2445 = vpop.f32.mrb[0].mxu0
  %v2446 = vadd.f32 %v1523, %v2445
  %v2447 = vpop.f32.mrb[0].mxu0
  %2448 = vmatprep.mubr.f32.mxu0 0.0
  %2449 = vmatmul.mubr.f32.gmra.mrb[0].mxu0 %v1811
  %v2450 = vpop.f32.mrb[0].mxu0
  %v2451 = vadd.f32 %v1523, %v2450
  %v2452 = vpop.f32.mrb[0].mxu0
  %2453 = vmatprep.mubr.f32.mxu0 0.0
  %2454 = vmatmul.mubr.f32.gmra.mrb[0].mxu0 %v1814
  %v2455 = vpop.f32.mrb[0].mxu0
  %v2456 = vadd.f32 %v1523, %v2455
  %v2457 = vpop.f32.mrb[0].mxu0
  %2458 = vmatprep.mubr.f32.mxu0 0.0
  %2459 = vmatmul.mubr.f32.gmra.mrb[0].mxu0 %v1817
  %v2460 = vpop.f32.mrb[0].mxu0
  %v2461 = vadd.f32 %v1523, %v2460
  %v2462 = vpop.f32.mrb[0].mxu0
  %2463 = vmatprep.mubr.f32.mxu0 0.0
  %2464 = vmatmul.mubr.f32.gmra.mrb[0].mxu0 %v1820
  %v2465 = vpop.f32.mrb[0].mxu0
  %v2466 = vadd.f32 %v1523, %v2465
  %v2467 = vpop.f32.mrb[0].mxu0
  %2468 = vmatprep.mubr.f32.mxu0 0.0
  %2469 = vmatmul.mubr.f32.gmra.mrb[0].mxu0 %v1823
  %v2470 = vpop.f32.mrb[0].mxu0
  %v2471 = vadd.f32 %v1523, %v2470
  %v2472 = vpop.f32.mrb[0].mxu0
  %2473 = vmatprep.mubr.f32.mxu0 0.0
  %2474 = vmatmul.mubr.f32.gmra.mrb[0].mxu0 %v1826
  %v2475 = vpop.f32.mrb[0].mxu0
  %v2476 = vadd.f32 %v1523, %v2475
  %v2477 = vpop.f32.mrb[0].mxu0
  %2478 = vmatprep.mubr.f32.mxu0 0.0
  %2479 = vmatmul.mubr.f32.gmra.mrb[0].mxu0 %v1829
  %v2480 = vpop.f32.mrb[0].mxu0
  %v2481 = vadd.f32 %v1523, %v2480
  %v2482 = vpop.f32.mrb[0].mxu0
  %2483 = vmatprep.mubr.f32.mxu0 0.0
  %2484 = vmatmul.mubr.f32.gmra.mrb[0].mxu0 %v1832
  %v2485 = vpop.f32.mrb[0].mxu0
  %v2486 = vadd.f32 %v1523, %v2485
  %v2487 = vpop.f32.mrb[0].mxu0
  %2488 = vmatprep.mubr.f32.mxu0 0.0
  %2489 = vmatmul.mubr.f32.gmra.mrb[0].mxu0 %v1835
  %v2490 = vpop.f32.mrb[0].mxu0
  %v2491 = vadd.f32 %v1523, %v2490
  %v2492 = vpop.f32.mrb[0].mxu0
  %2493 = vmatprep.mubr.f32.mxu0 0.0
  %2494 = vmatmul.mubr.f32.gmra.mrb[0].mxu0 %v1838
  %v2495 = vpop.f32.mrb[0].mxu0
  %v2496 = vadd.f32 %v1523, %v2495
  %v2497 = vpop.f32.mrb[0].mxu0
  %2498 = vmatprep.mubr.f32.mxu0 0.0
  %2499 = vmatmul.mubr.f32.gmra.mrb[0].mxu0 %v1841
  %v2500 = vpop.f32.mrb[0].mxu0
  %v2501 = vadd.f32 %v1523, %v2500
  %v2502 = vpop.f32.mrb[0].mxu0
  %2503 = vmatprep.mubr.f32.mxu0 0.0
  %2504 = vmatmul.mubr.f32.gmra.mrb[0].mxu0 %v1844
  %v2505 = vpop.f32.mrb[0].mxu0
  %v2506 = vadd.f32 %v1523, %v2505
  %v2507 = vpop.f32.mrb[0].mxu0
  %2508 = vmatprep.mubr.f32.mxu0 0.0
  %2509 = vmatmul.mubr.f32.gmra.mrb[0].mxu0 %v1847
  %v2510 = vpop.f32.mrb[0].mxu0
  %v2511 = vadd.f32 %v1523, %v2510
  %v2512 = vpop.f32.mrb[0].mxu0
  %2513 = vmatprep.mubr.f32.mxu0 0.0
  %2514 = vmatmul.mubr.f32.gmra.mrb[0].mxu0 %v1850
  %v2515 = vpop.f32.mrb[0].mxu0
  %v2516 = vadd.f32 %v1523, %v2515
  %v2517 = vpop.f32.mrb[0].mxu0
  %2518 = vmatprep.mubr.f32.mxu0 0.0
  %2519 = vmatmul.mubr.f32.gmra.mrb[0].mxu0 %v1853
  %v2520 = vpop.f32.mrb[0].mxu0
  %v2521 = vadd.f32 %v1523, %v2520
  %v2522 = vpop.f32.mrb[0].mxu0
  %2523 = vmatprep.mubr.f32.mxu0 0.0
  %2524 = vmatmul.mubr.f32.gmra.mrb[0].mxu0 %v1856
  %v2525 = vpop.f32.mrb[0].mxu0
  %v2526 = vadd.f32 %v1523, %v2525
  %v2527 = vpop.f32.mrb[0].mxu0
  %2528 = vmatprep.mubr.f32.mxu0 0.0
  %2529 = vmatmul.mubr.f32.gmra.mrb[0].mxu0 %v1859
  %v2530 = vpop.f32.mrb[0].mxu0
  %v2531 = vadd.f32 %v1523, %v2530
  %v2532 = vpop.f32.mrb[0].mxu0
  %2533 = vmatprep.mubr.f32.mxu0 0.0
  %2534 = vmatmul.mubr.f32.gmra.mrb[0].mxu0 %v1862
  %v2535 = vpop.f32.mrb[0].mxu0
  %v2536 = vadd.f32 %v1523, %v2535
  %v2537 = vpop.f32.mrb[0].mxu0
  %2538 = vmatprep.mubr.f32.mxu0 0.0
  %2539 = vmatmul.mubr.f32.gmra.mrb[0].mxu0 %v1865
  %v2540 = vpop.f32.mrb[0].mxu0
  %v2541 = vadd.f32 %v1523, %v2540
  %v2542 = vpop.f32.mrb[0].mxu0
  %2543 = vmatprep.mubr.f32.mxu0 0.0
  %2544 = vmatmul.mubr.f32.gmra.mrb[0].mxu0 %v1868
  %v2545 = vpop.f32.mrb[0].mxu0
  %v2546 = vadd.f32 %v1523, %v2545
  %v2547 = vpop.f32.mrb[0].mxu0
  %2548 = vmatprep.mubr.f32.mxu0 0.0
  %2549 = vmatmul.mubr.f32.gmra.mrb[0].mxu0 %v1871
  %v2550 = vpop.f32.mrb[0].mxu0
  %v2551 = vadd.f32 %v1523, %v2550
  %v2552 = vpop.f32.mrb[0].mxu0
  %2553 = vmatprep.mubr.f32.mxu0 0.0
  %2554 = vmatmul.mubr.f32.gmra.mrb[0].mxu0 %v1874
  %v2555 = vpop.f32.mrb[0].mxu0
  %v2556 = vadd.f32 %v1523, %v2555
  %v2557 = vpop.f32.mrb[0].mxu0
  %2558 = vmatprep.mubr.f32.mxu0 0.0
  %2559 = vmatmul.mubr.f32.gmra.mrb[0].mxu0 %v1877
  %v2560 = vpop.f32.mrb[0].mxu0
  %v2561 = vadd.f32 %v1523, %v2560
  %v2562 = vpop.f32.mrb[0].mxu0
  %2563 = vmatprep.mubr.f32.mxu0 0.0
  %2564 = vmatmul.mubr.f32.gmra.mrb[0].mxu0 %v1880
  %v2565 = vpop.f32.mrb[0].mxu0
  %v2566 = vadd.f32 %v1523, %v2565
  %v2567 = vpop.f32.mrb[0].mxu0
  %2568 = vmatprep.mubr.f32.mxu0 0.0
  %2569 = vmatmul.mubr.f32.gmra.mrb[0].mxu0 %v1883
  %v2570 = vpop.f32.mrb[0].mxu0
  %v2571 = vadd.f32 %v1523, %v2570
  %v2572 = vpop.f32.mrb[0].mxu0
  %2573 = vmatprep.mubr.f32.mxu0 0.0
  %2574 = vmatmul.mubr.f32.gmra.mrb[0].mxu0 %v1886
  %v2575 = vpop.f32.mrb[0].mxu0
  %v2576 = vadd.f32 %v1523, %v2575
  %v2577 = vpop.f32.mrb[0].mxu0
  %2578 = vmatprep.mubr.f32.mxu0 0.0
  %2579 = vmatmul.mubr.f32.gmra.mrb[0].mxu0 %v1889
  %v2580 = vpop.f32.mrb[0].mxu0
  %v2581 = vadd.f32 %v1523, %v2580
  %v2582 = vpop.f32.mrb[0].mxu0
  %2583 = vmatprep.mubr.f32.mxu0 0.0
  %2584 = vmatmul.mubr.f32.gmra.mrb[0].mxu0 %v1892
  %v2585 = vpop.f32.mrb[0].mxu0
  %v2586 = vadd.f32 %v1523, %v2585
  %v2587 = vpop.f32.mrb[0].mxu0
  %2588 = vmatprep.mubr.f32.mxu0 0.0
  %2589 = vmatmul.mubr.f32.gmra.mrb[0].mxu0 %v1895
  %v2590 = vpop.f32.mrb[0].mxu0
  %v2591 = vadd.f32 %v1523, %v2590
  %v2592 = vpop.f32.mrb[0].mxu0
  %2593 = vmatprep.mubr.f32.mxu0 0.0
  %2594 = vmatmul.mubr.f32.gmra.mrb[0].mxu0 %v1898
  %v2595 = vpop.f32.mrb[0].mxu0
  %v2596 = vadd.f32 %v1523, %v2595
  %v2597 = vpop.f32.mrb[0].mxu0
  %2598 = vmatprep.mubr.f32.mxu0 0.0
  %2599 = vmatmul.mubr.f32.gmra.mrb[0].mxu0 %v1901
  %v2600 = vpop.f32.mrb[0].mxu0
  %v2601 = vadd.f32 %v1523, %v2600
  %v2602 = vpop.f32.mrb[0].mxu0
  %2603 = vmatprep.mubr.f32.mxu0 0.0
  %2604 = vmatmul.mubr.f32.gmra.mrb[0].mxu0 %v1904
  %v2605 = vpop.f32.mrb[0].mxu0
  %v2606 = vadd.f32 %v1523, %v2605
  %v2607 = vpop.f32.mrb[0].mxu0
  %2608 = vmatprep.mubr.f32.mxu0 0.0
  %2609 = vmatmul.mubr.f32.gmra.mrb[0].mxu0 %v1907
  %v2610 = vpop.f32.mrb[0].mxu0
  %v2611 = vadd.f32 %v1523, %v2610
  %v2612 = vpop.f32.mrb[0].mxu0
  %2613 = vdwg.mxu0
  %v2614 = vmax.f32 %v1976, 0.0
  %v2615 = vmax.f32 %v1981, 0.0
  %v2616 = vmax.f32 %v1986, 0.0
  %v2617 = vmax.f32 %v1991, 0.0
  %v2618 = vmax.f32 %v1996, 0.0
  %v2619 = vmax.f32 %v2001, 0.0
  %v2620 = vmax.f32 %v2006, 0.0
  %v2621 = vmax.f32 %v2011, 0.0
  %v2622 = vmax.f32 %v2016, 0.0
  %v2623 = vmax.f32 %v2021, 0.0
  %v2624 = vmax.f32 %v2026, 0.0
  %v2625 = vmax.f32 %v2031, 0.0
  %v2626 = vmax.f32 %v2036, 0.0
  %v2627 = vmax.f32 %v2041, 0.0
  %v2628 = vmax.f32 %v2046, 0.0
  %v2629 = vmax.f32 %v2051, 0.0
  %v2630 = vmax.f32 %v2056, 0.0
  %v2631 = vmax.f32 %v2061, 0.0
  %v2632 = vmax.f32 %v2066, 0.0
  %v2633 = vmax.f32 %v2071, 0.0
  %v2634 = vmax.f32 %v2076, 0.0
  %v2635 = vmax.f32 %v2081, 0.0
  %v2636 = vmax.f32 %v2086, 0.0
  %v2637 = vmax.f32 %v2091, 0.0
  %v2638 = vmax.f32 %v2096, 0.0
  %v2639 = vmax.f32 %v2101, 0.0
  %v2640 = vmax.f32 %v2106, 0.0
  %v2641 = vmax.f32 %v2111, 0.0
  %v2642 = vmax.f32 %v2116, 0.0
  %v2643 = vmax.f32 %v2121, 0.0
  %v2644 = vmax.f32 %v2126, 0.0
  %v2645 = vmax.f32 %v2131, 0.0
  %v2646 = vmax.f32 %v2136, 0.0
  %v2647 = vmax.f32 %v2141, 0.0
  %v2648 = vmax.f32 %v2146, 0.0
  %v2649 = vmax.f32 %v2151, 0.0
  %v2650 = vmax.f32 %v2156, 0.0
  %v2651 = vmax.f32 %v2161, 0.0
  %v2652 = vmax.f32 %v2166, 0.0
  %v2653 = vmax.f32 %v2171, 0.0
  %v2654 = vmax.f32 %v2176, 0.0
  %v2655 = vmax.f32 %v2181, 0.0
  %v2656 = vmax.f32 %v2186, 0.0
  %v2657 = vmax.f32 %v2191, 0.0
  %v2658 = vmax.f32 %v2196, 0.0
  %v2659 = vmax.f32 %v2201, 0.0
  %v2660 = vmax.f32 %v2206, 0.0
  %v2661 = vmax.f32 %v2211, 0.0
  %v2662 = vmax.f32 %v2216, 0.0
  %v2663 = vmax.f32 %v2221, 0.0
  %v2664 = vmax.f32 %v2226, 0.0
  %v2665 = vmax.f32 %v2231, 0.0
  %v2666 = vmax.f32 %v2236, 0.0
  %v2667 = vmax.f32 %v2241, 0.0
  %v2668 = vmax.f32 %v2246, 0.0
  %v2669 = vmax.f32 %v2251, 0.0
  %v2670 = vmax.f32 %v2256, 0.0
  %v2671 = vmax.f32 %v2261, 0.0
  %v2672 = vmax.f32 %v2266, 0.0
  %v2673 = vmax.f32 %v2271, 0.0
  %v2674 = vmax.f32 %v2276, 0.0
  %v2675 = vmax.f32 %v2281, 0.0
  %v2676 = vmax.f32 %v2286, 0.0
  %v2677 = vmax.f32 %v2291, 0.0
  %v2678 = vmax.f32 %v2296, 0.0
  %v2679 = vmax.f32 %v2301, 0.0
  %v2680 = vmax.f32 %v2306, 0.0
  %v2681 = vmax.f32 %v2311, 0.0
  %v2682 = vmax.f32 %v2316, 0.0
  %v2683 = vmax.f32 %v2321, 0.0
  %v2684 = vmax.f32 %v2326, 0.0
  %v2685 = vmax.f32 %v2331, 0.0
  %v2686 = vmax.f32 %v2336, 0.0
  %v2687 = vmax.f32 %v2341, 0.0
  %v2688 = vmax.f32 %v2346, 0.0
  %v2689 = vmax.f32 %v2351, 0.0
  %v2690 = vmax.f32 %v2356, 0.0
  %v2691 = vmax.f32 %v2361, 0.0
  %v2692 = vmax.f32 %v2366, 0.0
  %v2693 = vmax.f32 %v2371, 0.0
  %v2694 = vmax.f32 %v2376, 0.0
  %v2695 = vmax.f32 %v2381, 0.0
  %v2696 = vmax.f32 %v2386, 0.0
  %v2697 = vmax.f32 %v2391, 0.0
  %v2698 = vmax.f32 %v2396, 0.0
  %v2699 = vmax.f32 %v2401, 0.0
  %v2700 = vmax.f32 %v2406, 0.0
  %v2701 = vmax.f32 %v2411, 0.0
  %v2702 = vmax.f32 %v2416, 0.0
  %v2703 = vmax.f32 %v2421, 0.0
  %v2704 = vmax.f32 %v2426, 0.0
  %v2705 = vmax.f32 %v2431, 0.0
  %v2706 = vmax.f32 %v2436, 0.0
  %v2707 = vmax.f32 %v2441, 0.0
  %v2708 = vmax.f32 %v2446, 0.0
  %v2709 = vmax.f32 %v2451, 0.0
  %v2710 = vmax.f32 %v2456, 0.0
  %v2711 = vmax.f32 %v2461, 0.0
  %v2712 = vmax.f32 %v2466, 0.0
  %v2713 = vmax.f32 %v2471, 0.0
  %v2714 = vmax.f32 %v2476, 0.0
  %v2715 = vmax.f32 %v2481, 0.0
  %v2716 = vmax.f32 %v2486, 0.0
  %v2717 = vmax.f32 %v2491, 0.0
  %v2718 = vmax.f32 %v2496, 0.0
  %v2719 = vmax.f32 %v2501, 0.0
  %v2720 = vmax.f32 %v2506, 0.0
  %v2721 = vmax.f32 %v2511, 0.0
  %v2722 = vmax.f32 %v2516, 0.0
  %v2723 = vmax.f32 %v2521, 0.0
  %v2724 = vmax.f32 %v2526, 0.0
  %v2725 = vmax.f32 %v2531, 0.0
  %v2726 = vmax.f32 %v2536, 0.0
  %v2727 = vmax.f32 %v2541, 0.0
  %v2728 = vmax.f32 %v2546, 0.0
  %v2729 = vmax.f32 %v2551, 0.0
  %v2730 = vmax.f32 %v2556, 0.0
  %v2731 = vmax.f32 %v2561, 0.0
  %v2732 = vmax.f32 %v2566, 0.0
  %v2733 = vmax.f32 %v2571, 0.0
  %v2734 = vmax.f32 %v2576, 0.0
  %v2735 = vmax.f32 %v2581, 0.0
  %v2736 = vmax.f32 %v2586, 0.0
  %v2737 = vmax.f32 %v2591, 0.0
  %v2738 = vmax.f32 %v2596, 0.0
  %v2739 = vmax.f32 %v2601, 0.0
  %v2740 = vmax.f32 %v2606, 0.0
  %v2741 = vmax.f32 %v2611, 0.0
  %v2742 = vld [vmem:[%s6] sm:$0xff]
  %v2743 = vld [vmem:[%s6 + $0x8] sm:$0xff]
  %v2744 = vld [vmem:[%s6 + $0x10] sm:$0xff]
  %v2745 = vld [vmem:[%s6 + $0x18] sm:$0xff]
  %v2746 = vld [vmem:[%s7] sm:$0xff]
  %v2747 = vld [vmem:[%s7 + $0x8] sm:$0xff]
  %v2748 = vld [vmem:[%s7 + $0x10] sm:$0xff]
  %v2749 = vld [vmem:[%s7 + $0x18] sm:$0xff]
  %v2751 = vsel %vm168, %v2614, 0
  %v2754 = vsel %vm168, %v2615, 0
  %v2757 = vsel %vm168, %v2616, 0
  %v2760 = vsel %vm168, %v2617, 0
  %v2763 = vsel %vm168, %v2618, 0
  %v2766 = vsel %vm168, %v2619, 0
  %v2769 = vsel %vm168, %v2620, 0
  %v2772 = vsel %vm168, %v2621, 0
  %v2775 = vsel %vm168, %v2622, 0
  %v2778 = vsel %vm168, %v2623, 0
  %v2781 = vsel %vm168, %v2624, 0
  %v2784 = vsel %vm168, %v2625, 0
  %v2787 = vsel %vm168, %v2626, 0
  %v2790 = vsel %vm168, %v2627, 0
  %v2793 = vsel %vm168, %v2628, 0
  %v2796 = vsel %vm168, %v2629, 0
  %v2799 = vsel %vm168, %v2630, 0
  %v2802 = vsel %vm168, %v2631, 0
  %v2805 = vsel %vm168, %v2632, 0
  %v2808 = vsel %vm168, %v2633, 0
  %v2811 = vsel %vm168, %v2634, 0
  %v2814 = vsel %vm168, %v2635, 0
  %v2817 = vsel %vm168, %v2636, 0
  %v2820 = vsel %vm168, %v2637, 0
  %v2823 = vsel %vm168, %v2638, 0
  %v2826 = vsel %vm168, %v2639, 0
  %v2829 = vsel %vm168, %v2640, 0
  %v2832 = vsel %vm168, %v2641, 0
  %v2835 = vsel %vm168, %v2642, 0
  %v2838 = vsel %vm168, %v2643, 0
  %v2841 = vsel %vm168, %v2644, 0
  %v2844 = vsel %vm168, %v2645, 0
  %v2847 = vsel %vm168, %v2646, 0
  %v2850 = vsel %vm168, %v2647, 0
  %v2853 = vsel %vm168, %v2648, 0
  %v2856 = vsel %vm168, %v2649, 0
  %v2859 = vsel %vm168, %v2650, 0
  %v2862 = vsel %vm168, %v2651, 0
  %v2865 = vsel %vm168, %v2652, 0
  %v2868 = vsel %vm168, %v2653, 0
  %v2871 = vsel %vm168, %v2654, 0
  %v2874 = vsel %vm168, %v2655, 0
  %v2877 = vsel %vm168, %v2656, 0
  %v2880 = vsel %vm168, %v2657, 0
  %v2883 = vsel %vm168, %v2658, 0
  %v2886 = vsel %vm168, %v2659, 0
  %v2889 = vsel %vm168, %v2660, 0
  %v2892 = vsel %vm168, %v2661, 0
  %v2895 = vsel %vm168, %v2662, 0
  %v2898 = vsel %vm168, %v2663, 0
  %v2901 = vsel %vm168, %v2664, 0
  %v2904 = vsel %vm168, %v2665, 0
  %v2907 = vsel %vm168, %v2666, 0
  %v2910 = vsel %vm168, %v2667, 0
  %v2913 = vsel %vm168, %v2668, 0
  %v2916 = vsel %vm168, %v2669, 0
  %v2919 = vsel %vm168, %v2670, 0
  %v2922 = vsel %vm168, %v2671, 0
  %v2925 = vsel %vm168, %v2672, 0
  %v2928 = vsel %vm168, %v2673, 0
  %v2931 = vsel %vm168, %v2674, 0
  %v2934 = vsel %vm168, %v2675, 0
  %v2937 = vsel %vm168, %v2676, 0
  %v2940 = vsel %vm168, %v2677, 0
  %v2943 = vsel %vm168, %v2678, 0
  %v2946 = vsel %vm168, %v2679, 0
  %v2949 = vsel %vm168, %v2680, 0
  %v2952 = vsel %vm168, %v2681, 0
  %v2955 = vsel %vm168, %v2682, 0
  %v2958 = vsel %vm168, %v2683, 0
  %v2961 = vsel %vm168, %v2684, 0
  %v2964 = vsel %vm168, %v2685, 0
  %v2967 = vsel %vm168, %v2686, 0
  %v2970 = vsel %vm168, %v2687, 0
  %v2973 = vsel %vm168, %v2688, 0
  %v2976 = vsel %vm168, %v2689, 0
  %v2979 = vsel %vm168, %v2690, 0
  %v2982 = vsel %vm168, %v2691, 0
  %v2985 = vsel %vm168, %v2692, 0
  %v2988 = vsel %vm168, %v2693, 0
  %v2991 = vsel %vm168, %v2694, 0
  %v2994 = vsel %vm168, %v2695, 0
  %v2997 = vsel %vm168, %v2696, 0
  %v3000 = vsel %vm168, %v2697, 0
  %v3003 = vsel %vm168, %v2698, 0
  %v3006 = vsel %vm168, %v2699, 0
  %v3009 = vsel %vm168, %v2700, 0
  %v3012 = vsel %vm168, %v2701, 0
  %v3015 = vsel %vm168, %v2702, 0
  %v3018 = vsel %vm168, %v2703, 0
  %v3021 = vsel %vm168, %v2704, 0
  %v3024 = vsel %vm168, %v2705, 0
  %v3027 = vsel %vm168, %v2706, 0
  %v3030 = vsel %vm168, %v2707, 0
  %v3033 = vsel %vm168, %v2708, 0
  %v3036 = vsel %vm168, %v2709, 0
  %v3039 = vsel %vm168, %v2710, 0
  %v3042 = vsel %vm168, %v2711, 0
  %v3045 = vsel %vm168, %v2712, 0
  %v3048 = vsel %vm168, %v2713, 0
  %v3051 = vsel %vm168, %v2714, 0
  %v3054 = vsel %vm168, %v2715, 0
  %v3057 = vsel %vm168, %v2716, 0
  %v3060 = vsel %vm168, %v2717, 0
  %v3063 = vsel %vm168, %v2718, 0
  %v3066 = vsel %vm168, %v2719, 0
  %v3069 = vsel %vm168, %v2720, 0
  %v3072 = vsel %vm168, %v2721, 0
  %v3075 = vsel %vm168, %v2722, 0
  %v3078 = vsel %vm168, %v2723, 0
  %v3081 = vsel %vm168, %v2724, 0
  %v3084 = vsel %vm168, %v2725, 0
  %v3087 = vsel %vm168, %v2726, 0
  %v3090 = vsel %vm168, %v2727, 0
  %v3093 = vsel %vm168, %v2728, 0
  %v3096 = vsel %vm168, %v2729, 0
  %v3099 = vsel %vm168, %v2730, 0
  %v3102 = vsel %vm168, %v2731, 0
  %v3105 = vsel %vm168, %v2732, 0
  %v3108 = vsel %vm168, %v2733, 0
  %v3111 = vsel %vm168, %v2734, 0
  %v3114 = vsel %vm168, %v2735, 0
  %v3117 = vsel %vm168, %v2736, 0
  %v3120 = vsel %vm168, %v2737, 0
  %v3123 = vsel %vm168, %v2738, 0
  %v3126 = vsel %vm168, %v2739, 0
  %v3129 = vsel %vm168, %v2740, 0
  %v3132 = vsel %vm168, %v2741, 0
  %3134 = vmatprep.subr.mxu0 0.0
  %3135 = vmatpush1.msra.mxu0 %v2746
  %3136 = vmatprep.subr.mxu0 0.0
  %3137 = vmatpush1.msra.mxu0 %v2747
  %3138 = vmatprep.subr.mxu0 0.0
  %3139 = vmatpush1.msra.mxu0 %v2748
  %3140 = vmatprep.subr.mxu0 0.0
  %3141 = vmatpush1.msra.mxu0 %v2749
  %3142 = vmatprep.subr.mxu0 0.0
  %3143 = vmatpush1.msra.mxu0 0.0
  %3144 = vmatprep.subr.mxu0 0.0
  %3145 = vmatpush1.msra.mxu0 0.0
  %3146 = vmatprep.subr.mxu0 0.0
  %3147 = vmatpush1.msra.mxu0 0.0
  %3148 = vmatprep.subr.mxu0 0.0
  %3149 = vmatpush1.msra.mxu0 0.0
  %3150 = vmatprep.subr.mxu0 0.0
  %3151 = vmatpush1.msra.mxu0 0.0
  %3152 = vmatprep.subr.mxu0 0.0
  %3153 = vmatpush1.msra.mxu0 0.0
  %3154 = vmatprep.subr.mxu0 0.0
  %3155 = vmatpush1.msra.mxu0 0.0
  %3156 = vmatprep.subr.mxu0 0.0
  %3157 = vmatpush1.msra.mxu0 0.0
  %3158 = vmatprep.subr.mxu0 0.0
  %3159 = vmatpush1.msra.mxu0 0.0
  %3160 = vmatprep.subr.mxu0 0.0
  %3161 = vmatpush1.msra.mxu0 0.0
  %3162 = vmatprep.subr.mxu0 0.0
  %3163 = vmatpush1.msra.mxu0 0.0
  %3164 = vmatprep.subr.mxu0 0.0
  %3165 = vmatpush1.msra.mxu0 0.0
  %3166 = vmatprep.subr.mxu0 0.0
  %3167 = vmatpush1.msra.mxu0 0.0
  %3168 = vmatprep.subr.mxu0 0.0
  %3169 = vmatpush1.msra.mxu0 0.0
  %3170 = vmatprep.subr.mxu0 0.0
  %3171 = vmatpush1.msra.mxu0 0.0
  %3172 = vmatprep.subr.mxu0 0.0
  %3173 = vmatpush1.msra.mxu0 0.0
  %3174 = vmatprep.subr.mxu0 0.0
  %3175 = vmatpush1.msra.mxu0 0.0
  %3176 = vmatprep.subr.mxu0 0.0
  %3177 = vmatpush1.msra.mxu0 0.0
  %3178 = vmatprep.subr.mxu0 0.0
  %3179 = vmatpush1.msra.mxu0 0.0
  %3180 = vmatprep.subr.mxu0 0.0
  %3181 = vmatpush1.msra.mxu0 0.0
  %3182 = vmatprep.subr.mxu0 0.0
  %3183 = vmatpush1.msra.mxu0 0.0
  %3184 = vmatprep.subr.mxu0 0.0
  %3185 = vmatpush1.msra.mxu0 0.0
  %3186 = vmatprep.subr.mxu0 0.0
  %3187 = vmatpush1.msra.mxu0 0.0
  %3188 = vmatprep.subr.mxu0 0.0
  %3189 = vmatpush1.msra.mxu0 0.0
  %3190 = vmatprep.subr.mxu0 0.0
  %3191 = vmatpush1.msra.mxu0 0.0
  %3192 = vmatprep.subr.mxu0 0.0
  %3193 = vmatpush1.msra.mxu0 0.0
  %3194 = vmatprep.subr.mxu0 0.0
  %3195 = vmatpush1.msra.mxu0 0.0
  %3196 = vmatprep.subr.mxu0 0.0
  %3197 = vmatpush1.msra.mxu0 0.0
  %3198 = vmatprep.mubr.f32.mxu0 0.0
  %3199 = vmatmul.mubr.f32.gmra.mrb[0].mxu0 %v2751
  %v3200 = vpop.f32.mrb[0].mxu0
  %v3201 = vadd.f32 0.0, %v3200
  %v3202 = vpop.f32.mrb[0].mxu0
  %3203 = vmatprep.mubr.f32.mxu0 0.0
  %3204 = vmatmul.mubr.f32.gmra.mrb[0].mxu0 %v2754
  %v3205 = vpop.f32.mrb[0].mxu0
  %v3206 = vadd.f32 0.0, %v3205
  %v3207 = vpop.f32.mrb[0].mxu0
  %3208 = vmatprep.mubr.f32.mxu0 0.0
  %3209 = vmatmul.mubr.f32.gmra.mrb[0].mxu0 %v2757
  %v3210 = vpop.f32.mrb[0].mxu0
  %v3211 = vadd.f32 0.0, %v3210
  %v3212 = vpop.f32.mrb[0].mxu0
  %3213 = vmatprep.mubr.f32.mxu0 0.0
  %3214 = vmatmul.mubr.f32.gmra.mrb[0].mxu0 %v2760
  %v3215 = vpop.f32.mrb[0].mxu0
  %v3216 = vadd.f32 0.0, %v3215
  %v3217 = vpop.f32.mrb[0].mxu0
  %3218 = vmatprep.mubr.f32.mxu0 0.0
  %3219 = vmatmul.mubr.f32.gmra.mrb[0].mxu0 %v2763
  %v3220 = vpop.f32.mrb[0].mxu0
  %v3221 = vadd.f32 0.0, %v3220
  %v3222 = vpop.f32.mrb[0].mxu0
  %3223 = vmatprep.mubr.f32.mxu0 0.0
  %3224 = vmatmul.mubr.f32.gmra.mrb[0].mxu0 %v2766
  %v3225 = vpop.f32.mrb[0].mxu0
  %v3226 = vadd.f32 0.0, %v3225
  %v3227 = vpop.f32.mrb[0].mxu0
  %3228 = vmatprep.mubr.f32.mxu0 0.0
  %3229 = vmatmul.mubr.f32.gmra.mrb[0].mxu0 %v2769
  %v3230 = vpop.f32.mrb[0].mxu0
  %v3231 = vadd.f32 0.0, %v3230
  %v3232 = vpop.f32.mrb[0].mxu0
  %3233 = vmatprep.mubr.f32.mxu0 0.0
  %3234 = vmatmul.mubr.f32.gmra.mrb[0].mxu0 %v2772
  %v3235 = vpop.f32.mrb[0].mxu0
  %v3236 = vadd.f32 0.0, %v3235
  %v3237 = vpop.f32.mrb[0].mxu0
  %3238 = vmatprep.mubr.f32.mxu0 0.0
  %3239 = vmatmul.mubr.f32.gmra.mrb[0].mxu0 %v2775
  %v3240 = vpop.f32.mrb[0].mxu0
  %v3241 = vadd.f32 0.0, %v3240
  %v3242 = vpop.f32.mrb[0].mxu0
  %3243 = vmatprep.mubr.f32.mxu0 0.0
  %3244 = vmatmul.mubr.f32.gmra.mrb[0].mxu0 %v2778
  %v3245 = vpop.f32.mrb[0].mxu0
  %v3246 = vadd.f32 0.0, %v3245
  %v3247 = vpop.f32.mrb[0].mxu0
  %3248 = vmatprep.mubr.f32.mxu0 0.0
  %3249 = vmatmul.mubr.f32.gmra.mrb[0].mxu0 %v2781
  %v3250 = vpop.f32.mrb[0].mxu0
  %v3251 = vadd.f32 0.0, %v3250
  %v3252 = vpop.f32.mrb[0].mxu0
  %3253 = vmatprep.mubr.f32.mxu0 0.0
  %3254 = vmatmul.mubr.f32.gmra.mrb[0].mxu0 %v2784
  %v3255 = vpop.f32.mrb[0].mxu0
  %v3256 = vadd.f32 0.0, %v3255
  %v3257 = vpop.f32.mrb[0].mxu0
  %3258 = vmatprep.mubr.f32.mxu0 0.0
  %3259 = vmatmul.mubr.f32.gmra.mrb[0].mxu0 %v2787
  %v3260 = vpop.f32.mrb[0].mxu0
  %v3261 = vadd.f32 0.0, %v3260
  %v3262 = vpop.f32.mrb[0].mxu0
  %3263 = vmatprep.mubr.f32.mxu0 0.0
  %3264 = vmatmul.mubr.f32.gmra.mrb[0].mxu0 %v2790
  %v3265 = vpop.f32.mrb[0].mxu0
  %v3266 = vadd.f32 0.0, %v3265
  %v3267 = vpop.f32.mrb[0].mxu0
  %3268 = vmatprep.mubr.f32.mxu0 0.0
  %3269 = vmatmul.mubr.f32.gmra.mrb[0].mxu0 %v2793
  %v3270 = vpop.f32.mrb[0].mxu0
  %v3271 = vadd.f32 0.0, %v3270
  %v3272 = vpop.f32.mrb[0].mxu0
  %3273 = vmatprep.mubr.f32.mxu0 0.0
  %3274 = vmatmul.mubr.f32.gmra.mrb[0].mxu0 %v2796
  %v3275 = vpop.f32.mrb[0].mxu0
  %v3276 = vadd.f32 0.0, %v3275
  %v3277 = vpop.f32.mrb[0].mxu0
  %3278 = vmatprep.mubr.f32.mxu0 0.0
  %3279 = vmatmul.mubr.f32.gmra.mrb[0].mxu0 %v2799
  %v3280 = vpop.f32.mrb[0].mxu0
  %v3281 = vadd.f32 0.0, %v3280
  %v3282 = vpop.f32.mrb[0].mxu0
  %3283 = vmatprep.mubr.f32.mxu0 0.0
  %3284 = vmatmul.mubr.f32.gmra.mrb[0].mxu0 %v2802
  %v3285 = vpop.f32.mrb[0].mxu0
  %v3286 = vadd.f32 0.0, %v3285
  %v3287 = vpop.f32.mrb[0].mxu0
  %3288 = vmatprep.mubr.f32.mxu0 0.0
  %3289 = vmatmul.mubr.f32.gmra.mrb[0].mxu0 %v2805
  %v3290 = vpop.f32.mrb[0].mxu0
  %v3291 = vadd.f32 0.0, %v3290
  %v3292 = vpop.f32.mrb[0].mxu0
  %3293 = vmatprep.mubr.f32.mxu0 0.0
  %3294 = vmatmul.mubr.f32.gmra.mrb[0].mxu0 %v2808
  %v3295 = vpop.f32.mrb[0].mxu0
  %v3296 = vadd.f32 0.0, %v3295
  %v3297 = vpop.f32.mrb[0].mxu0
  %3298 = vmatprep.mubr.f32.mxu0 0.0
  %3299 = vmatmul.mubr.f32.gmra.mrb[0].mxu0 %v2811
  %v3300 = vpop.f32.mrb[0].mxu0
  %v3301 = vadd.f32 0.0, %v3300
  %v3302 = vpop.f32.mrb[0].mxu0
  %3303 = vmatprep.mubr.f32.mxu0 0.0
  %3304 = vmatmul.mubr.f32.gmra.mrb[0].mxu0 %v2814
  %v3305 = vpop.f32.mrb[0].mxu0
  %v3306 = vadd.f32 0.0, %v3305
  %v3307 = vpop.f32.mrb[0].mxu0
  %3308 = vmatprep.mubr.f32.mxu0 0.0
  %3309 = vmatmul.mubr.f32.gmra.mrb[0].mxu0 %v2817
  %v3310 = vpop.f32.mrb[0].mxu0
  %v3311 = vadd.f32 0.0, %v3310
  %v3312 = vpop.f32.mrb[0].mxu0
  %3313 = vmatprep.mubr.f32.mxu0 0.0
  %3314 = vmatmul.mubr.f32.gmra.mrb[0].mxu0 %v2820
  %v3315 = vpop.f32.mrb[0].mxu0
  %v3316 = vadd.f32 0.0, %v3315
  %v3317 = vpop.f32.mrb[0].mxu0
  %3318 = vmatprep.mubr.f32.mxu0 0.0
  %3319 = vmatmul.mubr.f32.gmra.mrb[0].mxu0 %v2823
  %v3320 = vpop.f32.mrb[0].mxu0
  %v3321 = vadd.f32 0.0, %v3320
  %v3322 = vpop.f32.mrb[0].mxu0
  %3323 = vmatprep.mubr.f32.mxu0 0.0
  %3324 = vmatmul.mubr.f32.gmra.mrb[0].mxu0 %v2826
  %v3325 = vpop.f32.mrb[0].mxu0
  %v3326 = vadd.f32 0.0, %v3325
  %v3327 = vpop.f32.mrb[0].mxu0
  %3328 = vmatprep.mubr.f32.mxu0 0.0
  %3329 = vmatmul.mubr.f32.gmra.mrb[0].mxu0 %v2829
  %v3330 = vpop.f32.mrb[0].mxu0
  %v3331 = vadd.f32 0.0, %v3330
  %v3332 = vpop.f32.mrb[0].mxu0
  %3333 = vmatprep.mubr.f32.mxu0 0.0
  %3334 = vmatmul.mubr.f32.gmra.mrb[0].mxu0 %v2832
  %v3335 = vpop.f32.mrb[0].mxu0
  %v3336 = vadd.f32 0.0, %v3335
  %v3337 = vpop.f32.mrb[0].mxu0
  %3338 = vmatprep.mubr.f32.mxu0 0.0
  %3339 = vmatmul.mubr.f32.gmra.mrb[0].mxu0 %v2835
  %v3340 = vpop.f32.mrb[0].mxu0
  %v3341 = vadd.f32 0.0, %v3340
  %v3342 = vpop.f32.mrb[0].mxu0
  %3343 = vmatprep.mubr.f32.mxu0 0.0
  %3344 = vmatmul.mubr.f32.gmra.mrb[0].mxu0 %v2838
  %v3345 = vpop.f32.mrb[0].mxu0
  %v3346 = vadd.f32 0.0, %v3345
  %v3347 = vpop.f32.mrb[0].mxu0
  %3348 = vmatprep.mubr.f32.mxu0 0.0
  %3349 = vmatmul.mubr.f32.gmra.mrb[0].mxu0 %v2841
  %v3350 = vpop.f32.mrb[0].mxu0
  %v3351 = vadd.f32 0.0, %v3350
  %v3352 = vpop.f32.mrb[0].mxu0
  %3353 = vmatprep.mubr.f32.mxu0 0.0
  %3354 = vmatmul.mubr.f32.gmra.mrb[0].mxu0 %v2844
  %v3355 = vpop.f32.mrb[0].mxu0
  %v3356 = vadd.f32 0.0, %v3355
  %v3357 = vpop.f32.mrb[0].mxu0
  %3358 = vmatprep.mubr.f32.mxu0 0.0
  %3359 = vmatmul.mubr.f32.gmra.mrb[0].mxu0 %v2847
  %v3360 = vpop.f32.mrb[0].mxu0
  %v3361 = vadd.f32 0.0, %v3360
  %v3362 = vpop.f32.mrb[0].mxu0
  %3363 = vmatprep.mubr.f32.mxu0 0.0
  %3364 = vmatmul.mubr.f32.gmra.mrb[0].mxu0 %v2850
  %v3365 = vpop.f32.mrb[0].mxu0
  %v3366 = vadd.f32 0.0, %v3365
  %v3367 = vpop.f32.mrb[0].mxu0
  %3368 = vmatprep.mubr.f32.mxu0 0.0
  %3369 = vmatmul.mubr.f32.gmra.mrb[0].mxu0 %v2853
  %v3370 = vpop.f32.mrb[0].mxu0
  %v3371 = vadd.f32 0.0, %v3370
  %v3372 = vpop.f32.mrb[0].mxu0
  %3373 = vmatprep.mubr.f32.mxu0 0.0
  %3374 = vmatmul.mubr.f32.gmra.mrb[0].mxu0 %v2856
  %v3375 = vpop.f32.mrb[0].mxu0
  %v3376 = vadd.f32 0.0, %v3375
  %v3377 = vpop.f32.mrb[0].mxu0
  %3378 = vmatprep.mubr.f32.mxu0 0.0
  %3379 = vmatmul.mubr.f32.gmra.mrb[0].mxu0 %v2859
  %v3380 = vpop.f32.mrb[0].mxu0
  %v3381 = vadd.f32 0.0, %v3380
  %v3382 = vpop.f32.mrb[0].mxu0
  %3383 = vmatprep.mubr.f32.mxu0 0.0
  %3384 = vmatmul.mubr.f32.gmra.mrb[0].mxu0 %v2862
  %v3385 = vpop.f32.mrb[0].mxu0
  %v3386 = vadd.f32 0.0, %v3385
  %v3387 = vpop.f32.mrb[0].mxu0
  %3388 = vmatprep.mubr.f32.mxu0 0.0
  %3389 = vmatmul.mubr.f32.gmra.mrb[0].mxu0 %v2865
  %v3390 = vpop.f32.mrb[0].mxu0
  %v3391 = vadd.f32 0.0, %v3390
  %v3392 = vpop.f32.mrb[0].mxu0
  %3393 = vmatprep.mubr.f32.mxu0 0.0
  %3394 = vmatmul.mubr.f32.gmra.mrb[0].mxu0 %v2868
  %v3395 = vpop.f32.mrb[0].mxu0
  %v3396 = vadd.f32 0.0, %v3395
  %v3397 = vpop.f32.mrb[0].mxu0
  %3398 = vmatprep.mubr.f32.mxu0 0.0
  %3399 = vmatmul.mubr.f32.gmra.mrb[0].mxu0 %v2871
  %v3400 = vpop.f32.mrb[0].mxu0
  %v3401 = vadd.f32 0.0, %v3400
  %v3402 = vpop.f32.mrb[0].mxu0
  %3403 = vmatprep.mubr.f32.mxu0 0.0
  %3404 = vmatmul.mubr.f32.gmra.mrb[0].mxu0 %v2874
  %v3405 = vpop.f32.mrb[0].mxu0
  %v3406 = vadd.f32 0.0, %v3405
  %v3407 = vpop.f32.mrb[0].mxu0
  %3408 = vmatprep.mubr.f32.mxu0 0.0
  %3409 = vmatmul.mubr.f32.gmra.mrb[0].mxu0 %v2877
  %v3410 = vpop.f32.mrb[0].mxu0
  %v3411 = vadd.f32 0.0, %v3410
  %v3412 = vpop.f32.mrb[0].mxu0
  %3413 = vmatprep.mubr.f32.mxu0 0.0
  %3414 = vmatmul.mubr.f32.gmra.mrb[0].mxu0 %v2880
  %v3415 = vpop.f32.mrb[0].mxu0
  %v3416 = vadd.f32 0.0, %v3415
  %v3417 = vpop.f32.mrb[0].mxu0
  %3418 = vmatprep.mubr.f32.mxu0 0.0
  %3419 = vmatmul.mubr.f32.gmra.mrb[0].mxu0 %v2883
  %v3420 = vpop.f32.mrb[0].mxu0
  %v3421 = vadd.f32 0.0, %v3420
  %v3422 = vpop.f32.mrb[0].mxu0
  %3423 = vmatprep.mubr.f32.mxu0 0.0
  %3424 = vmatmul.mubr.f32.gmra.mrb[0].mxu0 %v2886
  %v3425 = vpop.f32.mrb[0].mxu0
  %v3426 = vadd.f32 0.0, %v3425
  %v3427 = vpop.f32.mrb[0].mxu0
  %3428 = vmatprep.mubr.f32.mxu0 0.0
  %3429 = vmatmul.mubr.f32.gmra.mrb[0].mxu0 %v2889
  %v3430 = vpop.f32.mrb[0].mxu0
  %v3431 = vadd.f32 0.0, %v3430
  %v3432 = vpop.f32.mrb[0].mxu0
  %3433 = vmatprep.mubr.f32.mxu0 0.0
  %3434 = vmatmul.mubr.f32.gmra.mrb[0].mxu0 %v2892
  %v3435 = vpop.f32.mrb[0].mxu0
  %v3436 = vadd.f32 0.0, %v3435
  %v3437 = vpop.f32.mrb[0].mxu0
  %3438 = vmatprep.mubr.f32.mxu0 0.0
  %3439 = vmatmul.mubr.f32.gmra.mrb[0].mxu0 %v2895
  %v3440 = vpop.f32.mrb[0].mxu0
  %v3441 = vadd.f32 0.0, %v3440
  %v3442 = vpop.f32.mrb[0].mxu0
  %3443 = vmatprep.mubr.f32.mxu0 0.0
  %3444 = vmatmul.mubr.f32.gmra.mrb[0].mxu0 %v2898
  %v3445 = vpop.f32.mrb[0].mxu0
  %v3446 = vadd.f32 0.0, %v3445
  %v3447 = vpop.f32.mrb[0].mxu0
  %3448 = vmatprep.mubr.f32.mxu0 0.0
  %3449 = vmatmul.mubr.f32.gmra.mrb[0].mxu0 %v2901
  %v3450 = vpop.f32.mrb[0].mxu0
  %v3451 = vadd.f32 0.0, %v3450
  %v3452 = vpop.f32.mrb[0].mxu0
  %3453 = vmatprep.mubr.f32.mxu0 0.0
  %3454 = vmatmul.mubr.f32.gmra.mrb[0].mxu0 %v2904
  %v3455 = vpop.f32.mrb[0].mxu0
  %v3456 = vadd.f32 0.0, %v3455
  %v3457 = vpop.f32.mrb[0].mxu0
  %3458 = vmatprep.mubr.f32.mxu0 0.0
  %3459 = vmatmul.mubr.f32.gmra.mrb[0].mxu0 %v2907
  %v3460 = vpop.f32.mrb[0].mxu0
  %v3461 = vadd.f32 0.0, %v3460
  %v3462 = vpop.f32.mrb[0].mxu0
  %3463 = vmatprep.mubr.f32.mxu0 0.0
  %3464 = vmatmul.mubr.f32.gmra.mrb[0].mxu0 %v2910
  %v3465 = vpop.f32.mrb[0].mxu0
  %v3466 = vadd.f32 0.0, %v3465
  %v3467 = vpop.f32.mrb[0].mxu0
  %3468 = vmatprep.mubr.f32.mxu0 0.0
  %3469 = vmatmul.mubr.f32.gmra.mrb[0].mxu0 %v2913
  %v3470 = vpop.f32.mrb[0].mxu0
  %v3471 = vadd.f32 0.0, %v3470
  %v3472 = vpop.f32.mrb[0].mxu0
  %3473 = vmatprep.mubr.f32.mxu0 0.0
  %3474 = vmatmul.mubr.f32.gmra.mrb[0].mxu0 %v2916
  %v3475 = vpop.f32.mrb[0].mxu0
  %v3476 = vadd.f32 0.0, %v3475
  %v3477 = vpop.f32.mrb[0].mxu0
  %3478 = vmatprep.mubr.f32.mxu0 0.0
  %3479 = vmatmul.mubr.f32.gmra.mrb[0].mxu0 %v2919
  %v3480 = vpop.f32.mrb[0].mxu0
  %v3481 = vadd.f32 0.0, %v3480
  %v3482 = vpop.f32.mrb[0].mxu0
  %3483 = vmatprep.mubr.f32.mxu0 0.0
  %3484 = vmatmul.mubr.f32.gmra.mrb[0].mxu0 %v2922
  %v3485 = vpop.f32.mrb[0].mxu0
  %v3486 = vadd.f32 0.0, %v3485
  %v3487 = vpop.f32.mrb[0].mxu0
  %3488 = vmatprep.mubr.f32.mxu0 0.0
  %3489 = vmatmul.mubr.f32.gmra.mrb[0].mxu0 %v2925
  %v3490 = vpop.f32.mrb[0].mxu0
  %v3491 = vadd.f32 0.0, %v3490
  %v3492 = vpop.f32.mrb[0].mxu0
  %3493 = vmatprep.mubr.f32.mxu0 0.0
  %3494 = vmatmul.mubr.f32.gmra.mrb[0].mxu0 %v2928
  %v3495 = vpop.f32.mrb[0].mxu0
  %v3496 = vadd.f32 0.0, %v3495
  %v3497 = vpop.f32.mrb[0].mxu0
  %3498 = vmatprep.mubr.f32.mxu0 0.0
  %3499 = vmatmul.mubr.f32.gmra.mrb[0].mxu0 %v2931
  %v3500 = vpop.f32.mrb[0].mxu0
  %v3501 = vadd.f32 0.0, %v3500
  %v3502 = vpop.f32.mrb[0].mxu0
  %3503 = vmatprep.mubr.f32.mxu0 0.0
  %3504 = vmatmul.mubr.f32.gmra.mrb[0].mxu0 %v2934
  %v3505 = vpop.f32.mrb[0].mxu0
  %v3506 = vadd.f32 0.0, %v3505
  %v3507 = vpop.f32.mrb[0].mxu0
  %3508 = vmatprep.mubr.f32.mxu0 0.0
  %3509 = vmatmul.mubr.f32.gmra.mrb[0].mxu0 %v2937
  %v3510 = vpop.f32.mrb[0].mxu0
  %v3511 = vadd.f32 0.0, %v3510
  %v3512 = vpop.f32.mrb[0].mxu0
  %3513 = vmatprep.mubr.f32.mxu0 0.0
  %3514 = vmatmul.mubr.f32.gmra.mrb[0].mxu0 %v2940
  %v3515 = vpop.f32.mrb[0].mxu0
  %v3516 = vadd.f32 0.0, %v3515
  %v3517 = vpop.f32.mrb[0].mxu0
  %3518 = vmatprep.mubr.f32.mxu0 0.0
  %3519 = vmatmul.mubr.f32.gmra.mrb[0].mxu0 %v2943
  %v3520 = vpop.f32.mrb[0].mxu0
  %v3521 = vadd.f32 0.0, %v3520
  %v3522 = vpop.f32.mrb[0].mxu0
  %3523 = vmatprep.mubr.f32.mxu0 0.0
  %3524 = vmatmul.mubr.f32.gmra.mrb[0].mxu0 %v2946
  %v3525 = vpop.f32.mrb[0].mxu0
  %v3526 = vadd.f32 0.0, %v3525
  %v3527 = vpop.f32.mrb[0].mxu0
  %3528 = vmatprep.mubr.f32.mxu0 0.0
  %3529 = vmatmul.mubr.f32.gmra.mrb[0].mxu0 %v2949
  %v3530 = vpop.f32.mrb[0].mxu0
  %v3531 = vadd.f32 0.0, %v3530
  %v3532 = vpop.f32.mrb[0].mxu0
  %3533 = vmatprep.mubr.f32.mxu0 0.0
  %3534 = vmatmul.mubr.f32.gmra.mrb[0].mxu0 %v2952
  %v3535 = vpop.f32.mrb[0].mxu0
  %v3536 = vadd.f32 0.0, %v3535
  %v3537 = vpop.f32.mrb[0].mxu0
  %3538 = vmatprep.mubr.f32.mxu0 0.0
  %3539 = vmatmul.mubr.f32.gmra.mrb[0].mxu0 %v2955
  %v3540 = vpop.f32.mrb[0].mxu0
  %v3541 = vadd.f32 0.0, %v3540
  %v3542 = vpop.f32.mrb[0].mxu0
  %3543 = vmatprep.mubr.f32.mxu0 0.0
  %3544 = vmatmul.mubr.f32.gmra.mrb[0].mxu0 %v2958
  %v3545 = vpop.f32.mrb[0].mxu0
  %v3546 = vadd.f32 0.0, %v3545
  %v3547 = vpop.f32.mrb[0].mxu0
  %3548 = vmatprep.mubr.f32.mxu0 0.0
  %3549 = vmatmul.mubr.f32.gmra.mrb[0].mxu0 %v2961
  %v3550 = vpop.f32.mrb[0].mxu0
  %v3551 = vadd.f32 0.0, %v3550
  %v3552 = vpop.f32.mrb[0].mxu0
  %3553 = vmatprep.mubr.f32.mxu0 0.0
  %3554 = vmatmul.mubr.f32.gmra.mrb[0].mxu0 %v2964
  %v3555 = vpop.f32.mrb[0].mxu0
  %v3556 = vadd.f32 0.0, %v3555
  %v3557 = vpop.f32.mrb[0].mxu0
  %3558 = vmatprep.mubr.f32.mxu0 0.0
  %3559 = vmatmul.mubr.f32.gmra.mrb[0].mxu0 %v2967
  %v3560 = vpop.f32.mrb[0].mxu0
  %v3561 = vadd.f32 0.0, %v3560
  %v3562 = vpop.f32.mrb[0].mxu0
  %3563 = vmatprep.mubr.f32.mxu0 0.0
  %3564 = vmatmul.mubr.f32.gmra.mrb[0].mxu0 %v2970
  %v3565 = vpop.f32.mrb[0].mxu0
  %v3566 = vadd.f32 0.0, %v3565
  %v3567 = vpop.f32.mrb[0].mxu0
  %3568 = vmatprep.mubr.f32.mxu0 0.0
  %3569 = vmatmul.mubr.f32.gmra.mrb[0].mxu0 %v2973
  %v3570 = vpop.f32.mrb[0].mxu0
  %v3571 = vadd.f32 0.0, %v3570
  %v3572 = vpop.f32.mrb[0].mxu0
  %3573 = vmatprep.mubr.f32.mxu0 0.0
  %3574 = vmatmul.mubr.f32.gmra.mrb[0].mxu0 %v2976
  %v3575 = vpop.f32.mrb[0].mxu0
  %v3576 = vadd.f32 0.0, %v3575
  %v3577 = vpop.f32.mrb[0].mxu0
  %3578 = vmatprep.mubr.f32.mxu0 0.0
  %3579 = vmatmul.mubr.f32.gmra.mrb[0].mxu0 %v2979
  %v3580 = vpop.f32.mrb[0].mxu0
  %v3581 = vadd.f32 0.0, %v3580
  %v3582 = vpop.f32.mrb[0].mxu0
  %3583 = vmatprep.mubr.f32.mxu0 0.0
  %3584 = vmatmul.mubr.f32.gmra.mrb[0].mxu0 %v2982
  %v3585 = vpop.f32.mrb[0].mxu0
  %v3586 = vadd.f32 0.0, %v3585
  %v3587 = vpop.f32.mrb[0].mxu0
  %3588 = vmatprep.mubr.f32.mxu0 0.0
  %3589 = vmatmul.mubr.f32.gmra.mrb[0].mxu0 %v2985
  %v3590 = vpop.f32.mrb[0].mxu0
  %v3591 = vadd.f32 0.0, %v3590
  %v3592 = vpop.f32.mrb[0].mxu0
  %3593 = vmatprep.mubr.f32.mxu0 0.0
  %3594 = vmatmul.mubr.f32.gmra.mrb[0].mxu0 %v2988
  %v3595 = vpop.f32.mrb[0].mxu0
  %v3596 = vadd.f32 0.0, %v3595
  %v3597 = vpop.f32.mrb[0].mxu0
  %3598 = vmatprep.mubr.f32.mxu0 0.0
  %3599 = vmatmul.mubr.f32.gmra.mrb[0].mxu0 %v2991
  %v3600 = vpop.f32.mrb[0].mxu0
  %v3601 = vadd.f32 0.0, %v3600
  %v3602 = vpop.f32.mrb[0].mxu0
  %3603 = vmatprep.mubr.f32.mxu0 0.0
  %3604 = vmatmul.mubr.f32.gmra.mrb[0].mxu0 %v2994
  %v3605 = vpop.f32.mrb[0].mxu0
  %v3606 = vadd.f32 0.0, %v3605
  %v3607 = vpop.f32.mrb[0].mxu0
  %3608 = vmatprep.mubr.f32.mxu0 0.0
  %3609 = vmatmul.mubr.f32.gmra.mrb[0].mxu0 %v2997
  %v3610 = vpop.f32.mrb[0].mxu0
  %v3611 = vadd.f32 0.0, %v3610
  %v3612 = vpop.f32.mrb[0].mxu0
  %3613 = vmatprep.mubr.f32.mxu0 0.0
  %3614 = vmatmul.mubr.f32.gmra.mrb[0].mxu0 %v3000
  %v3615 = vpop.f32.mrb[0].mxu0
  %v3616 = vadd.f32 0.0, %v3615
  %v3617 = vpop.f32.mrb[0].mxu0
  %3618 = vmatprep.mubr.f32.mxu0 0.0
  %3619 = vmatmul.mubr.f32.gmra.mrb[0].mxu0 %v3003
  %v3620 = vpop.f32.mrb[0].mxu0
  %v3621 = vadd.f32 0.0, %v3620
  %v3622 = vpop.f32.mrb[0].mxu0
  %3623 = vmatprep.mubr.f32.mxu0 0.0
  %3624 = vmatmul.mubr.f32.gmra.mrb[0].mxu0 %v3006
  %v3625 = vpop.f32.mrb[0].mxu0
  %v3626 = vadd.f32 0.0, %v3625
  %v3627 = vpop.f32.mrb[0].mxu0
  %3628 = vmatprep.mubr.f32.mxu0 0.0
  %3629 = vmatmul.mubr.f32.gmra.mrb[0].mxu0 %v3009
  %v3630 = vpop.f32.mrb[0].mxu0
  %v3631 = vadd.f32 0.0, %v3630
  %v3632 = vpop.f32.mrb[0].mxu0
  %3633 = vmatprep.mubr.f32.mxu0 0.0
  %3634 = vmatmul.mubr.f32.gmra.mrb[0].mxu0 %v3012
  %v3635 = vpop.f32.mrb[0].mxu0
  %v3636 = vadd.f32 0.0, %v3635
  %v3637 = vpop.f32.mrb[0].mxu0
  %3638 = vmatprep.mubr.f32.mxu0 0.0
  %3639 = vmatmul.mubr.f32.gmra.mrb[0].mxu0 %v3015
  %v3640 = vpop.f32.mrb[0].mxu0
  %v3641 = vadd.f32 0.0, %v3640
  %v3642 = vpop.f32.mrb[0].mxu0
  %3643 = vmatprep.mubr.f32.mxu0 0.0
  %3644 = vmatmul.mubr.f32.gmra.mrb[0].mxu0 %v3018
  %v3645 = vpop.f32.mrb[0].mxu0
  %v3646 = vadd.f32 0.0, %v3645
  %v3647 = vpop.f32.mrb[0].mxu0
  %3648 = vmatprep.mubr.f32.mxu0 0.0
  %3649 = vmatmul.mubr.f32.gmra.mrb[0].mxu0 %v3021
  %v3650 = vpop.f32.mrb[0].mxu0
  %v3651 = vadd.f32 0.0, %v3650
  %v3652 = vpop.f32.mrb[0].mxu0
  %3653 = vmatprep.mubr.f32.mxu0 0.0
  %3654 = vmatmul.mubr.f32.gmra.mrb[0].mxu0 %v3024
  %v3655 = vpop.f32.mrb[0].mxu0
  %v3656 = vadd.f32 0.0, %v3655
  %v3657 = vpop.f32.mrb[0].mxu0
  %3658 = vmatprep.mubr.f32.mxu0 0.0
  %3659 = vmatmul.mubr.f32.gmra.mrb[0].mxu0 %v3027
  %v3660 = vpop.f32.mrb[0].mxu0
  %v3661 = vadd.f32 0.0, %v3660
  %v3662 = vpop.f32.mrb[0].mxu0
  %3663 = vmatprep.mubr.f32.mxu0 0.0
  %3664 = vmatmul.mubr.f32.gmra.mrb[0].mxu0 %v3030
  %v3665 = vpop.f32.mrb[0].mxu0
  %v3666 = vadd.f32 0.0, %v3665
  %v3667 = vpop.f32.mrb[0].mxu0
  %3668 = vmatprep.mubr.f32.mxu0 0.0
  %3669 = vmatmul.mubr.f32.gmra.mrb[0].mxu0 %v3033
  %v3670 = vpop.f32.mrb[0].mxu0
  %v3671 = vadd.f32 0.0, %v3670
  %v3672 = vpop.f32.mrb[0].mxu0
  %3673 = vmatprep.mubr.f32.mxu0 0.0
  %3674 = vmatmul.mubr.f32.gmra.mrb[0].mxu0 %v3036
  %v3675 = vpop.f32.mrb[0].mxu0
  %v3676 = vadd.f32 0.0, %v3675
  %v3677 = vpop.f32.mrb[0].mxu0
  %3678 = vmatprep.mubr.f32.mxu0 0.0
  %3679 = vmatmul.mubr.f32.gmra.mrb[0].mxu0 %v3039
  %v3680 = vpop.f32.mrb[0].mxu0
  %v3681 = vadd.f32 0.0, %v3680
  %v3682 = vpop.f32.mrb[0].mxu0
  %3683 = vmatprep.mubr.f32.mxu0 0.0
  %3684 = vmatmul.mubr.f32.gmra.mrb[0].mxu0 %v3042
  %v3685 = vpop.f32.mrb[0].mxu0
  %v3686 = vadd.f32 0.0, %v3685
  %v3687 = vpop.f32.mrb[0].mxu0
  %3688 = vmatprep.mubr.f32.mxu0 0.0
  %3689 = vmatmul.mubr.f32.gmra.mrb[0].mxu0 %v3045
  %v3690 = vpop.f32.mrb[0].mxu0
  %v3691 = vadd.f32 0.0, %v3690
  %v3692 = vpop.f32.mrb[0].mxu0
  %3693 = vmatprep.mubr.f32.mxu0 0.0
  %3694 = vmatmul.mubr.f32.gmra.mrb[0].mxu0 %v3048
  %v3695 = vpop.f32.mrb[0].mxu0
  %v3696 = vadd.f32 0.0, %v3695
  %v3697 = vpop.f32.mrb[0].mxu0
  %3698 = vmatprep.mubr.f32.mxu0 0.0
  %3699 = vmatmul.mubr.f32.gmra.mrb[0].mxu0 %v3051
  %v3700 = vpop.f32.mrb[0].mxu0
  %v3701 = vadd.f32 0.0, %v3700
  %v3702 = vpop.f32.mrb[0].mxu0
  %3703 = vmatprep.mubr.f32.mxu0 0.0
  %3704 = vmatmul.mubr.f32.gmra.mrb[0].mxu0 %v3054
  %v3705 = vpop.f32.mrb[0].mxu0
  %v3706 = vadd.f32 0.0, %v3705
  %v3707 = vpop.f32.mrb[0].mxu0
  %3708 = vmatprep.mubr.f32.mxu0 0.0
  %3709 = vmatmul.mubr.f32.gmra.mrb[0].mxu0 %v3057
  %v3710 = vpop.f32.mrb[0].mxu0
  %v3711 = vadd.f32 0.0, %v3710
  %v3712 = vpop.f32.mrb[0].mxu0
  %3713 = vmatprep.mubr.f32.mxu0 0.0
  %3714 = vmatmul.mubr.f32.gmra.mrb[0].mxu0 %v3060
  %v3715 = vpop.f32.mrb[0].mxu0
  %v3716 = vadd.f32 0.0, %v3715
  %v3717 = vpop.f32.mrb[0].mxu0
  %3718 = vmatprep.mubr.f32.mxu0 0.0
  %3719 = vmatmul.mubr.f32.gmra.mrb[0].mxu0 %v3063
  %v3720 = vpop.f32.mrb[0].mxu0
  %v3721 = vadd.f32 0.0, %v3720
  %v3722 = vpop.f32.mrb[0].mxu0
  %3723 = vmatprep.mubr.f32.mxu0 0.0
  %3724 = vmatmul.mubr.f32.gmra.mrb[0].mxu0 %v3066
  %v3725 = vpop.f32.mrb[0].mxu0
  %v3726 = vadd.f32 0.0, %v3725
  %v3727 = vpop.f32.mrb[0].mxu0
  %3728 = vmatprep.mubr.f32.mxu0 0.0
  %3729 = vmatmul.mubr.f32.gmra.mrb[0].mxu0 %v3069
  %v3730 = vpop.f32.mrb[0].mxu0
  %v3731 = vadd.f32 0.0, %v3730
  %v3732 = vpop.f32.mrb[0].mxu0
  %3733 = vmatprep.mubr.f32.mxu0 0.0
  %3734 = vmatmul.mubr.f32.gmra.mrb[0].mxu0 %v3072
  %v3735 = vpop.f32.mrb[0].mxu0
  %v3736 = vadd.f32 0.0, %v3735
  %v3737 = vpop.f32.mrb[0].mxu0
  %3738 = vmatprep.mubr.f32.mxu0 0.0
  %3739 = vmatmul.mubr.f32.gmra.mrb[0].mxu0 %v3075
  %v3740 = vpop.f32.mrb[0].mxu0
  %v3741 = vadd.f32 0.0, %v3740
  %v3742 = vpop.f32.mrb[0].mxu0
  %3743 = vmatprep.mubr.f32.mxu0 0.0
  %3744 = vmatmul.mubr.f32.gmra.mrb[0].mxu0 %v3078
  %v3745 = vpop.f32.mrb[0].mxu0
  %v3746 = vadd.f32 0.0, %v3745
  %v3747 = vpop.f32.mrb[0].mxu0
  %3748 = vmatprep.mubr.f32.mxu0 0.0
  %3749 = vmatmul.mubr.f32.gmra.mrb[0].mxu0 %v3081
  %v3750 = vpop.f32.mrb[0].mxu0
  %v3751 = vadd.f32 0.0, %v3750
  %v3752 = vpop.f32.mrb[0].mxu0
  %3753 = vmatprep.mubr.f32.mxu0 0.0
  %3754 = vmatmul.mubr.f32.gmra.mrb[0].mxu0 %v3084
  %v3755 = vpop.f32.mrb[0].mxu0
  %v3756 = vadd.f32 0.0, %v3755
  %v3757 = vpop.f32.mrb[0].mxu0
  %3758 = vmatprep.mubr.f32.mxu0 0.0
  %3759 = vmatmul.mubr.f32.gmra.mrb[0].mxu0 %v3087
  %v3760 = vpop.f32.mrb[0].mxu0
  %v3761 = vadd.f32 0.0, %v3760
  %v3762 = vpop.f32.mrb[0].mxu0
  %3763 = vmatprep.mubr.f32.mxu0 0.0
  %3764 = vmatmul.mubr.f32.gmra.mrb[0].mxu0 %v3090
  %v3765 = vpop.f32.mrb[0].mxu0
  %v3766 = vadd.f32 0.0, %v3765
  %v3767 = vpop.f32.mrb[0].mxu0
  %3768 = vmatprep.mubr.f32.mxu0 0.0
  %3769 = vmatmul.mubr.f32.gmra.mrb[0].mxu0 %v3093
  %v3770 = vpop.f32.mrb[0].mxu0
  %v3771 = vadd.f32 0.0, %v3770
  %v3772 = vpop.f32.mrb[0].mxu0
  %3773 = vmatprep.mubr.f32.mxu0 0.0
  %3774 = vmatmul.mubr.f32.gmra.mrb[0].mxu0 %v3096
  %v3775 = vpop.f32.mrb[0].mxu0
  %v3776 = vadd.f32 0.0, %v3775
  %v3777 = vpop.f32.mrb[0].mxu0
  %3778 = vmatprep.mubr.f32.mxu0 0.0
  %3779 = vmatmul.mubr.f32.gmra.mrb[0].mxu0 %v3099
  %v3780 = vpop.f32.mrb[0].mxu0
  %v3781 = vadd.f32 0.0, %v3780
  %v3782 = vpop.f32.mrb[0].mxu0
  %3783 = vmatprep.mubr.f32.mxu0 0.0
  %3784 = vmatmul.mubr.f32.gmra.mrb[0].mxu0 %v3102
  %v3785 = vpop.f32.mrb[0].mxu0
  %v3786 = vadd.f32 0.0, %v3785
  %v3787 = vpop.f32.mrb[0].mxu0
  %3788 = vmatprep.mubr.f32.mxu0 0.0
  %3789 = vmatmul.mubr.f32.gmra.mrb[0].mxu0 %v3105
  %v3790 = vpop.f32.mrb[0].mxu0
  %v3791 = vadd.f32 0.0, %v3790
  %v3792 = vpop.f32.mrb[0].mxu0
  %3793 = vmatprep.mubr.f32.mxu0 0.0
  %3794 = vmatmul.mubr.f32.gmra.mrb[0].mxu0 %v3108
  %v3795 = vpop.f32.mrb[0].mxu0
  %v3796 = vadd.f32 0.0, %v3795
  %v3797 = vpop.f32.mrb[0].mxu0
  %3798 = vmatprep.mubr.f32.mxu0 0.0
  %3799 = vmatmul.mubr.f32.gmra.mrb[0].mxu0 %v3111
  %v3800 = vpop.f32.mrb[0].mxu0
  %v3801 = vadd.f32 0.0, %v3800
  %v3802 = vpop.f32.mrb[0].mxu0
  %3803 = vmatprep.mubr.f32.mxu0 0.0
  %3804 = vmatmul.mubr.f32.gmra.mrb[0].mxu0 %v3114
  %v3805 = vpop.f32.mrb[0].mxu0
  %v3806 = vadd.f32 0.0, %v3805
  %v3807 = vpop.f32.mrb[0].mxu0
  %3808 = vmatprep.mubr.f32.mxu0 0.0
  %3809 = vmatmul.mubr.f32.gmra.mrb[0].mxu0 %v3117
  %v3810 = vpop.f32.mrb[0].mxu0
  %v3811 = vadd.f32 0.0, %v3810
  %v3812 = vpop.f32.mrb[0].mxu0
  %3813 = vmatprep.mubr.f32.mxu0 0.0
  %3814 = vmatmul.mubr.f32.gmra.mrb[0].mxu0 %v3120
  %v3815 = vpop.f32.mrb[0].mxu0
  %v3816 = vadd.f32 0.0, %v3815
  %v3817 = vpop.f32.mrb[0].mxu0
  %3818 = vmatprep.mubr.f32.mxu0 0.0
  %3819 = vmatmul.mubr.f32.gmra.mrb[0].mxu0 %v3123
  %v3820 = vpop.f32.mrb[0].mxu0
  %v3821 = vadd.f32 0.0, %v3820
  %v3822 = vpop.f32.mrb[0].mxu0
  %3823 = vmatprep.mubr.f32.mxu0 0.0
  %3824 = vmatmul.mubr.f32.gmra.mrb[0].mxu0 %v3126
  %v3825 = vpop.f32.mrb[0].mxu0
  %v3826 = vadd.f32 0.0, %v3825
  %v3827 = vpop.f32.mrb[0].mxu0
  %3828 = vmatprep.mubr.f32.mxu0 0.0
  %3829 = vmatmul.mubr.f32.gmra.mrb[0].mxu0 %v3129
  %v3830 = vpop.f32.mrb[0].mxu0
  %v3831 = vadd.f32 0.0, %v3830
  %v3832 = vpop.f32.mrb[0].mxu0
  %3833 = vmatprep.mubr.f32.mxu0 0.0
  %3834 = vmatmul.mubr.f32.gmra.mrb[0].mxu0 %v3132
  %v3835 = vpop.f32.mrb[0].mxu0
  %v3836 = vadd.f32 0.0, %v3835
  %v3837 = vpop.f32.mrb[0].mxu0
  %3838 = vdwg.mxu0
  %v3840 = vsel %vm168, %v1258, 0
  %v3843 = vsel %vm168, %v1259, 0
  %v3846 = vsel %vm168, %v1260, 0
  %v3849 = vsel %vm168, %v1261, 0
  %v3852 = vsel %vm168, %v1262, 0
  %v3855 = vsel %vm168, %v1263, 0
  %v3858 = vsel %vm168, %v1264, 0
  %v3861 = vsel %vm168, %v1265, 0
  %v3864 = vsel %vm168, %v1266, 0
  %v3867 = vsel %vm168, %v1267, 0
  %v3870 = vsel %vm168, %v1268, 0
  %v3873 = vsel %vm168, %v1269, 0
  %v3876 = vsel %vm168, %v1270, 0
  %v3879 = vsel %vm168, %v1271, 0
  %v3882 = vsel %vm168, %v1272, 0
  %v3885 = vsel %vm168, %v1273, 0
  %v3888 = vsel %vm168, %v1274, 0
  %v3891 = vsel %vm168, %v1275, 0
  %v3894 = vsel %vm168, %v1276, 0
  %v3897 = vsel %vm168, %v1277, 0
  %v3900 = vsel %vm168, %v1278, 0
  %v3903 = vsel %vm168, %v1279, 0
  %v3906 = vsel %vm168, %v1280, 0
  %v3909 = vsel %vm168, %v1281, 0
  %v3912 = vsel %vm168, %v1282, 0
  %v3915 = vsel %vm168, %v1283, 0
  %v3918 = vsel %vm168, %v1284, 0
  %v3921 = vsel %vm168, %v1285, 0
  %v3924 = vsel %vm168, %v1286, 0
  %v3927 = vsel %vm168, %v1287, 0
  %v3930 = vsel %vm168, %v1288, 0
  %v3933 = vsel %vm168, %v1289, 0
  %v3936 = vsel %vm168, %v1290, 0
  %v3939 = vsel %vm168, %v1291, 0
  %v3942 = vsel %vm168, %v1292, 0
  %v3945 = vsel %vm168, %v1293, 0
  %v3948 = vsel %vm168, %v1294, 0
  %v3951 = vsel %vm168, %v1295, 0
  %v3954 = vsel %vm168, %v1296, 0
  %v3957 = vsel %vm168, %v1297, 0
  %v3960 = vsel %vm168, %v1298, 0
  %v3963 = vsel %vm168, %v1299, 0
  %v3966 = vsel %vm168, %v1300, 0
  %v3969 = vsel %vm168, %v1301, 0
  %v3972 = vsel %vm168, %v1302, 0
  %v3975 = vsel %vm168, %v1303, 0
  %v3978 = vsel %vm168, %v1304, 0
  %v3981 = vsel %vm168, %v1305, 0
  %v3984 = vsel %vm168, %v1306, 0
  %v3987 = vsel %vm168, %v1307, 0
  %v3990 = vsel %vm168, %v1308, 0
  %v3993 = vsel %vm168, %v1309, 0
  %v3996 = vsel %vm168, %v1310, 0
  %v3999 = vsel %vm168, %v1311, 0
  %v4002 = vsel %vm168, %v1312, 0
  %v4005 = vsel %vm168, %v1313, 0
  %v4008 = vsel %vm168, %v1314, 0
  %v4011 = vsel %vm168, %v1315, 0
  %v4014 = vsel %vm168, %v1316, 0
  %v4017 = vsel %vm168, %v1317, 0
  %v4020 = vsel %vm168, %v1318, 0
  %v4023 = vsel %vm168, %v1319, 0
  %v4026 = vsel %vm168, %v1320, 0
  %v4029 = vsel %vm168, %v1321, 0
  %v4032 = vsel %vm168, %v1322, 0
  %v4035 = vsel %vm168, %v1323, 0
  %v4038 = vsel %vm168, %v1324, 0
  %v4041 = vsel %vm168, %v1325, 0
  %v4044 = vsel %vm168, %v1326, 0
  %v4047 = vsel %vm168, %v1327, 0
  %v4050 = vsel %vm168, %v1328, 0
  %v4053 = vsel %vm168, %v1329, 0
  %v4056 = vsel %vm168, %v1330, 0
  %v4059 = vsel %vm168, %v1331, 0
  %v4062 = vsel %vm168, %v1332, 0
  %v4065 = vsel %vm168, %v1333, 0
  %v4068 = vsel %vm168, %v1334, 0
  %v4071 = vsel %vm168, %v1335, 0
  %v4074 = vsel %vm168, %v1336, 0
  %v4077 = vsel %vm168, %v1337, 0
  %v4080 = vsel %vm168, %v1338, 0
  %v4083 = vsel %vm168, %v1339, 0
  %v4086 = vsel %vm168, %v1340, 0
  %v4089 = vsel %vm168, %v1341, 0
  %v4092 = vsel %vm168, %v1342, 0
  %v4095 = vsel %vm168, %v1343, 0
  %v4098 = vsel %vm168, %v1344, 0
  %v4101 = vsel %vm168, %v1345, 0
  %v4104 = vsel %vm168, %v1346, 0
  %v4107 = vsel %vm168, %v1347, 0
  %v4110 = vsel %vm168, %v1348, 0
  %v4113 = vsel %vm168, %v1349, 0
  %v4116 = vsel %vm168, %v1350, 0
  %v4119 = vsel %vm168, %v1351, 0
  %v4122 = vsel %vm168, %v1352, 0
  %v4125 = vsel %vm168, %v1353, 0
  %v4128 = vsel %vm168, %v1354, 0
  %v4131 = vsel %vm168, %v1355, 0
  %v4134 = vsel %vm168, %v1356, 0
  %v4137 = vsel %vm168, %v1357, 0
  %v4140 = vsel %vm168, %v1358, 0
  %v4143 = vsel %vm168, %v1359, 0
  %v4146 = vsel %vm168, %v1360, 0
  %v4149 = vsel %vm168, %v1361, 0
  %v4152 = vsel %vm168, %v1362, 0
  %v4155 = vsel %vm168, %v1363, 0
  %v4158 = vsel %vm168, %v1364, 0
  %v4161 = vsel %vm168, %v1365, 0
  %v4164 = vsel %vm168, %v1366, 0
  %v4167 = vsel %vm168, %v1367, 0
  %v4170 = vsel %vm168, %v1368, 0
  %v4173 = vsel %vm168, %v1369, 0
  %v4176 = vsel %vm168, %v1370, 0
  %v4179 = vsel %vm168, %v1371, 0
  %v4182 = vsel %vm168, %v1372, 0
  %v4185 = vsel %vm168, %v1373, 0
  %v4188 = vsel %vm168, %v1374, 0
  %v4191 = vsel %vm168, %v1375, 0
  %v4194 = vsel %vm168, %v1376, 0
  %v4197 = vsel %vm168, %v1377, 0
  %v4200 = vsel %vm168, %v1378, 0
  %v4203 = vsel %vm168, %v1379, 0
  %v4206 = vsel %vm168, %v1380, 0
  %v4209 = vsel %vm168, %v1381, 0
  %v4212 = vsel %vm168, %v1382, 0
  %v4215 = vsel %vm168, %v1383, 0
  %v4218 = vsel %vm168, %v1384, 0
  %v4221 = vsel %vm168, %v1385, 0
  %4223 = vmatprep.subr.mxu0 0.0
  %4224 = vmatpush1.msra.mxu0 %v2742
  %4225 = vmatprep.subr.mxu0 0.0
  %4226 = vmatpush1.msra.mxu0 %v2743
  %4227 = vmatprep.subr.mxu0 0.0
  %4228 = vmatpush1.msra.mxu0 %v2744
  %4229 = vmatprep.subr.mxu0 0.0
  %4230 = vmatpush1.msra.mxu0 %v2745
  %4231 = vmatprep.subr.mxu0 0.0
  %4232 = vmatpush1.msra.mxu0 0.0
  %4233 = vmatprep.subr.mxu0 0.0
  %4234 = vmatpush1.msra.mxu0 0.0
  %4235 = vmatprep.subr.mxu0 0.0
  %4236 = vmatpush1.msra.mxu0 0.0
  %4237 = vmatprep.subr.mxu0 0.0
  %4238 = vmatpush1.msra.mxu0 0.0
  %4239 = vmatprep.subr.mxu0 0.0
  %4240 = vmatpush1.msra.mxu0 0.0
  %4241 = vmatprep.subr.mxu0 0.0
  %4242 = vmatpush1.msra.mxu0 0.0
  %4243 = vmatprep.subr.mxu0 0.0
  %4244 = vmatpush1.msra.mxu0 0.0
  %4245 = vmatprep.subr.mxu0 0.0
  %4246 = vmatpush1.msra.mxu0 0.0
  %4247 = vmatprep.subr.mxu0 0.0
  %4248 = vmatpush1.msra.mxu0 0.0
  %4249 = vmatprep.subr.mxu0 0.0
  %4250 = vmatpush1.msra.mxu0 0.0
  %4251 = vmatprep.subr.mxu0 0.0
  %4252 = vmatpush1.msra.mxu0 0.0
  %4253 = vmatprep.subr.mxu0 0.0
  %4254 = vmatpush1.msra.mxu0 0.0
  %4255 = vmatprep.subr.mxu0 0.0
  %4256 = vmatpush1.msra.mxu0 0.0
  %4257 = vmatprep.subr.mxu0 0.0
  %4258 = vmatpush1.msra.mxu0 0.0
  %4259 = vmatprep.subr.mxu0 0.0
  %4260 = vmatpush1.msra.mxu0 0.0
  %4261 = vmatprep.subr.mxu0 0.0
  %4262 = vmatpush1.msra.mxu0 0.0
  %4263 = vmatprep.subr.mxu0 0.0
  %4264 = vmatpush1.msra.mxu0 0.0
  %4265 = vmatprep.subr.mxu0 0.0
  %4266 = vmatpush1.msra.mxu0 0.0
  %4267 = vmatprep.subr.mxu0 0.0
  %4268 = vmatpush1.msra.mxu0 0.0
  %4269 = vmatprep.subr.mxu0 0.0
  %4270 = vmatpush1.msra.mxu0 0.0
  %4271 = vmatprep.subr.mxu0 0.0
  %4272 = vmatpush1.msra.mxu0 0.0
  %4273 = vmatprep.subr.mxu0 0.0
  %4274 = vmatpush1.msra.mxu0 0.0
  %4275 = vmatprep.subr.mxu0 0.0
  %4276 = vmatpush1.msra.mxu0 0.0
  %4277 = vmatprep.subr.mxu0 0.0
  %4278 = vmatpush1.msra.mxu0 0.0
  %4279 = vmatprep.subr.mxu0 0.0
  %4280 = vmatpush1.msra.mxu0 0.0
  %4281 = vmatprep.subr.mxu0 0.0
  %4282 = vmatpush1.msra.mxu0 0.0
  %4283 = vmatprep.subr.mxu0 0.0
  %4284 = vmatpush1.msra.mxu0 0.0
  %4285 = vmatprep.subr.mxu0 0.0
  %4286 = vmatpush1.msra.mxu0 0.0
  %4287 = vmatprep.mubr.f32.mxu0 0.0
  %4288 = vmatmul.mubr.f32.gmra.mrb[0].mxu0 %v3840
  %v4289 = vpop.f32.mrb[0].mxu0
  %v4290 = vadd.f32 %v3201, %v4289
  %v4291 = vpop.f32.mrb[0].mxu0
  %4292 = vmatprep.mubr.f32.mxu0 0.0
  %4293 = vmatmul.mubr.f32.gmra.mrb[0].mxu0 %v3843
  %v4294 = vpop.f32.mrb[0].mxu0
  %v4295 = vadd.f32 %v3206, %v4294
  %v4296 = vpop.f32.mrb[0].mxu0
  %4297 = vmatprep.mubr.f32.mxu0 0.0
  %4298 = vmatmul.mubr.f32.gmra.mrb[0].mxu0 %v3846
  %v4299 = vpop.f32.mrb[0].mxu0
  %v4300 = vadd.f32 %v3211, %v4299
  %v4301 = vpop.f32.mrb[0].mxu0
  %4302 = vmatprep.mubr.f32.mxu0 0.0
  %4303 = vmatmul.mubr.f32.gmra.mrb[0].mxu0 %v3849
  %v4304 = vpop.f32.mrb[0].mxu0
  %v4305 = vadd.f32 %v3216, %v4304
  %v4306 = vpop.f32.mrb[0].mxu0
  %4307 = vmatprep.mubr.f32.mxu0 0.0
  %4308 = vmatmul.mubr.f32.gmra.mrb[0].mxu0 %v3852
  %v4309 = vpop.f32.mrb[0].mxu0
  %v4310 = vadd.f32 %v3221, %v4309
  %v4311 = vpop.f32.mrb[0].mxu0
  %4312 = vmatprep.mubr.f32.mxu0 0.0
  %4313 = vmatmul.mubr.f32.gmra.mrb[0].mxu0 %v3855
  %v4314 = vpop.f32.mrb[0].mxu0
  %v4315 = vadd.f32 %v3226, %v4314
  %v4316 = vpop.f32.mrb[0].mxu0
  %4317 = vmatprep.mubr.f32.mxu0 0.0
  %4318 = vmatmul.mubr.f32.gmra.mrb[0].mxu0 %v3858
  %v4319 = vpop.f32.mrb[0].mxu0
  %v4320 = vadd.f32 %v3231, %v4319
  %v4321 = vpop.f32.mrb[0].mxu0
  %4322 = vmatprep.mubr.f32.mxu0 0.0
  %4323 = vmatmul.mubr.f32.gmra.mrb[0].mxu0 %v3861
  %v4324 = vpop.f32.mrb[0].mxu0
  %v4325 = vadd.f32 %v3236, %v4324
  %v4326 = vpop.f32.mrb[0].mxu0
  %4327 = vmatprep.mubr.f32.mxu0 0.0
  %4328 = vmatmul.mubr.f32.gmra.mrb[0].mxu0 %v3864
  %v4329 = vpop.f32.mrb[0].mxu0
  %v4330 = vadd.f32 %v3241, %v4329
  %v4331 = vpop.f32.mrb[0].mxu0
  %4332 = vmatprep.mubr.f32.mxu0 0.0
  %4333 = vmatmul.mubr.f32.gmra.mrb[0].mxu0 %v3867
  %v4334 = vpop.f32.mrb[0].mxu0
  %v4335 = vadd.f32 %v3246, %v4334
  %v4336 = vpop.f32.mrb[0].mxu0
  %4337 = vmatprep.mubr.f32.mxu0 0.0
  %4338 = vmatmul.mubr.f32.gmra.mrb[0].mxu0 %v3870
  %v4339 = vpop.f32.mrb[0].mxu0
  %v4340 = vadd.f32 %v3251, %v4339
  %v4341 = vpop.f32.mrb[0].mxu0
  %4342 = vmatprep.mubr.f32.mxu0 0.0
  %4343 = vmatmul.mubr.f32.gmra.mrb[0].mxu0 %v3873
  %v4344 = vpop.f32.mrb[0].mxu0
  %v4345 = vadd.f32 %v3256, %v4344
  %v4346 = vpop.f32.mrb[0].mxu0
  %4347 = vmatprep.mubr.f32.mxu0 0.0
  %4348 = vmatmul.mubr.f32.gmra.mrb[0].mxu0 %v3876
  %v4349 = vpop.f32.mrb[0].mxu0
  %v4350 = vadd.f32 %v3261, %v4349
  %v4351 = vpop.f32.mrb[0].mxu0
  %4352 = vmatprep.mubr.f32.mxu0 0.0
  %4353 = vmatmul.mubr.f32.gmra.mrb[0].mxu0 %v3879
  %v4354 = vpop.f32.mrb[0].mxu0
  %v4355 = vadd.f32 %v3266, %v4354
  %v4356 = vpop.f32.mrb[0].mxu0
  %4357 = vmatprep.mubr.f32.mxu0 0.0
  %4358 = vmatmul.mubr.f32.gmra.mrb[0].mxu0 %v3882
  %v4359 = vpop.f32.mrb[0].mxu0
  %v4360 = vadd.f32 %v3271, %v4359
  %v4361 = vpop.f32.mrb[0].mxu0
  %4362 = vmatprep.mubr.f32.mxu0 0.0
  %4363 = vmatmul.mubr.f32.gmra.mrb[0].mxu0 %v3885
  %v4364 = vpop.f32.mrb[0].mxu0
  %v4365 = vadd.f32 %v3276, %v4364
  %v4366 = vpop.f32.mrb[0].mxu0
  %4367 = vmatprep.mubr.f32.mxu0 0.0
  %4368 = vmatmul.mubr.f32.gmra.mrb[0].mxu0 %v3888
  %v4369 = vpop.f32.mrb[0].mxu0
  %v4370 = vadd.f32 %v3281, %v4369
  %v4371 = vpop.f32.mrb[0].mxu0
  %4372 = vmatprep.mubr.f32.mxu0 0.0
  %4373 = vmatmul.mubr.f32.gmra.mrb[0].mxu0 %v3891
  %v4374 = vpop.f32.mrb[0].mxu0
  %v4375 = vadd.f32 %v3286, %v4374
  %v4376 = vpop.f32.mrb[0].mxu0
  %4377 = vmatprep.mubr.f32.mxu0 0.0
  %4378 = vmatmul.mubr.f32.gmra.mrb[0].mxu0 %v3894
  %v4379 = vpop.f32.mrb[0].mxu0
  %v4380 = vadd.f32 %v3291, %v4379
  %v4381 = vpop.f32.mrb[0].mxu0
  %4382 = vmatprep.mubr.f32.mxu0 0.0
  %4383 = vmatmul.mubr.f32.gmra.mrb[0].mxu0 %v3897
  %v4384 = vpop.f32.mrb[0].mxu0
  %v4385 = vadd.f32 %v3296, %v4384
  %v4386 = vpop.f32.mrb[0].mxu0
  %4387 = vmatprep.mubr.f32.mxu0 0.0
  %4388 = vmatmul.mubr.f32.gmra.mrb[0].mxu0 %v3900
  %v4389 = vpop.f32.mrb[0].mxu0
  %v4390 = vadd.f32 %v3301, %v4389
  %v4391 = vpop.f32.mrb[0].mxu0
  %4392 = vmatprep.mubr.f32.mxu0 0.0
  %4393 = vmatmul.mubr.f32.gmra.mrb[0].mxu0 %v3903
  %v4394 = vpop.f32.mrb[0].mxu0
  %v4395 = vadd.f32 %v3306, %v4394
  %v4396 = vpop.f32.mrb[0].mxu0
  %4397 = vmatprep.mubr.f32.mxu0 0.0
  %4398 = vmatmul.mubr.f32.gmra.mrb[0].mxu0 %v3906
  %v4399 = vpop.f32.mrb[0].mxu0
  %v4400 = vadd.f32 %v3311, %v4399
  %v4401 = vpop.f32.mrb[0].mxu0
  %4402 = vmatprep.mubr.f32.mxu0 0.0
  %4403 = vmatmul.mubr.f32.gmra.mrb[0].mxu0 %v3909
  %v4404 = vpop.f32.mrb[0].mxu0
  %v4405 = vadd.f32 %v3316, %v4404
  %v4406 = vpop.f32.mrb[0].mxu0
  %4407 = vmatprep.mubr.f32.mxu0 0.0
  %4408 = vmatmul.mubr.f32.gmra.mrb[0].mxu0 %v3912
  %v4409 = vpop.f32.mrb[0].mxu0
  %v4410 = vadd.f32 %v3321, %v4409
  %v4411 = vpop.f32.mrb[0].mxu0
  %4412 = vmatprep.mubr.f32.mxu0 0.0
  %4413 = vmatmul.mubr.f32.gmra.mrb[0].mxu0 %v3915
  %v4414 = vpop.f32.mrb[0].mxu0
  %v4415 = vadd.f32 %v3326, %v4414
  %v4416 = vpop.f32.mrb[0].mxu0
  %4417 = vmatprep.mubr.f32.mxu0 0.0
  %4418 = vmatmul.mubr.f32.gmra.mrb[0].mxu0 %v3918
  %v4419 = vpop.f32.mrb[0].mxu0
  %v4420 = vadd.f32 %v3331, %v4419
  %v4421 = vpop.f32.mrb[0].mxu0
  %4422 = vmatprep.mubr.f32.mxu0 0.0
  %4423 = vmatmul.mubr.f32.gmra.mrb[0].mxu0 %v3921
  %v4424 = vpop.f32.mrb[0].mxu0
  %v4425 = vadd.f32 %v3336, %v4424
  %v4426 = vpop.f32.mrb[0].mxu0
  %4427 = vmatprep.mubr.f32.mxu0 0.0
  %4428 = vmatmul.mubr.f32.gmra.mrb[0].mxu0 %v3924
  %v4429 = vpop.f32.mrb[0].mxu0
  %v4430 = vadd.f32 %v3341, %v4429
  %v4431 = vpop.f32.mrb[0].mxu0
  %4432 = vmatprep.mubr.f32.mxu0 0.0
  %4433 = vmatmul.mubr.f32.gmra.mrb[0].mxu0 %v3927
  %v4434 = vpop.f32.mrb[0].mxu0
  %v4435 = vadd.f32 %v3346, %v4434
  %v4436 = vpop.f32.mrb[0].mxu0
  %4437 = vmatprep.mubr.f32.mxu0 0.0
  %4438 = vmatmul.mubr.f32.gmra.mrb[0].mxu0 %v3930
  %v4439 = vpop.f32.mrb[0].mxu0
  %v4440 = vadd.f32 %v3351, %v4439
  %v4441 = vpop.f32.mrb[0].mxu0
  %4442 = vmatprep.mubr.f32.mxu0 0.0
  %4443 = vmatmul.mubr.f32.gmra.mrb[0].mxu0 %v3933
  %v4444 = vpop.f32.mrb[0].mxu0
  %v4445 = vadd.f32 %v3356, %v4444
  %v4446 = vpop.f32.mrb[0].mxu0
  %4447 = vmatprep.mubr.f32.mxu0 0.0
  %4448 = vmatmul.mubr.f32.gmra.mrb[0].mxu0 %v3936
  %v4449 = vpop.f32.mrb[0].mxu0
  %v4450 = vadd.f32 %v3361, %v4449
  %v4451 = vpop.f32.mrb[0].mxu0
  %4452 = vmatprep.mubr.f32.mxu0 0.0
  %4453 = vmatmul.mubr.f32.gmra.mrb[0].mxu0 %v3939
  %v4454 = vpop.f32.mrb[0].mxu0
  %v4455 = vadd.f32 %v3366, %v4454
  %v4456 = vpop.f32.mrb[0].mxu0
  %4457 = vmatprep.mubr.f32.mxu0 0.0
  %4458 = vmatmul.mubr.f32.gmra.mrb[0].mxu0 %v3942
  %v4459 = vpop.f32.mrb[0].mxu0
  %v4460 = vadd.f32 %v3371, %v4459
  %v4461 = vpop.f32.mrb[0].mxu0
  %4462 = vmatprep.mubr.f32.mxu0 0.0
  %4463 = vmatmul.mubr.f32.gmra.mrb[0].mxu0 %v3945
  %v4464 = vpop.f32.mrb[0].mxu0
  %v4465 = vadd.f32 %v3376, %v4464
  %v4466 = vpop.f32.mrb[0].mxu0
  %4467 = vmatprep.mubr.f32.mxu0 0.0
  %4468 = vmatmul.mubr.f32.gmra.mrb[0].mxu0 %v3948
  %v4469 = vpop.f32.mrb[0].mxu0
  %v4470 = vadd.f32 %v3381, %v4469
  %v4471 = vpop.f32.mrb[0].mxu0
  %4472 = vmatprep.mubr.f32.mxu0 0.0
  %4473 = vmatmul.mubr.f32.gmra.mrb[0].mxu0 %v3951
  %v4474 = vpop.f32.mrb[0].mxu0
  %v4475 = vadd.f32 %v3386, %v4474
  %v4476 = vpop.f32.mrb[0].mxu0
  %4477 = vmatprep.mubr.f32.mxu0 0.0
  %4478 = vmatmul.mubr.f32.gmra.mrb[0].mxu0 %v3954
  %v4479 = vpop.f32.mrb[0].mxu0
  %v4480 = vadd.f32 %v3391, %v4479
  %v4481 = vpop.f32.mrb[0].mxu0
  %4482 = vmatprep.mubr.f32.mxu0 0.0
  %4483 = vmatmul.mubr.f32.gmra.mrb[0].mxu0 %v3957
  %v4484 = vpop.f32.mrb[0].mxu0
  %v4485 = vadd.f32 %v3396, %v4484
  %v4486 = vpop.f32.mrb[0].mxu0
  %4487 = vmatprep.mubr.f32.mxu0 0.0
  %4488 = vmatmul.mubr.f32.gmra.mrb[0].mxu0 %v3960
  %v4489 = vpop.f32.mrb[0].mxu0
  %v4490 = vadd.f32 %v3401, %v4489
  %v4491 = vpop.f32.mrb[0].mxu0
  %4492 = vmatprep.mubr.f32.mxu0 0.0
  %4493 = vmatmul.mubr.f32.gmra.mrb[0].mxu0 %v3963
  %v4494 = vpop.f32.mrb[0].mxu0
  %v4495 = vadd.f32 %v3406, %v4494
  %v4496 = vpop.f32.mrb[0].mxu0
  %4497 = vmatprep.mubr.f32.mxu0 0.0
  %4498 = vmatmul.mubr.f32.gmra.mrb[0].mxu0 %v3966
  %v4499 = vpop.f32.mrb[0].mxu0
  %v4500 = vadd.f32 %v3411, %v4499
  %v4501 = vpop.f32.mrb[0].mxu0
  %4502 = vmatprep.mubr.f32.mxu0 0.0
  %4503 = vmatmul.mubr.f32.gmra.mrb[0].mxu0 %v3969
  %v4504 = vpop.f32.mrb[0].mxu0
  %v4505 = vadd.f32 %v3416, %v4504
  %v4506 = vpop.f32.mrb[0].mxu0
  %4507 = vmatprep.mubr.f32.mxu0 0.0
  %4508 = vmatmul.mubr.f32.gmra.mrb[0].mxu0 %v3972
  %v4509 = vpop.f32.mrb[0].mxu0
  %v4510 = vadd.f32 %v3421, %v4509
  %v4511 = vpop.f32.mrb[0].mxu0
  %4512 = vmatprep.mubr.f32.mxu0 0.0
  %4513 = vmatmul.mubr.f32.gmra.mrb[0].mxu0 %v3975
  %v4514 = vpop.f32.mrb[0].mxu0
  %v4515 = vadd.f32 %v3426, %v4514
  %v4516 = vpop.f32.mrb[0].mxu0
  %4517 = vmatprep.mubr.f32.mxu0 0.0
  %4518 = vmatmul.mubr.f32.gmra.mrb[0].mxu0 %v3978
  %v4519 = vpop.f32.mrb[0].mxu0
  %v4520 = vadd.f32 %v3431, %v4519
  %v4521 = vpop.f32.mrb[0].mxu0
  %4522 = vmatprep.mubr.f32.mxu0 0.0
  %4523 = vmatmul.mubr.f32.gmra.mrb[0].mxu0 %v3981
  %v4524 = vpop.f32.mrb[0].mxu0
  %v4525 = vadd.f32 %v3436, %v4524
  %v4526 = vpop.f32.mrb[0].mxu0
  %4527 = vmatprep.mubr.f32.mxu0 0.0
  %4528 = vmatmul.mubr.f32.gmra.mrb[0].mxu0 %v3984
  %v4529 = vpop.f32.mrb[0].mxu0
  %v4530 = vadd.f32 %v3441, %v4529
  %v4531 = vpop.f32.mrb[0].mxu0
  %4532 = vmatprep.mubr.f32.mxu0 0.0
  %4533 = vmatmul.mubr.f32.gmra.mrb[0].mxu0 %v3987
  %v4534 = vpop.f32.mrb[0].mxu0
  %v4535 = vadd.f32 %v3446, %v4534
  %v4536 = vpop.f32.mrb[0].mxu0
  %4537 = vmatprep.mubr.f32.mxu0 0.0
  %4538 = vmatmul.mubr.f32.gmra.mrb[0].mxu0 %v3990
  %v4539 = vpop.f32.mrb[0].mxu0
  %v4540 = vadd.f32 %v3451, %v4539
  %v4541 = vpop.f32.mrb[0].mxu0
  %4542 = vmatprep.mubr.f32.mxu0 0.0
  %4543 = vmatmul.mubr.f32.gmra.mrb[0].mxu0 %v3993
  %v4544 = vpop.f32.mrb[0].mxu0
  %v4545 = vadd.f32 %v3456, %v4544
  %v4546 = vpop.f32.mrb[0].mxu0
  %4547 = vmatprep.mubr.f32.mxu0 0.0
  %4548 = vmatmul.mubr.f32.gmra.mrb[0].mxu0 %v3996
  %v4549 = vpop.f32.mrb[0].mxu0
  %v4550 = vadd.f32 %v3461, %v4549
  %v4551 = vpop.f32.mrb[0].mxu0
  %4552 = vmatprep.mubr.f32.mxu0 0.0
  %4553 = vmatmul.mubr.f32.gmra.mrb[0].mxu0 %v3999
  %v4554 = vpop.f32.mrb[0].mxu0
  %v4555 = vadd.f32 %v3466, %v4554
  %v4556 = vpop.f32.mrb[0].mxu0
  %4557 = vmatprep.mubr.f32.mxu0 0.0
  %4558 = vmatmul.mubr.f32.gmra.mrb[0].mxu0 %v4002
  %v4559 = vpop.f32.mrb[0].mxu0
  %v4560 = vadd.f32 %v3471, %v4559
  %v4561 = vpop.f32.mrb[0].mxu0
  %4562 = vmatprep.mubr.f32.mxu0 0.0
  %4563 = vmatmul.mubr.f32.gmra.mrb[0].mxu0 %v4005
  %v4564 = vpop.f32.mrb[0].mxu0
  %v4565 = vadd.f32 %v3476, %v4564
  %v4566 = vpop.f32.mrb[0].mxu0
  %4567 = vmatprep.mubr.f32.mxu0 0.0
  %4568 = vmatmul.mubr.f32.gmra.mrb[0].mxu0 %v4008
  %v4569 = vpop.f32.mrb[0].mxu0
  %v4570 = vadd.f32 %v3481, %v4569
  %v4571 = vpop.f32.mrb[0].mxu0
  %4572 = vmatprep.mubr.f32.mxu0 0.0
  %4573 = vmatmul.mubr.f32.gmra.mrb[0].mxu0 %v4011
  %v4574 = vpop.f32.mrb[0].mxu0
  %v4575 = vadd.f32 %v3486, %v4574
  %v4576 = vpop.f32.mrb[0].mxu0
  %4577 = vmatprep.mubr.f32.mxu0 0.0
  %4578 = vmatmul.mubr.f32.gmra.mrb[0].mxu0 %v4014
  %v4579 = vpop.f32.mrb[0].mxu0
  %v4580 = vadd.f32 %v3491, %v4579
  %v4581 = vpop.f32.mrb[0].mxu0
  %4582 = vmatprep.mubr.f32.mxu0 0.0
  %4583 = vmatmul.mubr.f32.gmra.mrb[0].mxu0 %v4017
  %v4584 = vpop.f32.mrb[0].mxu0
  %v4585 = vadd.f32 %v3496, %v4584
  %v4586 = vpop.f32.mrb[0].mxu0
  %4587 = vmatprep.mubr.f32.mxu0 0.0
  %4588 = vmatmul.mubr.f32.gmra.mrb[0].mxu0 %v4020
  %v4589 = vpop.f32.mrb[0].mxu0
  %v4590 = vadd.f32 %v3501, %v4589
  %v4591 = vpop.f32.mrb[0].mxu0
  %4592 = vmatprep.mubr.f32.mxu0 0.0
  %4593 = vmatmul.mubr.f32.gmra.mrb[0].mxu0 %v4023
  %v4594 = vpop.f32.mrb[0].mxu0
  %v4595 = vadd.f32 %v3506, %v4594
  %v4596 = vpop.f32.mrb[0].mxu0
  %4597 = vmatprep.mubr.f32.mxu0 0.0
  %4598 = vmatmul.mubr.f32.gmra.mrb[0].mxu0 %v4026
  %v4599 = vpop.f32.mrb[0].mxu0
  %v4600 = vadd.f32 %v3511, %v4599
  %v4601 = vpop.f32.mrb[0].mxu0
  %4602 = vmatprep.mubr.f32.mxu0 0.0
  %4603 = vmatmul.mubr.f32.gmra.mrb[0].mxu0 %v4029
  %v4604 = vpop.f32.mrb[0].mxu0
  %v4605 = vadd.f32 %v3516, %v4604
  %v4606 = vpop.f32.mrb[0].mxu0
  %4607 = vmatprep.mubr.f32.mxu0 0.0
  %4608 = vmatmul.mubr.f32.gmra.mrb[0].mxu0 %v4032
  %v4609 = vpop.f32.mrb[0].mxu0
  %v4610 = vadd.f32 %v3521, %v4609
  %v4611 = vpop.f32.mrb[0].mxu0
  %4612 = vmatprep.mubr.f32.mxu0 0.0
  %4613 = vmatmul.mubr.f32.gmra.mrb[0].mxu0 %v4035
  %v4614 = vpop.f32.mrb[0].mxu0
  %v4615 = vadd.f32 %v3526, %v4614
  %v4616 = vpop.f32.mrb[0].mxu0
  %4617 = vmatprep.mubr.f32.mxu0 0.0
  %4618 = vmatmul.mubr.f32.gmra.mrb[0].mxu0 %v4038
  %v4619 = vpop.f32.mrb[0].mxu0
  %v4620 = vadd.f32 %v3531, %v4619
  %v4621 = vpop.f32.mrb[0].mxu0
  %4622 = vmatprep.mubr.f32.mxu0 0.0
  %4623 = vmatmul.mubr.f32.gmra.mrb[0].mxu0 %v4041
  %v4624 = vpop.f32.mrb[0].mxu0
  %v4625 = vadd.f32 %v3536, %v4624
  %v4626 = vpop.f32.mrb[0].mxu0
  %4627 = vmatprep.mubr.f32.mxu0 0.0
  %4628 = vmatmul.mubr.f32.gmra.mrb[0].mxu0 %v4044
  %v4629 = vpop.f32.mrb[0].mxu0
  %v4630 = vadd.f32 %v3541, %v4629
  %v4631 = vpop.f32.mrb[0].mxu0
  %4632 = vmatprep.mubr.f32.mxu0 0.0
  %4633 = vmatmul.mubr.f32.gmra.mrb[0].mxu0 %v4047
  %v4634 = vpop.f32.mrb[0].mxu0
  %v4635 = vadd.f32 %v3546, %v4634
  %v4636 = vpop.f32.mrb[0].mxu0
  %4637 = vmatprep.mubr.f32.mxu0 0.0
  %4638 = vmatmul.mubr.f32.gmra.mrb[0].mxu0 %v4050
  %v4639 = vpop.f32.mrb[0].mxu0
  %v4640 = vadd.f32 %v3551, %v4639
  %v4641 = vpop.f32.mrb[0].mxu0
  %4642 = vmatprep.mubr.f32.mxu0 0.0
  %4643 = vmatmul.mubr.f32.gmra.mrb[0].mxu0 %v4053
  %v4644 = vpop.f32.mrb[0].mxu0
  %v4645 = vadd.f32 %v3556, %v4644
  %v4646 = vpop.f32.mrb[0].mxu0
  %4647 = vmatprep.mubr.f32.mxu0 0.0
  %4648 = vmatmul.mubr.f32.gmra.mrb[0].mxu0 %v4056
  %v4649 = vpop.f32.mrb[0].mxu0
  %v4650 = vadd.f32 %v3561, %v4649
  %v4651 = vpop.f32.mrb[0].mxu0
  %4652 = vmatprep.mubr.f32.mxu0 0.0
  %4653 = vmatmul.mubr.f32.gmra.mrb[0].mxu0 %v4059
  %v4654 = vpop.f32.mrb[0].mxu0
  %v4655 = vadd.f32 %v3566, %v4654
  %v4656 = vpop.f32.mrb[0].mxu0
  %4657 = vmatprep.mubr.f32.mxu0 0.0
  %4658 = vmatmul.mubr.f32.gmra.mrb[0].mxu0 %v4062
  %v4659 = vpop.f32.mrb[0].mxu0
  %v4660 = vadd.f32 %v3571, %v4659
  %v4661 = vpop.f32.mrb[0].mxu0
  %4662 = vmatprep.mubr.f32.mxu0 0.0
  %4663 = vmatmul.mubr.f32.gmra.mrb[0].mxu0 %v4065
  %v4664 = vpop.f32.mrb[0].mxu0
  %v4665 = vadd.f32 %v3576, %v4664
  %v4666 = vpop.f32.mrb[0].mxu0
  %4667 = vmatprep.mubr.f32.mxu0 0.0
  %4668 = vmatmul.mubr.f32.gmra.mrb[0].mxu0 %v4068
  %v4669 = vpop.f32.mrb[0].mxu0
  %v4670 = vadd.f32 %v3581, %v4669
  %v4671 = vpop.f32.mrb[0].mxu0
  %4672 = vmatprep.mubr.f32.mxu0 0.0
  %4673 = vmatmul.mubr.f32.gmra.mrb[0].mxu0 %v4071
  %v4674 = vpop.f32.mrb[0].mxu0
  %v4675 = vadd.f32 %v3586, %v4674
  %v4676 = vpop.f32.mrb[0].mxu0
  %4677 = vmatprep.mubr.f32.mxu0 0.0
  %4678 = vmatmul.mubr.f32.gmra.mrb[0].mxu0 %v4074
  %v4679 = vpop.f32.mrb[0].mxu0
  %v4680 = vadd.f32 %v3591, %v4679
  %v4681 = vpop.f32.mrb[0].mxu0
  %4682 = vmatprep.mubr.f32.mxu0 0.0
  %4683 = vmatmul.mubr.f32.gmra.mrb[0].mxu0 %v4077
  %v4684 = vpop.f32.mrb[0].mxu0
  %v4685 = vadd.f32 %v3596, %v4684
  %v4686 = vpop.f32.mrb[0].mxu0
  %4687 = vmatprep.mubr.f32.mxu0 0.0
  %4688 = vmatmul.mubr.f32.gmra.mrb[0].mxu0 %v4080
  %v4689 = vpop.f32.mrb[0].mxu0
  %v4690 = vadd.f32 %v3601, %v4689
  %v4691 = vpop.f32.mrb[0].mxu0
  %4692 = vmatprep.mubr.f32.mxu0 0.0
  %4693 = vmatmul.mubr.f32.gmra.mrb[0].mxu0 %v4083
  %v4694 = vpop.f32.mrb[0].mxu0
  %v4695 = vadd.f32 %v3606, %v4694
  %v4696 = vpop.f32.mrb[0].mxu0
  %4697 = vmatprep.mubr.f32.mxu0 0.0
  %4698 = vmatmul.mubr.f32.gmra.mrb[0].mxu0 %v4086
  %v4699 = vpop.f32.mrb[0].mxu0
  %v4700 = vadd.f32 %v3611, %v4699
  %v4701 = vpop.f32.mrb[0].mxu0
  %4702 = vmatprep.mubr.f32.mxu0 0.0
  %4703 = vmatmul.mubr.f32.gmra.mrb[0].mxu0 %v4089
  %v4704 = vpop.f32.mrb[0].mxu0
  %v4705 = vadd.f32 %v3616, %v4704
  %v4706 = vpop.f32.mrb[0].mxu0
  %4707 = vmatprep.mubr.f32.mxu0 0.0
  %4708 = vmatmul.mubr.f32.gmra.mrb[0].mxu0 %v4092
  %v4709 = vpop.f32.mrb[0].mxu0
  %v4710 = vadd.f32 %v3621, %v4709
  %v4711 = vpop.f32.mrb[0].mxu0
  %4712 = vmatprep.mubr.f32.mxu0 0.0
  %4713 = vmatmul.mubr.f32.gmra.mrb[0].mxu0 %v4095
  %v4714 = vpop.f32.mrb[0].mxu0
  %v4715 = vadd.f32 %v3626, %v4714
  %v4716 = vpop.f32.mrb[0].mxu0
  %4717 = vmatprep.mubr.f32.mxu0 0.0
  %4718 = vmatmul.mubr.f32.gmra.mrb[0].mxu0 %v4098
  %v4719 = vpop.f32.mrb[0].mxu0
  %v4720 = vadd.f32 %v3631, %v4719
  %v4721 = vpop.f32.mrb[0].mxu0
  %4722 = vmatprep.mubr.f32.mxu0 0.0
  %4723 = vmatmul.mubr.f32.gmra.mrb[0].mxu0 %v4101
  %v4724 = vpop.f32.mrb[0].mxu0
  %v4725 = vadd.f32 %v3636, %v4724
  %v4726 = vpop.f32.mrb[0].mxu0
  %4727 = vmatprep.mubr.f32.mxu0 0.0
  %4728 = vmatmul.mubr.f32.gmra.mrb[0].mxu0 %v4104
  %v4729 = vpop.f32.mrb[0].mxu0
  %v4730 = vadd.f32 %v3641, %v4729
  %v4731 = vpop.f32.mrb[0].mxu0
  %4732 = vmatprep.mubr.f32.mxu0 0.0
  %4733 = vmatmul.mubr.f32.gmra.mrb[0].mxu0 %v4107
  %v4734 = vpop.f32.mrb[0].mxu0
  %v4735 = vadd.f32 %v3646, %v4734
  %v4736 = vpop.f32.mrb[0].mxu0
  %4737 = vmatprep.mubr.f32.mxu0 0.0
  %4738 = vmatmul.mubr.f32.gmra.mrb[0].mxu0 %v4110
  %v4739 = vpop.f32.mrb[0].mxu0
  %v4740 = vadd.f32 %v3651, %v4739
  %v4741 = vpop.f32.mrb[0].mxu0
  %4742 = vmatprep.mubr.f32.mxu0 0.0
  %4743 = vmatmul.mubr.f32.gmra.mrb[0].mxu0 %v4113
  %v4744 = vpop.f32.mrb[0].mxu0
  %v4745 = vadd.f32 %v3656, %v4744
  %v4746 = vpop.f32.mrb[0].mxu0
  %4747 = vmatprep.mubr.f32.mxu0 0.0
  %4748 = vmatmul.mubr.f32.gmra.mrb[0].mxu0 %v4116
  %v4749 = vpop.f32.mrb[0].mxu0
  %v4750 = vadd.f32 %v3661, %v4749
  %v4751 = vpop.f32.mrb[0].mxu0
  %4752 = vmatprep.mubr.f32.mxu0 0.0
  %4753 = vmatmul.mubr.f32.gmra.mrb[0].mxu0 %v4119
  %v4754 = vpop.f32.mrb[0].mxu0
  %v4755 = vadd.f32 %v3666, %v4754
  %v4756 = vpop.f32.mrb[0].mxu0
  %4757 = vmatprep.mubr.f32.mxu0 0.0
  %4758 = vmatmul.mubr.f32.gmra.mrb[0].mxu0 %v4122
  %v4759 = vpop.f32.mrb[0].mxu0
  %v4760 = vadd.f32 %v3671, %v4759
  %v4761 = vpop.f32.mrb[0].mxu0
  %4762 = vmatprep.mubr.f32.mxu0 0.0
  %4763 = vmatmul.mubr.f32.gmra.mrb[0].mxu0 %v4125
  %v4764 = vpop.f32.mrb[0].mxu0
  %v4765 = vadd.f32 %v3676, %v4764
  %v4766 = vpop.f32.mrb[0].mxu0
  %4767 = vmatprep.mubr.f32.mxu0 0.0
  %4768 = vmatmul.mubr.f32.gmra.mrb[0].mxu0 %v4128
  %v4769 = vpop.f32.mrb[0].mxu0
  %v4770 = vadd.f32 %v3681, %v4769
  %v4771 = vpop.f32.mrb[0].mxu0
  %4772 = vmatprep.mubr.f32.mxu0 0.0
  %4773 = vmatmul.mubr.f32.gmra.mrb[0].mxu0 %v4131
  %v4774 = vpop.f32.mrb[0].mxu0
  %v4775 = vadd.f32 %v3686, %v4774
  %v4776 = vpop.f32.mrb[0].mxu0
  %4777 = vmatprep.mubr.f32.mxu0 0.0
  %4778 = vmatmul.mubr.f32.gmra.mrb[0].mxu0 %v4134
  %v4779 = vpop.f32.mrb[0].mxu0
  %v4780 = vadd.f32 %v3691, %v4779
  %v4781 = vpop.f32.mrb[0].mxu0
  %4782 = vmatprep.mubr.f32.mxu0 0.0
  %4783 = vmatmul.mubr.f32.gmra.mrb[0].mxu0 %v4137
  %v4784 = vpop.f32.mrb[0].mxu0
  %v4785 = vadd.f32 %v3696, %v4784
  %v4786 = vpop.f32.mrb[0].mxu0
  %4787 = vmatprep.mubr.f32.mxu0 0.0
  %4788 = vmatmul.mubr.f32.gmra.mrb[0].mxu0 %v4140
  %v4789 = vpop.f32.mrb[0].mxu0
  %v4790 = vadd.f32 %v3701, %v4789
  %v4791 = vpop.f32.mrb[0].mxu0
  %4792 = vmatprep.mubr.f32.mxu0 0.0
  %4793 = vmatmul.mubr.f32.gmra.mrb[0].mxu0 %v4143
  %v4794 = vpop.f32.mrb[0].mxu0
  %v4795 = vadd.f32 %v3706, %v4794
  %v4796 = vpop.f32.mrb[0].mxu0
  %4797 = vmatprep.mubr.f32.mxu0 0.0
  %4798 = vmatmul.mubr.f32.gmra.mrb[0].mxu0 %v4146
  %v4799 = vpop.f32.mrb[0].mxu0
  %v4800 = vadd.f32 %v3711, %v4799
  %v4801 = vpop.f32.mrb[0].mxu0
  %4802 = vmatprep.mubr.f32.mxu0 0.0
  %4803 = vmatmul.mubr.f32.gmra.mrb[0].mxu0 %v4149
  %v4804 = vpop.f32.mrb[0].mxu0
  %v4805 = vadd.f32 %v3716, %v4804
  %v4806 = vpop.f32.mrb[0].mxu0
  %4807 = vmatprep.mubr.f32.mxu0 0.0
  %4808 = vmatmul.mubr.f32.gmra.mrb[0].mxu0 %v4152
  %v4809 = vpop.f32.mrb[0].mxu0
  %v4810 = vadd.f32 %v3721, %v4809
  %v4811 = vpop.f32.mrb[0].mxu0
  %4812 = vmatprep.mubr.f32.mxu0 0.0
  %4813 = vmatmul.mubr.f32.gmra.mrb[0].mxu0 %v4155
  %v4814 = vpop.f32.mrb[0].mxu0
  %v4815 = vadd.f32 %v3726, %v4814
  %v4816 = vpop.f32.mrb[0].mxu0
  %4817 = vmatprep.mubr.f32.mxu0 0.0
  %4818 = vmatmul.mubr.f32.gmra.mrb[0].mxu0 %v4158
  %v4819 = vpop.f32.mrb[0].mxu0
  %v4820 = vadd.f32 %v3731, %v4819
  %v4821 = vpop.f32.mrb[0].mxu0
  %4822 = vmatprep.mubr.f32.mxu0 0.0
  %4823 = vmatmul.mubr.f32.gmra.mrb[0].mxu0 %v4161
  %v4824 = vpop.f32.mrb[0].mxu0
  %v4825 = vadd.f32 %v3736, %v4824
  %v4826 = vpop.f32.mrb[0].mxu0
  %4827 = vmatprep.mubr.f32.mxu0 0.0
  %4828 = vmatmul.mubr.f32.gmra.mrb[0].mxu0 %v4164
  %v4829 = vpop.f32.mrb[0].mxu0
  %v4830 = vadd.f32 %v3741, %v4829
  %v4831 = vpop.f32.mrb[0].mxu0
  %4832 = vmatprep.mubr.f32.mxu0 0.0
  %4833 = vmatmul.mubr.f32.gmra.mrb[0].mxu0 %v4167
  %v4834 = vpop.f32.mrb[0].mxu0
  %v4835 = vadd.f32 %v3746, %v4834
  %v4836 = vpop.f32.mrb[0].mxu0
  %4837 = vmatprep.mubr.f32.mxu0 0.0
  %4838 = vmatmul.mubr.f32.gmra.mrb[0].mxu0 %v4170
  %v4839 = vpop.f32.mrb[0].mxu0
  %v4840 = vadd.f32 %v3751, %v4839
  %v4841 = vpop.f32.mrb[0].mxu0
  %4842 = vmatprep.mubr.f32.mxu0 0.0
  %4843 = vmatmul.mubr.f32.gmra.mrb[0].mxu0 %v4173
  %v4844 = vpop.f32.mrb[0].mxu0
  %v4845 = vadd.f32 %v3756, %v4844
  %v4846 = vpop.f32.mrb[0].mxu0
  %4847 = vmatprep.mubr.f32.mxu0 0.0
  %4848 = vmatmul.mubr.f32.gmra.mrb[0].mxu0 %v4176
  %v4849 = vpop.f32.mrb[0].mxu0
  %v4850 = vadd.f32 %v3761, %v4849
  %v4851 = vpop.f32.mrb[0].mxu0
  %4852 = vmatprep.mubr.f32.mxu0 0.0
  %4853 = vmatmul.mubr.f32.gmra.mrb[0].mxu0 %v4179
  %v4854 = vpop.f32.mrb[0].mxu0
  %v4855 = vadd.f32 %v3766, %v4854
  %v4856 = vpop.f32.mrb[0].mxu0
  %4857 = vmatprep.mubr.f32.mxu0 0.0
  %4858 = vmatmul.mubr.f32.gmra.mrb[0].mxu0 %v4182
  %v4859 = vpop.f32.mrb[0].mxu0
  %v4860 = vadd.f32 %v3771, %v4859
  %v4861 = vpop.f32.mrb[0].mxu0
  %4862 = vmatprep.mubr.f32.mxu0 0.0
  %4863 = vmatmul.mubr.f32.gmra.mrb[0].mxu0 %v4185
  %v4864 = vpop.f32.mrb[0].mxu0
  %v4865 = vadd.f32 %v3776, %v4864
  %v4866 = vpop.f32.mrb[0].mxu0
  %4867 = vmatprep.mubr.f32.mxu0 0.0
  %4868 = vmatmul.mubr.f32.gmra.mrb[0].mxu0 %v4188
  %v4869 = vpop.f32.mrb[0].mxu0
  %v4870 = vadd.f32 %v3781, %v4869
  %v4871 = vpop.f32.mrb[0].mxu0
  %4872 = vmatprep.mubr.f32.mxu0 0.0
  %4873 = vmatmul.mubr.f32.gmra.mrb[0].mxu0 %v4191
  %v4874 = vpop.f32.mrb[0].mxu0
  %v4875 = vadd.f32 %v3786, %v4874
  %v4876 = vpop.f32.mrb[0].mxu0
  %4877 = vmatprep.mubr.f32.mxu0 0.0
  %4878 = vmatmul.mubr.f32.gmra.mrb[0].mxu0 %v4194
  %v4879 = vpop.f32.mrb[0].mxu0
  %v4880 = vadd.f32 %v3791, %v4879
  %v4881 = vpop.f32.mrb[0].mxu0
  %4882 = vmatprep.mubr.f32.mxu0 0.0
  %4883 = vmatmul.mubr.f32.gmra.mrb[0].mxu0 %v4197
  %v4884 = vpop.f32.mrb[0].mxu0
  %v4885 = vadd.f32 %v3796, %v4884
  %v4886 = vpop.f32.mrb[0].mxu0
  %4887 = vmatprep.mubr.f32.mxu0 0.0
  %4888 = vmatmul.mubr.f32.gmra.mrb[0].mxu0 %v4200
  %v4889 = vpop.f32.mrb[0].mxu0
  %v4890 = vadd.f32 %v3801, %v4889
  %v4891 = vpop.f32.mrb[0].mxu0
  %4892 = vmatprep.mubr.f32.mxu0 0.0
  %4893 = vmatmul.mubr.f32.gmra.mrb[0].mxu0 %v4203
  %v4894 = vpop.f32.mrb[0].mxu0
  %v4895 = vadd.f32 %v3806, %v4894
  %v4896 = vpop.f32.mrb[0].mxu0
  %4897 = vmatprep.mubr.f32.mxu0 0.0
  %4898 = vmatmul.mubr.f32.gmra.mrb[0].mxu0 %v4206
  %v4899 = vpop.f32.mrb[0].mxu0
  %v4900 = vadd.f32 %v3811, %v4899
  %v4901 = vpop.f32.mrb[0].mxu0
  %4902 = vmatprep.mubr.f32.mxu0 0.0
  %4903 = vmatmul.mubr.f32.gmra.mrb[0].mxu0 %v4209
  %v4904 = vpop.f32.mrb[0].mxu0
  %v4905 = vadd.f32 %v3816, %v4904
  %v4906 = vpop.f32.mrb[0].mxu0
  %4907 = vmatprep.mubr.f32.mxu0 0.0
  %4908 = vmatmul.mubr.f32.gmra.mrb[0].mxu0 %v4212
  %v4909 = vpop.f32.mrb[0].mxu0
  %v4910 = vadd.f32 %v3821, %v4909
  %v4911 = vpop.f32.mrb[0].mxu0
  %4912 = vmatprep.mubr.f32.mxu0 0.0
  %4913 = vmatmul.mubr.f32.gmra.mrb[0].mxu0 %v4215
  %v4914 = vpop.f32.mrb[0].mxu0
  %v4915 = vadd.f32 %v3826, %v4914
  %v4916 = vpop.f32.mrb[0].mxu0
  %4917 = vmatprep.mubr.f32.mxu0 0.0
  %4918 = vmatmul.mubr.f32.gmra.mrb[0].mxu0 %v4218
  %v4919 = vpop.f32.mrb[0].mxu0
  %v4920 = vadd.f32 %v3831, %v4919
  %v4921 = vpop.f32.mrb[0].mxu0
  %4922 = vmatprep.mubr.f32.mxu0 0.0
  %4923 = vmatmul.mubr.f32.gmra.mrb[0].mxu0 %v4221
  %v4924 = vpop.f32.mrb[0].mxu0
  %v4925 = vadd.f32 %v3836, %v4924
  %v4926 = vpop.f32.mrb[0].mxu0
  %4927 = vdwg.mxu0
  %vm4928 = vcmask 64512
  %4929 = vst.msk [vmem:[%s8] sm:$0xff] %vm4928, %v4290
  %4930 = vst.msk [vmem:[%s8 + $0x8] sm:$0xff] %vm4928, %v4295
  %4931 = vst.msk [vmem:[%s8 + $0x10] sm:$0xff] %vm4928, %v4300
  %4932 = vst.msk [vmem:[%s8 + $0x18] sm:$0xff] %vm4928, %v4305
  %4933 = vst.msk [vmem:[%s8 + $0x20] sm:$0xff] %vm4928, %v4310
  %4934 = vst.msk [vmem:[%s8 + $0x28] sm:$0xff] %vm4928, %v4315
  %4935 = vst.msk [vmem:[%s8 + $0x30] sm:$0xff] %vm4928, %v4320
  %4936 = vst.msk [vmem:[%s8 + $0x38] sm:$0xff] %vm4928, %v4325
  %4937 = vst.msk [vmem:[%s8 + $0x40] sm:$0xff] %vm4928, %v4330
  %4938 = vst.msk [vmem:[%s8 + $0x48] sm:$0xff] %vm4928, %v4335
  %4939 = vst.msk [vmem:[%s8 + $0x50] sm:$0xff] %vm4928, %v4340
  %4940 = vst.msk [vmem:[%s8 + $0x58] sm:$0xff] %vm4928, %v4345
  %4941 = vst.msk [vmem:[%s8 + $0x60] sm:$0xff] %vm4928, %v4350
  %4942 = vst.msk [vmem:[%s8 + $0x68] sm:$0xff] %vm4928, %v4355
  %4943 = vst.msk [vmem:[%s8 + $0x70] sm:$0xff] %vm4928, %v4360
  %4944 = vst.msk [vmem:[%s8 + $0x78] sm:$0xff] %vm4928, %v4365
  %4945 = vst.msk [vmem:[%s8 + $0x80] sm:$0xff] %vm4928, %v4370
  %4946 = vst.msk [vmem:[%s8 + $0x88] sm:$0xff] %vm4928, %v4375
  %4947 = vst.msk [vmem:[%s8 + $0x90] sm:$0xff] %vm4928, %v4380
  %4948 = vst.msk [vmem:[%s8 + $0x98] sm:$0xff] %vm4928, %v4385
  %4949 = vst.msk [vmem:[%s8 + $0xa0] sm:$0xff] %vm4928, %v4390
  %4950 = vst.msk [vmem:[%s8 + $0xa8] sm:$0xff] %vm4928, %v4395
  %4951 = vst.msk [vmem:[%s8 + $0xb0] sm:$0xff] %vm4928, %v4400
  %4952 = vst.msk [vmem:[%s8 + $0xb8] sm:$0xff] %vm4928, %v4405
  %4953 = vst.msk [vmem:[%s8 + $0xc0] sm:$0xff] %vm4928, %v4410
  %4954 = vst.msk [vmem:[%s8 + $0xc8] sm:$0xff] %vm4928, %v4415
  %4955 = vst.msk [vmem:[%s8 + $0xd0] sm:$0xff] %vm4928, %v4420
  %4956 = vst.msk [vmem:[%s8 + $0xd8] sm:$0xff] %vm4928, %v4425
  %4957 = vst.msk [vmem:[%s8 + $0xe0] sm:$0xff] %vm4928, %v4430
  %4958 = vst.msk [vmem:[%s8 + $0xe8] sm:$0xff] %vm4928, %v4435
  %4959 = vst.msk [vmem:[%s8 + $0xf0] sm:$0xff] %vm4928, %v4440
  %4960 = vst.msk [vmem:[%s8 + $0xf8] sm:$0xff] %vm4928, %v4445
  %4961 = vst.msk [vmem:[%s8 + $0x100] sm:$0xff] %vm4928, %v4450
  %4962 = vst.msk [vmem:[%s8 + $0x108] sm:$0xff] %vm4928, %v4455
  %4963 = vst.msk [vmem:[%s8 + $0x110] sm:$0xff] %vm4928, %v4460
  %4964 = vst.msk [vmem:[%s8 + $0x118] sm:$0xff] %vm4928, %v4465
  %4965 = vst.msk [vmem:[%s8 + $0x120] sm:$0xff] %vm4928, %v4470
  %4966 = vst.msk [vmem:[%s8 + $0x128] sm:$0xff] %vm4928, %v4475
  %4967 = vst.msk [vmem:[%s8 + $0x130] sm:$0xff] %vm4928, %v4480
  %4968 = vst.msk [vmem:[%s8 + $0x138] sm:$0xff] %vm4928, %v4485
  %4969 = vst.msk [vmem:[%s8 + $0x140] sm:$0xff] %vm4928, %v4490
  %4970 = vst.msk [vmem:[%s8 + $0x148] sm:$0xff] %vm4928, %v4495
  %4971 = vst.msk [vmem:[%s8 + $0x150] sm:$0xff] %vm4928, %v4500
  %4972 = vst.msk [vmem:[%s8 + $0x158] sm:$0xff] %vm4928, %v4505
  %4973 = vst.msk [vmem:[%s8 + $0x160] sm:$0xff] %vm4928, %v4510
  %4974 = vst.msk [vmem:[%s8 + $0x168] sm:$0xff] %vm4928, %v4515
  %4975 = vst.msk [vmem:[%s8 + $0x170] sm:$0xff] %vm4928, %v4520
  %4976 = vst.msk [vmem:[%s8 + $0x178] sm:$0xff] %vm4928, %v4525
  %4977 = vst.msk [vmem:[%s8 + $0x180] sm:$0xff] %vm4928, %v4530
  %4978 = vst.msk [vmem:[%s8 + $0x188] sm:$0xff] %vm4928, %v4535
  %4979 = vst.msk [vmem:[%s8 + $0x190] sm:$0xff] %vm4928, %v4540
  %4980 = vst.msk [vmem:[%s8 + $0x198] sm:$0xff] %vm4928, %v4545
  %4981 = vst.msk [vmem:[%s8 + $0x1a0] sm:$0xff] %vm4928, %v4550
  %4982 = vst.msk [vmem:[%s8 + $0x1a8] sm:$0xff] %vm4928, %v4555
  %4983 = vst.msk [vmem:[%s8 + $0x1b0] sm:$0xff] %vm4928, %v4560
  %4984 = vst.msk [vmem:[%s8 + $0x1b8] sm:$0xff] %vm4928, %v4565
  %4985 = vst.msk [vmem:[%s8 + $0x1c0] sm:$0xff] %vm4928, %v4570
  %4986 = vst.msk [vmem:[%s8 + $0x1c8] sm:$0xff] %vm4928, %v4575
  %4987 = vst.msk [vmem:[%s8 + $0x1d0] sm:$0xff] %vm4928, %v4580
  %4988 = vst.msk [vmem:[%s8 + $0x1d8] sm:$0xff] %vm4928, %v4585
  %4989 = vst.msk [vmem:[%s8 + $0x1e0] sm:$0xff] %vm4928, %v4590
  %4990 = vst.msk [vmem:[%s8 + $0x1e8] sm:$0xff] %vm4928, %v4595
  %4991 = vst.msk [vmem:[%s8 + $0x1f0] sm:$0xff] %vm4928, %v4600
  %4992 = vst.msk [vmem:[%s8 + $0x1f8] sm:$0xff] %vm4928, %v4605
  %4993 = vst.msk [vmem:[%s8 + $0x200] sm:$0xff] %vm4928, %v4610
  %4994 = vst.msk [vmem:[%s8 + $0x208] sm:$0xff] %vm4928, %v4615
  %4995 = vst.msk [vmem:[%s8 + $0x210] sm:$0xff] %vm4928, %v4620
  %4996 = vst.msk [vmem:[%s8 + $0x218] sm:$0xff] %vm4928, %v4625
  %4997 = vst.msk [vmem:[%s8 + $0x220] sm:$0xff] %vm4928, %v4630
  %4998 = vst.msk [vmem:[%s8 + $0x228] sm:$0xff] %vm4928, %v4635
  %4999 = vst.msk [vmem:[%s8 + $0x230] sm:$0xff] %vm4928, %v4640
  %5000 = vst.msk [vmem:[%s8 + $0x238] sm:$0xff] %vm4928, %v4645
  %5001 = vst.msk [vmem:[%s8 + $0x240] sm:$0xff] %vm4928, %v4650
  %5002 = vst.msk [vmem:[%s8 + $0x248] sm:$0xff] %vm4928, %v4655
  %5003 = vst.msk [vmem:[%s8 + $0x250] sm:$0xff] %vm4928, %v4660
  %5004 = vst.msk [vmem:[%s8 + $0x258] sm:$0xff] %vm4928, %v4665
  %5005 = vst.msk [vmem:[%s8 + $0x260] sm:$0xff] %vm4928, %v4670
  %5006 = vst.msk [vmem:[%s8 + $0x268] sm:$0xff] %vm4928, %v4675
  %5007 = vst.msk [vmem:[%s8 + $0x270] sm:$0xff] %vm4928, %v4680
  %5008 = vst.msk [vmem:[%s8 + $0x278] sm:$0xff] %vm4928, %v4685
  %5009 = vst.msk [vmem:[%s8 + $0x280] sm:$0xff] %vm4928, %v4690
  %5010 = vst.msk [vmem:[%s8 + $0x288] sm:$0xff] %vm4928, %v4695
  %5011 = vst.msk [vmem:[%s8 + $0x290] sm:$0xff] %vm4928, %v4700
  %5012 = vst.msk [vmem:[%s8 + $0x298] sm:$0xff] %vm4928, %v4705
  %5013 = vst.msk [vmem:[%s8 + $0x2a0] sm:$0xff] %vm4928, %v4710
  %5014 = vst.msk [vmem:[%s8 + $0x2a8] sm:$0xff] %vm4928, %v4715
  %5015 = vst.msk [vmem:[%s8 + $0x2b0] sm:$0xff] %vm4928, %v4720
  %5016 = vst.msk [vmem:[%s8 + $0x2b8] sm:$0xff] %vm4928, %v4725
  %5017 = vst.msk [vmem:[%s8 + $0x2c0] sm:$0xff] %vm4928, %v4730
  %5018 = vst.msk [vmem:[%s8 + $0x2c8] sm:$0xff] %vm4928, %v4735
  %5019 = vst.msk [vmem:[%s8 + $0x2d0] sm:$0xff] %vm4928, %v4740
  %5020 = vst.msk [vmem:[%s8 + $0x2d8] sm:$0xff] %vm4928, %v4745
  %5021 = vst.msk [vmem:[%s8 + $0x2e0] sm:$0xff] %vm4928, %v4750
  %5022 = vst.msk [vmem:[%s8 + $0x2e8] sm:$0xff] %vm4928, %v4755
  %5023 = vst.msk [vmem:[%s8 + $0x2f0] sm:$0xff] %vm4928, %v4760
  %5024 = vst.msk [vmem:[%s8 + $0x2f8] sm:$0xff] %vm4928, %v4765
  %5025 = vst.msk [vmem:[%s8 + $0x300] sm:$0xff] %vm4928, %v4770
  %5026 = vst.msk [vmem:[%s8 + $0x308] sm:$0xff] %vm4928, %v4775
  %5027 = vst.msk [vmem:[%s8 + $0x310] sm:$0xff] %vm4928, %v4780
  %5028 = vst.msk [vmem:[%s8 + $0x318] sm:$0xff] %vm4928, %v4785
  %5029 = vst.msk [vmem:[%s8 + $0x320] sm:$0xff] %vm4928, %v4790
  %5030 = vst.msk [vmem:[%s8 + $0x328] sm:$0xff] %vm4928, %v4795
  %5031 = vst.msk [vmem:[%s8 + $0x330] sm:$0xff] %vm4928, %v4800
  %5032 = vst.msk [vmem:[%s8 + $0x338] sm:$0xff] %vm4928, %v4805
  %5033 = vst.msk [vmem:[%s8 + $0x340] sm:$0xff] %vm4928, %v4810
  %5034 = vst.msk [vmem:[%s8 + $0x348] sm:$0xff] %vm4928, %v4815
  %5035 = vst.msk [vmem:[%s8 + $0x350] sm:$0xff] %vm4928, %v4820
  %5036 = vst.msk [vmem:[%s8 + $0x358] sm:$0xff] %vm4928, %v4825
  %5037 = vst.msk [vmem:[%s8 + $0x360] sm:$0xff] %vm4928, %v4830
  %5038 = vst.msk [vmem:[%s8 + $0x368] sm:$0xff] %vm4928, %v4835
  %5039 = vst.msk [vmem:[%s8 + $0x370] sm:$0xff] %vm4928, %v4840
  %5040 = vst.msk [vmem:[%s8 + $0x378] sm:$0xff] %vm4928, %v4845
  %5041 = vst.msk [vmem:[%s8 + $0x380] sm:$0xff] %vm4928, %v4850
  %5042 = vst.msk [vmem:[%s8 + $0x388] sm:$0xff] %vm4928, %v4855
  %5043 = vst.msk [vmem:[%s8 + $0x390] sm:$0xff] %vm4928, %v4860
  %5044 = vst.msk [vmem:[%s8 + $0x398] sm:$0xff] %vm4928, %v4865
  %5045 = vst.msk [vmem:[%s8 + $0x3a0] sm:$0xff] %vm4928, %v4870
  %5046 = vst.msk [vmem:[%s8 + $0x3a8] sm:$0xff] %vm4928, %v4875
  %5047 = vst.msk [vmem:[%s8 + $0x3b0] sm:$0xff] %vm4928, %v4880
  %5048 = vst.msk [vmem:[%s8 + $0x3b8] sm:$0xff] %vm4928, %v4885
  %5049 = vst.msk [vmem:[%s8 + $0x3c0] sm:$0xff] %vm4928, %v4890
  %5050 = vst.msk [vmem:[%s8 + $0x3c8] sm:$0xff] %vm4928, %v4895
  %5051 = vst.msk [vmem:[%s8 + $0x3d0] sm:$0xff] %vm4928, %v4900
  %5052 = vst.msk [vmem:[%s8 + $0x3d8] sm:$0xff] %vm4928, %v4905
  %5053 = vst.msk [vmem:[%s8 + $0x3e0] sm:$0xff] %vm4928, %v4910
  %5054 = vst.msk [vmem:[%s8 + $0x3e8] sm:$0xff] %vm4928, %v4915
  %5055 = vst.msk [vmem:[%s8 + $0x3f0] sm:$0xff] %vm4928, %v4920
  %5056 = vst.msk [vmem:[%s8 + $0x3f8] sm:$0xff] %vm4928, %v4925
  // Predicated region
  $region34: #{tpu_custom_call.1} parent=0 // pred_check
    _
  $region35: #{tpu_custom_call.1} parent=0 // pred_check_branch
    %5058 = sbr.rel (0) target = $region37
  $region36: #{tpu_custom_call.1} parent=0 // pred_region
    _
  $region37: #{tpu_custom_call.1} parent=0 // pred_fallthru
    _
  // Predicated region
  $region38: #{tpu_custom_call.1} parent=0 // pred_check
    _
  $region39: #{tpu_custom_call.1} parent=0 // pred_check_branch
    %5060 = sbr.rel (0) target = $region41
  $region40: #{tpu_custom_call.1} parent=0 // pred_region
    _
  $region41: #{tpu_custom_call.1} parent=0 // pred_fallthru
    _

</llo_original>
